<compile_context>
chip_gen: v7x
topology: tpu7x:2x2x1
jax: 0.10.0
libtpu: 0.0.40
codegen_flags: <defaults>
</compile_context>

<pallas_src>
import functools

import jax
import jax.numpy as jnp
from jax.experimental import pallas as pl
from jax.experimental.pallas import tpu as pltpu


def _pick_tile(dim, target, multiple=1):
    """Largest divisor of `dim` that is <= target and a multiple of `multiple`.
    Falls back to the full dimension (always a legal Pallas block) if none exists."""
    target = max(1, min(target, dim))
    for t in range(target, 0, -1):
        if dim % t == 0 and t % multiple == 0:
            return t
    return dim


# ----------------------------- kernel 1: tiled matmul + shift (patch embed) ----------------
# BN scale is pre-folded into the weight columns, so the epilogue is just `acc + shift`.

def _matmul_shift_kernel(x_ref, w_ref, sh_ref, o_ref, acc_ref):
    k = pl.program_id(2)

    @pl.when(k == 0)
    def _():
        acc_ref[...] = jnp.zeros_like(acc_ref)

    acc_ref[...] += jnp.dot(x_ref[...], w_ref[...],
                            preferred_element_type=jnp.float32)

    @pl.when(k == pl.num_programs(2) - 1)
    def _():
        o_ref[...] = (acc_ref[...] + sh_ref[...]).astype(o_ref.dtype)


def matmul_shift(x, w, shift, *, out_dtype=jnp.bfloat16, tm=512, tn=512, tk=1024):
    """(x @ w) + shift, tiled/pipelined.  x:[M,K] w:[K,N] shift:[1,N]."""
    M, K = x.shape
    N = w.shape[1]
    tm = _pick_tile(M, tm, 8)
    tn = _pick_tile(N, tn, 128)
    tk = _pick_tile(K, tk, 128)
    return pl.pallas_call(
        _matmul_shift_kernel,
        out_shape=jax.ShapeDtypeStruct((M, N), out_dtype),
        grid=(M // tm, N // tn, K // tk),
        in_specs=[pl.BlockSpec((tm, tk), lambda i, j, k: (i, k)),
                  pl.BlockSpec((tk, tn), lambda i, j, k: (k, j)),
                  pl.BlockSpec((1, tn), lambda i, j, k: (0, j))],
        out_specs=pl.BlockSpec((tm, tn), lambda i, j, k: (i, j)),
        scratch_shapes=[pltpu.VMEM((tm, tn), jnp.float32)],
        compiler_params=pltpu.CompilerParams(
            dimension_semantics=("parallel", "parallel", "arbitrary")),
    )(x, w, shift)


# ----------------------------- kernel 2: fused attention (SDSA) block ----------------------
# shortcut LIF -> qkv 1x1conv(+BN) -> q/k/v LIF -> SDSA -> proj 1x1conv(+BN) -> residual.
# Membrane states live in VMEM scratch and are carried across the sequential T grid axis.

def _attn_block_kernel(x_ref, wqkv_ref, shqkv_ref, wp_ref, shp_ref, o_ref,
                       vs_ref, vq_ref, vkv_ref, *, tau, v_th):
    t = pl.program_id(1)

    @pl.when(t == 0)
    def _():
        vs_ref[...] = jnp.zeros_like(vs_ref)
        vq_ref[...] = jnp.zeros_like(vq_ref)
        vkv_ref[...] = jnp.zeros_like(vkv_ref)

    inv_tau = 1.0 / tau
    x = x_ref[0].astype(jnp.float32)                       # [tb, N, D] residual (bf16 -> f32)
    tb, N, D = x.shape

    # spikingjelly LIFNode (decay_input=True, v_reset=0, hard reset):
    #   v <- v + (x - v)/tau ; spike = [v >= v_th] ; v <- v*(1-spike)
    v = vs_ref[...] + (x - vs_ref[...]) * inv_tau
    s = (v >= v_th).astype(jnp.float32)
    vs_ref[...] = v * (1.0 - s)

    # fused q|k|v 1x1conv + folded BN (scale folded into weights, only shift here)
    qkv = jnp.dot(s.reshape(tb * N, D).astype(wqkv_ref.dtype), wqkv_ref[...],
                  preferred_element_type=jnp.float32).reshape(tb, N, 3 * D)
    qkv = qkv + shqkv_ref[...]

    # q/k/v LIF
    vq = vq_ref[...] + (qkv - vq_ref[...]) * inv_tau
    spk = (vq >= v_th).astype(jnp.float32)
    vq_ref[...] = vq * (1.0 - spk)
    qs = spk[:, :, 0:D]
    ks = spk[:, :, D:2 * D]
    vls = spk[:, :, 2 * D:3 * D]

    # SDSA: kv = token-sum(k*v) ; talking-heads LIF ; broadcast-mul with q spikes
    kv = jnp.sum(ks * vls, axis=1)                         # [tb, D]
    vk = vkv_ref[...] + (kv - vkv_ref[...]) * inv_tau
    kvs = (vk >= v_th).astype(jnp.float32)
    vkv_ref[...] = vk * (1.0 - kvs)
    y = qs * kvs[:, None, :]                               # [tb, N, D], exact {0,1}

    # proj 1x1conv + folded BN + residual add (epilogue)
    acc = jnp.dot(y.reshape(tb * N, D).astype(wp_ref.dtype), wp_ref[...],
                  preferred_element_type=jnp.float32).reshape(tb, N, D)
    o_ref[0] = (acc + shp_ref[...] + x).astype(o_ref.dtype)


def attn_block(xr, w_qkv, sh_qkv, wp, sh_p, *, tau=2.0, v_th=1.0):
    """xr:[T,B,N,D] residual (bf16) -> new residual [T,B,N,D] (bf16)."""
    T, B, N, D = xr.shape
    # v7x megacore: keep the 'parallel' batch axis at >= 2 iterations when B allows it;
    # cap the tile so tb*N rows / f32 membrane scratch stay modest.
    tb = _pick_tile(B, min(max(1, B // 2), max(1, 1024 // N)))
    return pl.pallas_call(
        functools.partial(_attn_block_kernel, tau=tau, v_th=v_th),
        out_shape=jax.ShapeDtypeStruct((T, B, N, D), xr.dtype),
        grid=(B // tb, T),
        in_specs=[pl.BlockSpec((1, tb, N, D), lambda b, t: (t, b, 0, 0)),
                  pl.BlockSpec((D, 3 * D), lambda b, t: (0, 0)),
                  pl.BlockSpec((1, 3 * D), lambda b, t: (0, 0)),
                  pl.BlockSpec((D, D), lambda b, t: (0, 0)),
                  pl.BlockSpec((1, D), lambda b, t: (0, 0))],
        out_specs=pl.BlockSpec((1, tb, N, D), lambda b, t: (t, b, 0, 0)),
        scratch_shapes=[pltpu.VMEM((tb, N, D), jnp.float32),      # shortcut-LIF membrane
                        pltpu.VMEM((tb, N, 3 * D), jnp.float32),  # q/k/v LIF membrane
                        pltpu.VMEM((tb, D), jnp.float32)],        # talking-heads LIF membrane
        compiler_params=pltpu.CompilerParams(
            dimension_semantics=("parallel", "arbitrary")),       # T must stay sequential!
    )(xr, w_qkv, sh_qkv, wp, sh_p)


# ----------------------------- kernel 3: fused MLP block -----------------------------------
# LIF -> fc1(+BN) -> LIF -> fc2(+BN) -> residual; hidden activation never touches HBM.

def _mlp_block_kernel(x_ref, w1_ref, sh1_ref, w2_ref, sh2_ref, o_ref,
                      v1_ref, v2_ref, *, tau, v_th):
    t = pl.program_id(1)

    @pl.when(t == 0)
    def _():
        v1_ref[...] = jnp.zeros_like(v1_ref)
        v2_ref[...] = jnp.zeros_like(v2_ref)

    inv_tau = 1.0 / tau
    x = x_ref[0].astype(jnp.float32)                       # [tm, D]

    v1 = v1_ref[...] + (x - v1_ref[...]) * inv_tau
    s1 = (v1 >= v_th).astype(jnp.float32)
    v1_ref[...] = v1 * (1.0 - s1)
    h = jnp.dot(s1.astype(w1_ref.dtype), w1_ref[...],
                preferred_element_type=jnp.float32) + sh1_ref[...]

    v2 = v2_ref[...] + (h - v2_ref[...]) * inv_tau
    s2 = (v2 >= v_th).astype(jnp.float32)
    v2_ref[...] = v2 * (1.0 - s2)
    out = jnp.dot(s2.astype(w2_ref.dtype), w2_ref[...],
                  preferred_element_type=jnp.float32) + sh2_ref[...] + x
    o_ref[0] = out.astype(o_ref.dtype)


def mlp_block(x, w1, sh1, w2, sh2, *, tau=2.0, v_th=1.0):
    """x:[T,M,D] residual rows (bf16) -> [T,M,D] (bf16).  w1:[D,H], w2:[H,D]."""
    T, M, D = x.shape
    H = w1.shape[1]
    tm = _pick_tile(M, min(512, max(8, M // 2)), 8)        # >=2 parallel iters when possible
    return pl.pallas_call(
        functools.partial(_mlp_block_kernel, tau=tau, v_th=v_th),
        out_shape=jax.ShapeDtypeStruct((T, M, D), x.dtype),
        grid=(M // tm, T),
        in_specs=[pl.BlockSpec((1, tm, D), lambda m, t: (t, m, 0)),
                  pl.BlockSpec((D, H), lambda m, t: (0, 0)),
                  pl.BlockSpec((1, H), lambda m, t: (0, 0)),
                  pl.BlockSpec((H, D), lambda m, t: (0, 0)),
                  pl.BlockSpec((1, D), lambda m, t: (0, 0))],
        out_specs=pl.BlockSpec((1, tm, D), lambda m, t: (t, m, 0)),
        scratch_shapes=[pltpu.VMEM((tm, D), jnp.float32),   # LIF membrane before fc1
                        pltpu.VMEM((tm, H), jnp.float32)],  # LIF membrane before fc2
        compiler_params=pltpu.CompilerParams(
            dimension_semantics=("parallel", "arbitrary")),
    )(x, w1, sh1, w2, sh2)


# ----------------------------- kernel 4: fused token-mean + head LIF + head ----------------

def _pool_lif_head_kernel(x_ref, w_ref, b_ref, o_ref, v_ref, *, tau, v_th, inv_n):
    t = pl.program_id(0)

    @pl.when(t == 0)
    def _():
        v_ref[...] = jnp.zeros_like(v_ref)

    xm = jnp.sum(x_ref[0].astype(jnp.float32), axis=1) * inv_n   # [B, D] token mean
    v = v_ref[...] + (xm - v_ref[...]) * (1.0 / tau)
    s = (v >= v_th).astype(jnp.float32)
    v_ref[...] = v * (1.0 - s)
    acc = jnp.dot(s.astype(w_ref.dtype), w_ref[...],
                  preferred_element_type=jnp.float32)
    o_ref[0] = (acc + b_ref[...]).astype(o_ref.dtype)


def pool_lif_head(x, w_pad, b_pad, *, tau=2.0, v_th=1.0):
    """x:[T,B,N,D], w_pad:[D,NCp] (lane-padded head), b_pad:[1,NCp] -> [T,B,NCp]."""
    T, B, N, D = x.shape
    NCp = w_pad.shape[1]
    return pl.pallas_call(
        functools.partial(_pool_lif_head_kernel, tau=tau, v_th=v_th, inv_n=1.0 / N),
        out_shape=jax.ShapeDtypeStruct((T, B, NCp), jnp.float32),
        grid=(T,),
        in_specs=[pl.BlockSpec((1, B, N, D), lambda t: (t, 0, 0, 0)),
                  pl.BlockSpec((D, NCp), lambda t: (0, 0)),
                  pl.BlockSpec((1, NCp), lambda t: (0, 0))],
        out_specs=pl.BlockSpec((1, B, NCp), lambda t: (t, 0, 0)),
        scratch_shapes=[pltpu.VMEM((B, D), jnp.float32)],
        compiler_params=pltpu.CompilerParams(
            dimension_semantics=("arbitrary",)),
    )(x, w_pad, b_pad)


# ----------------------------- parameter setup -----------------------------

def make_params(key, *, C_in, patch, D, hidden, depth, num_classes):
    wdt = jnp.bfloat16

    def tn(k, shape, std=0.02):   # trunc_normal_(std=0.02)
        return std * jax.random.truncated_normal(k, -2.0, 2.0, shape, jnp.float32)

    def bn(dim):                  # PyTorch init: weight=1, bias=0, running mean=0, var=1
        return (jnp.ones((dim,), jnp.float32), jnp.zeros((dim,), jnp.float32),
                jnp.zeros((dim,), jnp.float32), jnp.ones((dim,), jnp.float32))

    def fold(w, bn_params, conv_bias=None, eps=1e-5):
        # Fold BN (inference form) into the weight columns + an additive shift.
        gamma, beta, mean, var = bn_params
        scale = gamma / jnp.sqrt(var + eps)
        shift = beta - mean * scale
        if conv_bias is not None:
            shift = shift + conv_bias * scale
        return (w * scale[None, :]).astype(wdt), shift[None, :].astype(jnp.float32)

    ks = list(jax.random.split(key, 2 + 6 * depth))

    NCp = ((num_classes + 127) // 128) * 128              # lane-pad the head output to 128
    head_w = tn(ks[1], (D, num_classes))
    head_w_pad = jnp.zeros((D, NCp), jnp.float32).at[:, :num_classes].set(head_w).astype(wdt)
    head_b_pad = jnp.zeros((1, NCp), jnp.float32)

    pe_w, pe_sh = fold(tn(ks[0], (C_in * patch, D)), bn(D),
                       conv_bias=jnp.zeros((D,), jnp.float32))

    params = {"pe_w": pe_w, "pe_sh": pe_sh,
              "head_w_pad": head_w_pad, "head_b_pad": head_b_pad,
              "blocks": []}
    for j in range(depth):
        kk = ks[2 + 6 * j: 2 + 6 * (j + 1)]
        wq, shq = fold(tn(kk[0], (D, D)), bn(D))
        wk, shk = fold(tn(kk[1], (D, D)), bn(D))
        wv, shv = fold(tn(kk[2], (D, D)), bn(D))
        wp, shp = fold(tn(kk[3], (D, D)), bn(D))
        w1, sh1 = fold(tn(kk[4], (D, hidden)), bn(hidden))
        w2, sh2 = fold(tn(kk[5], (hidden, D)), bn(D))
        params["blocks"].append({
            "w_qkv": jnp.concatenate([wq, wk, wv], axis=1),
            "sh_qkv": jnp.concatenate([shq, shk, shv], axis=1),
            "wp": wp, "sh_p": shp,
            "w1": w1, "sh1": sh1,
            "w2": w2, "sh2": sh2,
        })
    return params


# ----------------------------- model forward -----------------------------

def spike_driven_transformer_forward(x, params, *, T, B, C_in, L, patch, D, hidden,
                                     num_classes, tau=2.0):
    N = L // patch
    cdt = jnp.bfloat16   # residual stream / MXU operand dtype (f32 accumulation in-kernel)

    # ---- patch_embed: Conv1d(C_in->D, kernel=patch, stride=patch) + BatchNorm1d (folded) ----
    xp = x.reshape(T * B, C_in, N, patch)                        # non-overlapping patches
    xp = jnp.transpose(xp, (0, 2, 1, 3)).reshape(T * B * N, C_in * patch)
    h = matmul_shift(xp.astype(cdt), params["pe_w"], params["pe_sh"], out_dtype=cdt)
    xr = h.reshape(T, B, N, D)                                   # residual stream, bf16

    for blk in params["blocks"]:
        # ---- attention branch: fully fused shortcut-LIF -> qkv -> SDSA -> proj -> residual ----
        xr = attn_block(xr, blk["w_qkv"], blk["sh_qkv"], blk["wp"], blk["sh_p"], tau=tau)

        # ---- MLP branch: fully fused LIF -> fc1 -> LIF -> fc2 -> residual ----
        xr = mlp_block(xr.reshape(T, B * N, D), blk["w1"], blk["sh1"],
                       blk["w2"], blk["sh2"], tau=tau).reshape(T, B, N, D)

    # ---- x.flatten(3).mean(3) + head_lif + Linear head (fused, lane-padded output) ----
    logits = pool_lif_head(xr, params["head_w_pad"], params["head_b_pad"], tau=tau)
    return logits[:, :, :num_classes]                            # TET=False -> per-timestep logits


# ----------------------------- driver -----------------------------

if __name__ == "__main__":
    # small synthetic shapes consistent with the module's constructor (N = L/patch is a
    # multiple of 8 so in-kernel reshapes are free relayouts)
    T, B, C_in, L = 4, 2, 2, 128         # time steps, batch, input channels, sequence length
    patch, D, hidden = 16, 128, 512      # patch_size, embed_dims, embed_dims * mlp_ratios(=4)
    depth, num_classes = 2, 11

    key = jax.random.PRNGKey(0)
    kx, kp = jax.random.split(key)
    x = jax.random.normal(kx, (T, B, C_in, L), jnp.float32)
    params = make_params(kp, C_in=C_in, patch=patch, D=D, hidden=hidden,
                         depth=depth, num_classes=num_classes)

    fwd = jax.jit(functools.partial(
        spike_driven_transformer_forward,
        T=T, B=B, C_in=C_in, L=L, patch=patch, D=D, hidden=hidden,
        num_classes=num_classes))

    out = jax.block_until_ready(fwd(x, params))
    assert out.shape == (T, B, num_classes), out.shape
    assert bool(jnp.all(jnp.isfinite(out)))
    print("KERNEL_OK")
</pallas_src>

<mosaic_0001>
module attributes {stable_mosaic.version = 11 : i64} {
  func.func @_attn_block_kernel(%arg0: i32, %arg1: i32, %arg2: memref<1x1x8x128xbf16, #tpu.memory_space<vmem>>, %arg3: memref<128x384xbf16, #tpu.memory_space<vmem>>, %arg4: memref<1x384xf32, #tpu.memory_space<vmem>>, %arg5: memref<128x128xbf16, #tpu.memory_space<vmem>>, %arg6: memref<1x128xf32, #tpu.memory_space<vmem>>, %arg7: memref<1x1x8x128xbf16, #tpu.memory_space<vmem>>, %arg8: memref<1x8x128xf32, #tpu.memory_space<vmem>>, %arg9: memref<1x8x384xf32, #tpu.memory_space<vmem>>, %arg10: memref<1x128xf32, #tpu.memory_space<vmem>>) attributes {dimension_semantics = [#tpu.dimension_semantics<parallel>, #tpu.dimension_semantics<arbitrary>], iteration_bounds = array<i64: 2, 4>, scalar_prefetch = 0 : i64, scratch_operands = 3 : i64, tpu.core_type = #tpu.core_type<tc>, window_params = [{transform_indices = @transform_0, window_bounds = array<i64: 1, 1, 8, 128>}, {pipeline_mode = #tpu.pipeline_mode<synchronous>, transform_indices = @transform_1, window_bounds = array<i64: 128, 384>}, {pipeline_mode = #tpu.pipeline_mode<synchronous>, transform_indices = @transform_2, window_bounds = array<i64: 1, 384>}, {pipeline_mode = #tpu.pipeline_mode<synchronous>, transform_indices = @transform_3, window_bounds = array<i64: 128, 128>}, {pipeline_mode = #tpu.pipeline_mode<synchronous>, transform_indices = @transform_4, window_bounds = array<i64: 1, 128>}, {transform_indices = @transform_5, window_bounds = array<i64: 1, 1, 8, 128>}]} {
    %c0_i32 = arith.constant 0 : i32
    %0 = arith.cmpi eq, %arg1, %c0_i32 : i32
    %1 = arith.extui %0 : i1 to i32
    %c0_i32_0 = arith.constant 0 : i32
    %2 = arith.cmpi ne, %1, %c0_i32_0 : i32
    scf.if %2 {
      %cst_51 = arith.constant 0.000000e+00 : f32
      %79 = vector.broadcast %cst_51 : f32 to vector<1x8x128xf32>
      %c0_52 = arith.constant 0 : index
      %c0_53 = arith.constant 0 : index
      %c0_54 = arith.constant 0 : index
      %80 = vector.load %arg8[%c0_52, %c0_53, %c0_54] : memref<1x8x128xf32, #tpu.memory_space<vmem>>, vector<1x8x128xf32>
      tpu.vector_store %arg8[%c0_52, %c0_53, %c0_54], %79 {strides = array<i32>} : memref<1x8x128xf32, #tpu.memory_space<vmem>>, vector<1x8x128xf32>,
      %cst_55 = arith.constant 0.000000e+00 : f32
      %81 = vector.broadcast %cst_55 : f32 to vector<1x8x384xf32>
      %c0_56 = arith.constant 0 : index
      %c0_57 = arith.constant 0 : index
      %c0_58 = arith.constant 0 : index
      %82 = vector.load %arg9[%c0_56, %c0_57, %c0_58] : memref<1x8x384xf32, #tpu.memory_space<vmem>>, vector<1x8x384xf32>
      tpu.vector_store %arg9[%c0_56, %c0_57, %c0_58], %81 {strides = array<i32>} : memref<1x8x384xf32, #tpu.memory_space<vmem>>, vector<1x8x384xf32>,
      %cst_59 = arith.constant 0.000000e+00 : f32
      %83 = vector.broadcast %cst_59 : f32 to vector<1x128xf32>
      %c0_60 = arith.constant 0 : index
      %c0_61 = arith.constant 0 : index
      %84 = vector.load %arg10[%c0_60, %c0_61] : memref<1x128xf32, #tpu.memory_space<vmem>>, vector<1x128xf32>
      tpu.vector_store %arg10[%c0_60, %c0_61], %83 {strides = array<i32>} : memref<1x128xf32, #tpu.memory_space<vmem>>, vector<1x128xf32>,
    } else {
    }
    %c0 = arith.constant 0 : index
    %c0_1 = arith.constant 0 : index
    %c0_2 = arith.constant 0 : index
    %c0_3 = arith.constant 0 : index
    %3 = vector.load %arg2[%c0, %c0_1, %c0_2, %c0_3] : memref<1x1x8x128xbf16, #tpu.memory_space<vmem>>, vector<1x1x8x128xbf16>
    %4 = vector.shape_cast %3 : vector<1x1x8x128xbf16> to vector<1x8x128xbf16>
    %5 = arith.extf %4 : vector<1x8x128xbf16> to vector<1x8x128xf32>
    %c0_4 = arith.constant 0 : index
    %c0_5 = arith.constant 0 : index
    %c0_6 = arith.constant 0 : index
    %6 = vector.load %arg8[%c0_4, %c0_5, %c0_6] : memref<1x8x128xf32, #tpu.memory_space<vmem>>, vector<1x8x128xf32>
    %c0_7 = arith.constant 0 : index
    %c0_8 = arith.constant 0 : index
    %c0_9 = arith.constant 0 : index
    %7 = vector.load %arg8[%c0_7, %c0_8, %c0_9] : memref<1x8x128xf32, #tpu.memory_space<vmem>>, vector<1x8x128xf32>
    %8 = arith.subf %5, %7 : vector<1x8x128xf32>
    %cst = arith.constant 5.000000e-01 : f32
    %9 = vector.broadcast %cst : f32 to vector<1x8x128xf32>
    %10 = arith.mulf %8, %9 : vector<1x8x128xf32>
    %11 = arith.addf %6, %10 : vector<1x8x128xf32>
    %cst_10 = arith.constant 1.000000e+00 : f32
    %12 = vector.broadcast %cst_10 : f32 to vector<1x8x128xf32>
    %13 = arith.cmpf oge, %11, %12 : vector<1x8x128xf32>
    %14 = arith.extui %13 : vector<1x8x128xi1> to vector<1x8x128xi32>
    %15 = arith.sitofp %14 : vector<1x8x128xi32> to vector<1x8x128xf32>
    %cst_11 = arith.constant 1.000000e+00 : f32
    %16 = vector.broadcast %cst_11 : f32 to vector<1x8x128xf32>
    %17 = arith.subf %16, %15 : vector<1x8x128xf32>
    %18 = arith.mulf %11, %17 : vector<1x8x128xf32>
    %c0_12 = arith.constant 0 : index
    %c0_13 = arith.constant 0 : index
    %c0_14 = arith.constant 0 : index
    %19 = vector.load %arg8[%c0_12, %c0_13, %c0_14] : memref<1x8x128xf32, #tpu.memory_space<vmem>>, vector<1x8x128xf32>
    tpu.vector_store %arg8[%c0_12, %c0_13, %c0_14], %18 {strides = array<i32>} : memref<1x8x128xf32, #tpu.memory_space<vmem>>, vector<1x8x128xf32>,
    %20 = vector.shape_cast %15 : vector<1x8x128xf32> to vector<8x128xf32>
    %21 = arith.truncf %20 : vector<8x128xf32> to vector<8x128xbf16>
    %c0_15 = arith.constant 0 : index
    %c0_16 = arith.constant 0 : index
    %22 = vector.load %arg3[%c0_15, %c0_16] : memref<128x384xbf16, #tpu.memory_space<vmem>>, vector<128x384xbf16>
    %cst_17 = arith.constant dense<0.000000e+00> : vector<8x384xf32>
    %23 = tpu.matmul %21, %22, %cst_17 {dimension_numbers = #tpu.dot_dimension_numbers<[1], [0], [0], [1], [0, 0, 1, 1], [], []>} : vector<8x128xbf16>, vector<128x384xbf16>, vector<8x384xf32> -> vector<8x384xf32>
    %24 = vector.shape_cast %23 : vector<8x384xf32> to vector<1x8x384xf32>
    %c0_18 = arith.constant 0 : index
    %c0_19 = arith.constant 0 : index
    %25 = vector.load %arg4[%c0_18, %c0_19] : memref<1x384xf32, #tpu.memory_space<vmem>>, vector<1x384xf32>
    %26 = vector.shape_cast %25 : vector<1x384xf32> to vector<1x1x384xf32>
    %27 = vector.broadcast %26 : vector<1x1x384xf32> to vector<1x8x384xf32>
    %28 = arith.addf %24, %27 : vector<1x8x384xf32>
    %c0_20 = arith.constant 0 : index
    %c0_21 = arith.constant 0 : index
    %c0_22 = arith.constant 0 : index
    %29 = vector.load %arg9[%c0_20, %c0_21, %c0_22] : memref<1x8x384xf32, #tpu.memory_space<vmem>>, vector<1x8x384xf32>
    %c0_23 = arith.constant 0 : index
    %c0_24 = arith.constant 0 : index
    %c0_25 = arith.constant 0 : index
    %30 = vector.load %arg9[%c0_23, %c0_24, %c0_25] : memref<1x8x384xf32, #tpu.memory_space<vmem>>, vector<1x8x384xf32>
    %31 = arith.subf %28, %30 : vector<1x8x384xf32>
    %cst_26 = arith.constant 5.000000e-01 : f32
    %32 = vector.broadcast %cst_26 : f32 to vector<1x8x384xf32>
    %33 = arith.mulf %31, %32 : vector<1x8x384xf32>
    %34 = arith.addf %29, %33 : vector<1x8x384xf32>
    %cst_27 = arith.constant 1.000000e+00 : f32
    %35 = vector.broadcast %cst_27 : f32 to vector<1x8x384xf32>
    %36 = arith.cmpf oge, %34, %35 : vector<1x8x384xf32>
    %37 = arith.extui %36 : vector<1x8x384xi1> to vector<1x8x384xi32>
    %38 = arith.sitofp %37 : vector<1x8x384xi32> to vector<1x8x384xf32>
    %cst_28 = arith.constant 1.000000e+00 : f32
    %39 = vector.broadcast %cst_28 : f32 to vector<1x8x384xf32>
    %40 = arith.subf %39, %38 : vector<1x8x384xf32>
    %41 = arith.mulf %34, %40 : vector<1x8x384xf32>
    %c0_29 = arith.constant 0 : index
    %c0_30 = arith.constant 0 : index
    %c0_31 = arith.constant 0 : index
    %42 = vector.load %arg9[%c0_29, %c0_30, %c0_31] : memref<1x8x384xf32, #tpu.memory_space<vmem>>, vector<1x8x384xf32>
    tpu.vector_store %arg9[%c0_29, %c0_30, %c0_31], %41 {strides = array<i32>} : memref<1x8x384xf32, #tpu.memory_space<vmem>>, vector<1x8x384xf32>,
    %43 = vector.extract_strided_slice %38 {offsets = [0, 0, 0], sizes = [1, 8, 128], strides = [1, 1, 1]} : vector<1x8x384xf32> to vector<1x8x128xf32>
    %44 = vector.extract_strided_slice %38 {offsets = [0, 0, 128], sizes = [1, 8, 128], strides = [1, 1, 1]} : vector<1x8x384xf32> to vector<1x8x128xf32>
    %45 = vector.extract_strided_slice %38 {offsets = [0, 0, 256], sizes = [1, 8, 128], strides = [1, 1, 1]} : vector<1x8x384xf32> to vector<1x8x128xf32>
    %46 = arith.mulf %44, %45 : vector<1x8x128xf32>
    %cst_32 = arith.constant dense<0.000000e+00> : vector<1x128xf32>
    %47 = vector.multi_reduction <add>, %46, %cst_32 [1] : vector<1x8x128xf32> to vector<1x128xf32>
    %c0_33 = arith.constant 0 : index
    %c0_34 = arith.constant 0 : index
    %48 = vector.load %arg10[%c0_33, %c0_34] : memref<1x128xf32, #tpu.memory_space<vmem>>, vector<1x128xf32>
    %c0_35 = arith.constant 0 : index
    %c0_36 = arith.constant 0 : index
    %49 = vector.load %arg10[%c0_35, %c0_36] : memref<1x128xf32, #tpu.memory_space<vmem>>, vector<1x128xf32>
    %50 = arith.subf %47, %49 : vector<1x128xf32>
    %cst_37 = arith.constant 5.000000e-01 : f32
    %51 = vector.broadcast %cst_37 : f32 to vector<1x128xf32>
    %52 = arith.mulf %50, %51 : vector<1x128xf32>
    %53 = arith.addf %48, %52 : vector<1x128xf32>
    %cst_38 = arith.constant 1.000000e+00 : f32
    %54 = vector.broadcast %cst_38 : f32 to vector<1x128xf32>
    %55 = arith.cmpf oge, %53, %54 : vector<1x128xf32>
    %56 = arith.extui %55 : vector<1x128xi1> to vector<1x128xi32>
    %57 = arith.sitofp %56 : vector<1x128xi32> to vector<1x128xf32>
    %cst_39 = arith.constant 1.000000e+00 : f32
    %58 = vector.broadcast %cst_39 : f32 to vector<1x128xf32>
    %59 = arith.subf %58, %57 : vector<1x128xf32>
    %60 = arith.mulf %53, %59 : vector<1x128xf32>
    %c0_40 = arith.constant 0 : index
    %c0_41 = arith.constant 0 : index
    %61 = vector.load %arg10[%c0_40, %c0_41] : memref<1x128xf32, #tpu.memory_space<vmem>>, vector<1x128xf32>
    tpu.vector_store %arg10[%c0_40, %c0_41], %60 {strides = array<i32>} : memref<1x128xf32, #tpu.memory_space<vmem>>, vector<1x128xf32>,
    %62 = vector.shape_cast %57 : vector<1x128xf32> to vector<1x1x128xf32>
    %63 = vector.broadcast %62 : vector<1x1x128xf32> to vector<1x8x128xf32>
    %64 = arith.mulf %43, %63 : vector<1x8x128xf32>
    %65 = vector.shape_cast %64 : vector<1x8x128xf32> to vector<8x128xf32>
    %66 = arith.truncf %65 : vector<8x128xf32> to vector<8x128xbf16>
    %c0_42 = arith.constant 0 : index
    %c0_43 = arith.constant 0 : index
    %67 = vector.load %arg5[%c0_42, %c0_43] : memref<128x128xbf16, #tpu.memory_space<vmem>>, vector<128x128xbf16>
    %cst_44 = arith.constant dense<0.000000e+00> : vector<8x128xf32>
    %68 = tpu.matmul %66, %67, %cst_44 {dimension_numbers = #tpu.dot_dimension_numbers<[1], [0], [0], [1], [0, 0, 1, 1], [], []>} : vector<8x128xbf16>, vector<128x128xbf16>, vector<8x128xf32> -> vector<8x128xf32>
    %69 = vector.shape_cast %68 : vector<8x128xf32> to vector<1x8x128xf32>
    %c0_45 = arith.constant 0 : index
    %c0_46 = arith.constant 0 : index
    %70 = vector.load %arg6[%c0_45, %c0_46] : memref<1x128xf32, #tpu.memory_space<vmem>>, vector<1x128xf32>
    %71 = vector.shape_cast %70 : vector<1x128xf32> to vector<1x1x128xf32>
    %72 = vector.broadcast %71 : vector<1x1x128xf32> to vector<1x8x128xf32>
    %73 = arith.addf %69, %72 : vector<1x8x128xf32>
    %74 = arith.addf %73, %5 : vector<1x8x128xf32>
    %75 = arith.truncf %74 : vector<1x8x128xf32> to vector<1x8x128xbf16>
    %c0_47 = arith.constant 0 : index
    %c0_48 = arith.constant 0 : index
    %c0_49 = arith.constant 0 : index
    %c0_50 = arith.constant 0 : index
    %76 = vector.load %arg7[%c0_47, %c0_48, %c0_49, %c0_50] : memref<1x1x8x128xbf16, #tpu.memory_space<vmem>>, vector<1x1x8x128xbf16>
    %77 = vector.shape_cast %76 : vector<1x1x8x128xbf16> to vector<1x8x128xbf16>
    %78 = vector.shape_cast %75 : vector<1x8x128xbf16> to vector<1x1x8x128xbf16>
    tpu.vector_store %arg7[%c0_47, %c0_48, %c0_49, %c0_50], %78 {strides = array<i32>} : memref<1x1x8x128xbf16, #tpu.memory_space<vmem>>, vector<1x1x8x128xbf16>,
    return
  }
  func.func @transform_0(%arg0: i32, %arg1: i32) -> (i32, i32, i32, i32) {
    %c0_i32 = arith.constant 0 : i32
    %c0_i32_0 = arith.constant 0 : i32
    %c0_i32_1 = arith.constant 0 : i32
    return %arg1, %arg0, %c0_i32, %c0_i32_0 : i32, i32, i32, i32
  }
  func.func @transform_1(%arg0: i32, %arg1: i32) -> (i32, i32) {
    %c0_i32 = arith.constant 0 : i32
    %c0_i32_0 = arith.constant 0 : i32
    %c0_i32_1 = arith.constant 0 : i32
    return %c0_i32, %c0_i32_0 : i32, i32
  }
  func.func @transform_2(%arg0: i32, %arg1: i32) -> (i32, i32) {
    %c0_i32 = arith.constant 0 : i32
    %c0_i32_0 = arith.constant 0 : i32
    %c0_i32_1 = arith.constant 0 : i32
    return %c0_i32, %c0_i32_0 : i32, i32
  }
  func.func @transform_3(%arg0: i32, %arg1: i32) -> (i32, i32) {
    %c0_i32 = arith.constant 0 : i32
    %c0_i32_0 = arith.constant 0 : i32
    %c0_i32_1 = arith.constant 0 : i32
    return %c0_i32, %c0_i32_0 : i32, i32
  }
  func.func @transform_4(%arg0: i32, %arg1: i32) -> (i32, i32) {
    %c0_i32 = arith.constant 0 : i32
    %c0_i32_0 = arith.constant 0 : i32
    %c0_i32_1 = arith.constant 0 : i32
    return %c0_i32, %c0_i32_0 : i32, i32
  }
  func.func @transform_5(%arg0: i32, %arg1: i32) -> (i32, i32, i32, i32) {
    %c0_i32 = arith.constant 0 : i32
    %c0_i32_0 = arith.constant 0 : i32
    %c0_i32_1 = arith.constant 0 : i32
    return %arg1, %arg0, %c0_i32, %c0_i32_0 : i32, i32, i32, i32
  }
}

module attributes {stable_mosaic.version = 11 : i64} {
  func.func @_matmul_shift_kernel(%arg0: i32, %arg1: i32, %arg2: i32, %arg3: memref<64x32xbf16, #tpu.memory_space<vmem>>, %arg4: memref<32x128xbf16, #tpu.memory_space<vmem>>, %arg5: memref<1x128xf32, #tpu.memory_space<vmem>>, %arg6: memref<64x128xbf16, #tpu.memory_space<vmem>>, %arg7: memref<64x128xf32, #tpu.memory_space<vmem>>) attributes {dimension_semantics = [#tpu.dimension_semantics<parallel>, #tpu.dimension_semantics<parallel>, #tpu.dimension_semantics<arbitrary>], iteration_bounds = array<i64: 1, 1, 1>, scalar_prefetch = 0 : i64, scratch_operands = 1 : i64, tpu.core_type = #tpu.core_type<tc>, window_params = [{transform_indices = @transform_0, window_bounds = array<i64: 64, 32>}, {transform_indices = @transform_1, window_bounds = array<i64: 32, 128>}, {transform_indices = @transform_2, window_bounds = array<i64: 1, 128>}, {transform_indices = @transform_3, window_bounds = array<i64: 64, 128>}]} {
    %c0_i32 = arith.constant 0 : i32
    %0 = arith.cmpi eq, %arg2, %c0_i32 : i32
    %1 = arith.extui %0 : i1 to i32
    %c0_i32_0 = arith.constant 0 : i32
    %2 = arith.cmpi ne, %1, %c0_i32_0 : i32
    scf.if %2 {
      %cst_10 = arith.constant 0.000000e+00 : f32
      %12 = vector.broadcast %cst_10 : f32 to vector<64x128xf32>
      %c0_11 = arith.constant 0 : index
      %c0_12 = arith.constant 0 : index
      %13 = vector.load %arg7[%c0_11, %c0_12] : memref<64x128xf32, #tpu.memory_space<vmem>>, vector<64x128xf32>
      tpu.vector_store %arg7[%c0_11, %c0_12], %12 {strides = array<i32>} : memref<64x128xf32, #tpu.memory_space<vmem>>, vector<64x128xf32>,
    } else {
    }
    %c0 = arith.constant 0 : index
    %c0_1 = arith.constant 0 : index
    %3 = vector.load %arg7[%c0, %c0_1] : memref<64x128xf32, #tpu.memory_space<vmem>>, vector<64x128xf32>
    %c0_2 = arith.constant 0 : index
    %c0_3 = arith.constant 0 : index
    %4 = vector.load %arg3[%c0_2, %c0_3] : memref<64x32xbf16, #tpu.memory_space<vmem>>, vector<64x32xbf16>
    %c0_4 = arith.constant 0 : index
    %c0_5 = arith.constant 0 : index
    %5 = vector.load %arg4[%c0_4, %c0_5] : memref<32x128xbf16, #tpu.memory_space<vmem>>, vector<32x128xbf16>
    %cst = arith.constant dense<0.000000e+00> : vector<64x128xf32>
    %6 = tpu.matmul %4, %5, %cst {dimension_numbers = #tpu.dot_dimension_numbers<[1], [0], [0], [1], [0, 0, 1, 1], [], []>} : vector<64x32xbf16>, vector<32x128xbf16>, vector<64x128xf32> -> vector<64x128xf32>
    %7 = arith.addf %3, %6 : vector<64x128xf32>
    %c0_6 = arith.constant 0 : index
    %c0_7 = arith.constant 0 : index
    %8 = vector.load %arg7[%c0_6, %c0_7] : memref<64x128xf32, #tpu.memory_space<vmem>>, vector<64x128xf32>
    tpu.vector_store %arg7[%c0_6, %c0_7], %7 {strides = array<i32>} : memref<64x128xf32, #tpu.memory_space<vmem>>, vector<64x128xf32>,
    %c0_i32_8 = arith.constant 0 : i32
    %9 = arith.cmpi eq, %arg2, %c0_i32_8 : i32
    %10 = arith.extui %9 : i1 to i32
    %c0_i32_9 = arith.constant 0 : i32
    %11 = arith.cmpi ne, %10, %c0_i32_9 : i32
    scf.if %11 {
      %c0_10 = arith.constant 0 : index
      %c0_11 = arith.constant 0 : index
      %12 = vector.load %arg7[%c0_10, %c0_11] : memref<64x128xf32, #tpu.memory_space<vmem>>, vector<64x128xf32>
      %c0_12 = arith.constant 0 : index
      %c0_13 = arith.constant 0 : index
      %13 = vector.load %arg5[%c0_12, %c0_13] : memref<1x128xf32, #tpu.memory_space<vmem>>, vector<1x128xf32>
      %14 = vector.broadcast %13 : vector<1x128xf32> to vector<64x128xf32>
      %15 = arith.addf %12, %14 : vector<64x128xf32>
      %16 = arith.truncf %15 : vector<64x128xf32> to vector<64x128xbf16>
      %c0_14 = arith.constant 0 : index
      %c0_15 = arith.constant 0 : index
      %17 = vector.load %arg6[%c0_14, %c0_15] : memref<64x128xbf16, #tpu.memory_space<vmem>>, vector<64x128xbf16>
      tpu.vector_store %arg6[%c0_14, %c0_15], %16 {strides = array<i32>} : memref<64x128xbf16, #tpu.memory_space<vmem>>, vector<64x128xbf16>,
    } else {
    }
    return
  }
  func.func @transform_0(%arg0: i32, %arg1: i32, %arg2: i32) -> (i32, i32) {
    %c0_i32 = arith.constant 0 : i32
    return %arg0, %arg2 : i32, i32
  }
  func.func @transform_1(%arg0: i32, %arg1: i32, %arg2: i32) -> (i32, i32) {
    %c0_i32 = arith.constant 0 : i32
    return %arg2, %arg1 : i32, i32
  }
  func.func @transform_2(%arg0: i32, %arg1: i32, %arg2: i32) -> (i32, i32) {
    %c0_i32 = arith.constant 0 : i32
    %c0_i32_0 = arith.constant 0 : i32
    return %c0_i32, %arg1 : i32, i32
  }
  func.func @transform_3(%arg0: i32, %arg1: i32, %arg2: i32) -> (i32, i32) {
    %c0_i32 = arith.constant 0 : i32
    return %arg0, %arg1 : i32, i32
  }
}

module attributes {stable_mosaic.version = 11 : i64} {
  func.func @_mlp_block_kernel(%arg0: i32, %arg1: i32, %arg2: memref<1x8x128xbf16, #tpu.memory_space<vmem>>, %arg3: memref<128x512xbf16, #tpu.memory_space<vmem>>, %arg4: memref<1x512xf32, #tpu.memory_space<vmem>>, %arg5: memref<512x128xbf16, #tpu.memory_space<vmem>>, %arg6: memref<1x128xf32, #tpu.memory_space<vmem>>, %arg7: memref<1x8x128xbf16, #tpu.memory_space<vmem>>, %arg8: memref<8x128xf32, #tpu.memory_space<vmem>>, %arg9: memref<8x512xf32, #tpu.memory_space<vmem>>) attributes {dimension_semantics = [#tpu.dimension_semantics<parallel>, #tpu.dimension_semantics<arbitrary>], iteration_bounds = array<i64: 2, 4>, scalar_prefetch = 0 : i64, scratch_operands = 2 : i64, tpu.core_type = #tpu.core_type<tc>, window_params = [{transform_indices = @transform_0, window_bounds = array<i64: 1, 8, 128>}, {pipeline_mode = #tpu.pipeline_mode<synchronous>, transform_indices = @transform_1, window_bounds = array<i64: 128, 512>}, {pipeline_mode = #tpu.pipeline_mode<synchronous>, transform_indices = @transform_2, window_bounds = array<i64: 1, 512>}, {pipeline_mode = #tpu.pipeline_mode<synchronous>, transform_indices = @transform_3, window_bounds = array<i64: 512, 128>}, {pipeline_mode = #tpu.pipeline_mode<synchronous>, transform_indices = @transform_4, window_bounds = array<i64: 1, 128>}, {transform_indices = @transform_5, window_bounds = array<i64: 1, 8, 128>}]} {
    %c0_i32 = arith.constant 0 : i32
    %0 = arith.cmpi eq, %arg1, %c0_i32 : i32
    %1 = arith.extui %0 : i1 to i32
    %c0_i32_0 = arith.constant 0 : i32
    %2 = arith.cmpi ne, %1, %c0_i32_0 : i32
    scf.if %2 {
      %cst_33 = arith.constant 0.000000e+00 : f32
      %51 = vector.broadcast %cst_33 : f32 to vector<8x128xf32>
      %c0_34 = arith.constant 0 : index
      %c0_35 = arith.constant 0 : index
      %52 = vector.load %arg8[%c0_34, %c0_35] : memref<8x128xf32, #tpu.memory_space<vmem>>, vector<8x128xf32>
      tpu.vector_store %arg8[%c0_34, %c0_35], %51 {strides = array<i32>} : memref<8x128xf32, #tpu.memory_space<vmem>>, vector<8x128xf32>,
      %cst_36 = arith.constant 0.000000e+00 : f32
      %53 = vector.broadcast %cst_36 : f32 to vector<8x512xf32>
      %c0_37 = arith.constant 0 : index
      %c0_38 = arith.constant 0 : index
      %54 = vector.load %arg9[%c0_37, %c0_38] : memref<8x512xf32, #tpu.memory_space<vmem>>, vector<8x512xf32>
      tpu.vector_store %arg9[%c0_37, %c0_38], %53 {strides = array<i32>} : memref<8x512xf32, #tpu.memory_space<vmem>>, vector<8x512xf32>,
    } else {
    }
    %c0 = arith.constant 0 : index
    %c0_1 = arith.constant 0 : index
    %c0_2 = arith.constant 0 : index
    %3 = vector.load %arg2[%c0, %c0_1, %c0_2] : memref<1x8x128xbf16, #tpu.memory_space<vmem>>, vector<1x8x128xbf16>
    %4 = vector.shape_cast %3 : vector<1x8x128xbf16> to vector<8x128xbf16>
    %5 = arith.extf %4 : vector<8x128xbf16> to vector<8x128xf32>
    %c0_3 = arith.constant 0 : index
    %c0_4 = arith.constant 0 : index
    %6 = vector.load %arg8[%c0_3, %c0_4] : memref<8x128xf32, #tpu.memory_space<vmem>>, vector<8x128xf32>
    %c0_5 = arith.constant 0 : index
    %c0_6 = arith.constant 0 : index
    %7 = vector.load %arg8[%c0_5, %c0_6] : memref<8x128xf32, #tpu.memory_space<vmem>>, vector<8x128xf32>
    %8 = arith.subf %5, %7 : vector<8x128xf32>
    %cst = arith.constant 5.000000e-01 : f32
    %9 = vector.broadcast %cst : f32 to vector<8x128xf32>
    %10 = arith.mulf %8, %9 : vector<8x128xf32>
    %11 = arith.addf %6, %10 : vector<8x128xf32>
    %cst_7 = arith.constant 1.000000e+00 : f32
    %12 = vector.broadcast %cst_7 : f32 to vector<8x128xf32>
    %13 = arith.cmpf oge, %11, %12 : vector<8x128xf32>
    %14 = arith.extui %13 : vector<8x128xi1> to vector<8x128xi32>
    %15 = arith.sitofp %14 : vector<8x128xi32> to vector<8x128xf32>
    %cst_8 = arith.constant 1.000000e+00 : f32
    %16 = vector.broadcast %cst_8 : f32 to vector<8x128xf32>
    %17 = arith.subf %16, %15 : vector<8x128xf32>
    %18 = arith.mulf %11, %17 : vector<8x128xf32>
    %c0_9 = arith.constant 0 : index
    %c0_10 = arith.constant 0 : index
    %19 = vector.load %arg8[%c0_9, %c0_10] : memref<8x128xf32, #tpu.memory_space<vmem>>, vector<8x128xf32>
    tpu.vector_store %arg8[%c0_9, %c0_10], %18 {strides = array<i32>} : memref<8x128xf32, #tpu.memory_space<vmem>>, vector<8x128xf32>,
    %20 = arith.truncf %15 : vector<8x128xf32> to vector<8x128xbf16>
    %c0_11 = arith.constant 0 : index
    %c0_12 = arith.constant 0 : index
    %21 = vector.load %arg3[%c0_11, %c0_12] : memref<128x512xbf16, #tpu.memory_space<vmem>>, vector<128x512xbf16>
    %cst_13 = arith.constant dense<0.000000e+00> : vector<8x512xf32>
    %22 = tpu.matmul %20, %21, %cst_13 {dimension_numbers = #tpu.dot_dimension_numbers<[1], [0], [0], [1], [0, 0, 1, 1], [], []>} : vector<8x128xbf16>, vector<128x512xbf16>, vector<8x512xf32> -> vector<8x512xf32>
    %c0_14 = arith.constant 0 : index
    %c0_15 = arith.constant 0 : index
    %23 = vector.load %arg4[%c0_14, %c0_15] : memref<1x512xf32, #tpu.memory_space<vmem>>, vector<1x512xf32>
    %24 = vector.broadcast %23 : vector<1x512xf32> to vector<8x512xf32>
    %25 = arith.addf %22, %24 : vector<8x512xf32>
    %c0_16 = arith.constant 0 : index
    %c0_17 = arith.constant 0 : index
    %26 = vector.load %arg9[%c0_16, %c0_17] : memref<8x512xf32, #tpu.memory_space<vmem>>, vector<8x512xf32>
    %c0_18 = arith.constant 0 : index
    %c0_19 = arith.constant 0 : index
    %27 = vector.load %arg9[%c0_18, %c0_19] : memref<8x512xf32, #tpu.memory_space<vmem>>, vector<8x512xf32>
    %28 = arith.subf %25, %27 : vector<8x512xf32>
    %cst_20 = arith.constant 5.000000e-01 : f32
    %29 = vector.broadcast %cst_20 : f32 to vector<8x512xf32>
    %30 = arith.mulf %28, %29 : vector<8x512xf32>
    %31 = arith.addf %26, %30 : vector<8x512xf32>
    %cst_21 = arith.constant 1.000000e+00 : f32
    %32 = vector.broadcast %cst_21 : f32 to vector<8x512xf32>
    %33 = arith.cmpf oge, %31, %32 : vector<8x512xf32>
    %34 = arith.extui %33 : vector<8x512xi1> to vector<8x512xi32>
    %35 = arith.sitofp %34 : vector<8x512xi32> to vector<8x512xf32>
    %cst_22 = arith.constant 1.000000e+00 : f32
    %36 = vector.broadcast %cst_22 : f32 to vector<8x512xf32>
    %37 = arith.subf %36, %35 : vector<8x512xf32>
    %38 = arith.mulf %31, %37 : vector<8x512xf32>
    %c0_23 = arith.constant 0 : index
    %c0_24 = arith.constant 0 : index
    %39 = vector.load %arg9[%c0_23, %c0_24] : memref<8x512xf32, #tpu.memory_space<vmem>>, vector<8x512xf32>
    tpu.vector_store %arg9[%c0_23, %c0_24], %38 {strides = array<i32>} : memref<8x512xf32, #tpu.memory_space<vmem>>, vector<8x512xf32>,
    %40 = arith.truncf %35 : vector<8x512xf32> to vector<8x512xbf16>
    %c0_25 = arith.constant 0 : index
    %c0_26 = arith.constant 0 : index
    %41 = vector.load %arg5[%c0_25, %c0_26] : memref<512x128xbf16, #tpu.memory_space<vmem>>, vector<512x128xbf16>
    %cst_27 = arith.constant dense<0.000000e+00> : vector<8x128xf32>
    %42 = tpu.matmul %40, %41, %cst_27 {dimension_numbers = #tpu.dot_dimension_numbers<[1], [0], [0], [1], [0, 0, 1, 1], [], []>} : vector<8x512xbf16>, vector<512x128xbf16>, vector<8x128xf32> -> vector<8x128xf32>
    %c0_28 = arith.constant 0 : index
    %c0_29 = arith.constant 0 : index
    %43 = vector.load %arg6[%c0_28, %c0_29] : memref<1x128xf32, #tpu.memory_space<vmem>>, vector<1x128xf32>
    %44 = vector.broadcast %43 : vector<1x128xf32> to vector<8x128xf32>
    %45 = arith.addf %42, %44 : vector<8x128xf32>
    %46 = arith.addf %45, %5 : vector<8x128xf32>
    %47 = arith.truncf %46 : vector<8x128xf32> to vector<8x128xbf16>
    %c0_30 = arith.constant 0 : index
    %c0_31 = arith.constant 0 : index
    %c0_32 = arith.constant 0 : index
    %48 = vector.load %arg7[%c0_30, %c0_31, %c0_32] : memref<1x8x128xbf16, #tpu.memory_space<vmem>>, vector<1x8x128xbf16>
    %49 = vector.shape_cast %48 : vector<1x8x128xbf16> to vector<8x128xbf16>
    %50 = vector.shape_cast %47 : vector<8x128xbf16> to vector<1x8x128xbf16>
    tpu.vector_store %arg7[%c0_30, %c0_31, %c0_32], %50 {strides = array<i32>} : memref<1x8x128xbf16, #tpu.memory_space<vmem>>, vector<1x8x128xbf16>,
    return
  }
  func.func @transform_0(%arg0: i32, %arg1: i32) -> (i32, i32, i32) {
    %c0_i32 = arith.constant 0 : i32
    %c0_i32_0 = arith.constant 0 : i32
    return %arg1, %arg0, %c0_i32 : i32, i32, i32
  }
  func.func @transform_1(%arg0: i32, %arg1: i32) -> (i32, i32) {
    %c0_i32 = arith.constant 0 : i32
    %c0_i32_0 = arith.constant 0 : i32
    %c0_i32_1 = arith.constant 0 : i32
    return %c0_i32, %c0_i32_0 : i32, i32
  }
  func.func @transform_2(%arg0: i32, %arg1: i32) -> (i32, i32) {
    %c0_i32 = arith.constant 0 : i32
    %c0_i32_0 = arith.constant 0 : i32
    %c0_i32_1 = arith.constant 0 : i32
    return %c0_i32, %c0_i32_0 : i32, i32
  }
  func.func @transform_3(%arg0: i32, %arg1: i32) -> (i32, i32) {
    %c0_i32 = arith.constant 0 : i32
    %c0_i32_0 = arith.constant 0 : i32
    %c0_i32_1 = arith.constant 0 : i32
    return %c0_i32, %c0_i32_0 : i32, i32
  }
  func.func @transform_4(%arg0: i32, %arg1: i32) -> (i32, i32) {
    %c0_i32 = arith.constant 0 : i32
    %c0_i32_0 = arith.constant 0 : i32
    %c0_i32_1 = arith.constant 0 : i32
    return %c0_i32, %c0_i32_0 : i32, i32
  }
  func.func @transform_5(%arg0: i32, %arg1: i32) -> (i32, i32, i32) {
    %c0_i32 = arith.constant 0 : i32
    %c0_i32_0 = arith.constant 0 : i32
    return %arg1, %arg0, %c0_i32 : i32, i32, i32
  }
}

module attributes {stable_mosaic.version = 11 : i64} {
  func.func @_attn_block_kernel(%arg0: i32, %arg1: i32, %arg2: memref<1x1x8x128xbf16, #tpu.memory_space<vmem>>, %arg3: memref<128x384xbf16, #tpu.memory_space<vmem>>, %arg4: memref<1x384xf32, #tpu.memory_space<vmem>>, %arg5: memref<128x128xbf16, #tpu.memory_space<vmem>>, %arg6: memref<1x128xf32, #tpu.memory_space<vmem>>, %arg7: memref<1x1x8x128xbf16, #tpu.memory_space<vmem>>, %arg8: memref<1x8x128xf32, #tpu.memory_space<vmem>>, %arg9: memref<1x8x384xf32, #tpu.memory_space<vmem>>, %arg10: memref<1x128xf32, #tpu.memory_space<vmem>>) attributes {dimension_semantics = [#tpu.dimension_semantics<parallel>, #tpu.dimension_semantics<arbitrary>], iteration_bounds = array<i64: 2, 4>, scalar_prefetch = 0 : i64, scratch_operands = 3 : i64, tpu.core_type = #tpu.core_type<tc>, window_params = [{transform_indices = @transform_0, window_bounds = array<i64: 1, 1, 8, 128>}, {pipeline_mode = #tpu.pipeline_mode<synchronous>, transform_indices = @transform_1, window_bounds = array<i64: 128, 384>}, {pipeline_mode = #tpu.pipeline_mode<synchronous>, transform_indices = @transform_2, window_bounds = array<i64: 1, 384>}, {pipeline_mode = #tpu.pipeline_mode<synchronous>, transform_indices = @transform_3, window_bounds = array<i64: 128, 128>}, {pipeline_mode = #tpu.pipeline_mode<synchronous>, transform_indices = @transform_4, window_bounds = array<i64: 1, 128>}, {transform_indices = @transform_5, window_bounds = array<i64: 1, 1, 8, 128>}]} {
    %c0_i32 = arith.constant 0 : i32
    %0 = arith.cmpi eq, %arg1, %c0_i32 : i32
    %1 = arith.extui %0 : i1 to i32
    %c0_i32_0 = arith.constant 0 : i32
    %2 = arith.cmpi ne, %1, %c0_i32_0 : i32
    scf.if %2 {
      %cst_51 = arith.constant 0.000000e+00 : f32
      %79 = vector.broadcast %cst_51 : f32 to vector<1x8x128xf32>
      %c0_52 = arith.constant 0 : index
      %c0_53 = arith.constant 0 : index
      %c0_54 = arith.constant 0 : index
      %80 = vector.load %arg8[%c0_52, %c0_53, %c0_54] : memref<1x8x128xf32, #tpu.memory_space<vmem>>, vector<1x8x128xf32>
      tpu.vector_store %arg8[%c0_52, %c0_53, %c0_54], %79 {strides = array<i32>} : memref<1x8x128xf32, #tpu.memory_space<vmem>>, vector<1x8x128xf32>,
      %cst_55 = arith.constant 0.000000e+00 : f32
      %81 = vector.broadcast %cst_55 : f32 to vector<1x8x384xf32>
      %c0_56 = arith.constant 0 : index
      %c0_57 = arith.constant 0 : index
      %c0_58 = arith.constant 0 : index
      %82 = vector.load %arg9[%c0_56, %c0_57, %c0_58] : memref<1x8x384xf32, #tpu.memory_space<vmem>>, vector<1x8x384xf32>
      tpu.vector_store %arg9[%c0_56, %c0_57, %c0_58], %81 {strides = array<i32>} : memref<1x8x384xf32, #tpu.memory_space<vmem>>, vector<1x8x384xf32>,
      %cst_59 = arith.constant 0.000000e+00 : f32
      %83 = vector.broadcast %cst_59 : f32 to vector<1x128xf32>
      %c0_60 = arith.constant 0 : index
      %c0_61 = arith.constant 0 : index
      %84 = vector.load %arg10[%c0_60, %c0_61] : memref<1x128xf32, #tpu.memory_space<vmem>>, vector<1x128xf32>
      tpu.vector_store %arg10[%c0_60, %c0_61], %83 {strides = array<i32>} : memref<1x128xf32, #tpu.memory_space<vmem>>, vector<1x128xf32>,
    } else {
    }
    %c0 = arith.constant 0 : index
    %c0_1 = arith.constant 0 : index
    %c0_2 = arith.constant 0 : index
    %c0_3 = arith.constant 0 : index
    %3 = vector.load %arg2[%c0, %c0_1, %c0_2, %c0_3] : memref<1x1x8x128xbf16, #tpu.memory_space<vmem>>, vector<1x1x8x128xbf16>
    %4 = vector.shape_cast %3 : vector<1x1x8x128xbf16> to vector<1x8x128xbf16>
    %5 = arith.extf %4 : vector<1x8x128xbf16> to vector<1x8x128xf32>
    %c0_4 = arith.constant 0 : index
    %c0_5 = arith.constant 0 : index
    %c0_6 = arith.constant 0 : index
    %6 = vector.load %arg8[%c0_4, %c0_5, %c0_6] : memref<1x8x128xf32, #tpu.memory_space<vmem>>, vector<1x8x128xf32>
    %c0_7 = arith.constant 0 : index
    %c0_8 = arith.constant 0 : index
    %c0_9 = arith.constant 0 : index
    %7 = vector.load %arg8[%c0_7, %c0_8, %c0_9] : memref<1x8x128xf32, #tpu.memory_space<vmem>>, vector<1x8x128xf32>
    %8 = arith.subf %5, %7 : vector<1x8x128xf32>
    %cst = arith.constant 5.000000e-01 : f32
    %9 = vector.broadcast %cst : f32 to vector<1x8x128xf32>
    %10 = arith.mulf %8, %9 : vector<1x8x128xf32>
    %11 = arith.addf %6, %10 : vector<1x8x128xf32>
    %cst_10 = arith.constant 1.000000e+00 : f32
    %12 = vector.broadcast %cst_10 : f32 to vector<1x8x128xf32>
    %13 = arith.cmpf oge, %11, %12 : vector<1x8x128xf32>
    %14 = arith.extui %13 : vector<1x8x128xi1> to vector<1x8x128xi32>
    %15 = arith.sitofp %14 : vector<1x8x128xi32> to vector<1x8x128xf32>
    %cst_11 = arith.constant 1.000000e+00 : f32
    %16 = vector.broadcast %cst_11 : f32 to vector<1x8x128xf32>
    %17 = arith.subf %16, %15 : vector<1x8x128xf32>
    %18 = arith.mulf %11, %17 : vector<1x8x128xf32>
    %c0_12 = arith.constant 0 : index
    %c0_13 = arith.constant 0 : index
    %c0_14 = arith.constant 0 : index
    %19 = vector.load %arg8[%c0_12, %c0_13, %c0_14] : memref<1x8x128xf32, #tpu.memory_space<vmem>>, vector<1x8x128xf32>
    tpu.vector_store %arg8[%c0_12, %c0_13, %c0_14], %18 {strides = array<i32>} : memref<1x8x128xf32, #tpu.memory_space<vmem>>, vector<1x8x128xf32>,
    %20 = vector.shape_cast %15 : vector<1x8x128xf32> to vector<8x128xf32>
    %21 = arith.truncf %20 : vector<8x128xf32> to vector<8x128xbf16>
    %c0_15 = arith.constant 0 : index
    %c0_16 = arith.constant 0 : index
    %22 = vector.load %arg3[%c0_15, %c0_16] : memref<128x384xbf16, #tpu.memory_space<vmem>>, vector<128x384xbf16>
    %cst_17 = arith.constant dense<0.000000e+00> : vector<8x384xf32>
    %23 = tpu.matmul %21, %22, %cst_17 {dimension_numbers = #tpu.dot_dimension_numbers<[1], [0], [0], [1], [0, 0, 1, 1], [], []>} : vector<8x128xbf16>, vector<128x384xbf16>, vector<8x384xf32> -> vector<8x384xf32>
    %24 = vector.shape_cast %23 : vector<8x384xf32> to vector<1x8x384xf32>
    %c0_18 = arith.constant 0 : index
    %c0_19 = arith.constant 0 : index
    %25 = vector.load %arg4[%c0_18, %c0_19] : memref<1x384xf32, #tpu.memory_space<vmem>>, vector<1x384xf32>
    %26 = vector.shape_cast %25 : vector<1x384xf32> to vector<1x1x384xf32>
    %27 = vector.broadcast %26 : vector<1x1x384xf32> to vector<1x8x384xf32>
    %28 = arith.addf %24, %27 : vector<1x8x384xf32>
    %c0_20 = arith.constant 0 : index
    %c0_21 = arith.constant 0 : index
    %c0_22 = arith.constant 0 : index
    %29 = vector.load %arg9[%c0_20, %c0_21, %c0_22] : memref<1x8x384xf32, #tpu.memory_space<vmem>>, vector<1x8x384xf32>
    %c0_23 = arith.constant 0 : index
    %c0_24 = arith.constant 0 : index
    %c0_25 = arith.constant 0 : index
    %30 = vector.load %arg9[%c0_23, %c0_24, %c0_25] : memref<1x8x384xf32, #tpu.memory_space<vmem>>, vector<1x8x384xf32>
    %31 = arith.subf %28, %30 : vector<1x8x384xf32>
    %cst_26 = arith.constant 5.000000e-01 : f32
    %32 = vector.broadcast %cst_26 : f32 to vector<1x8x384xf32>
    %33 = arith.mulf %31, %32 : vector<1x8x384xf32>
    %34 = arith.addf %29, %33 : vector<1x8x384xf32>
    %cst_27 = arith.constant 1.000000e+00 : f32
    %35 = vector.broadcast %cst_27 : f32 to vector<1x8x384xf32>
    %36 = arith.cmpf oge, %34, %35 : vector<1x8x384xf32>
    %37 = arith.extui %36 : vector<1x8x384xi1> to vector<1x8x384xi32>
    %38 = arith.sitofp %37 : vector<1x8x384xi32> to vector<1x8x384xf32>
    %cst_28 = arith.constant 1.000000e+00 : f32
    %39 = vector.broadcast %cst_28 : f32 to vector<1x8x384xf32>
    %40 = arith.subf %39, %38 : vector<1x8x384xf32>
    %41 = arith.mulf %34, %40 : vector<1x8x384xf32>
    %c0_29 = arith.constant 0 : index
    %c0_30 = arith.constant 0 : index
    %c0_31 = arith.constant 0 : index
    %42 = vector.load %arg9[%c0_29, %c0_30, %c0_31] : memref<1x8x384xf32, #tpu.memory_space<vmem>>, vector<1x8x384xf32>
    tpu.vector_store %arg9[%c0_29, %c0_30, %c0_31], %41 {strides = array<i32>} : memref<1x8x384xf32, #tpu.memory_space<vmem>>, vector<1x8x384xf32>,
    %43 = vector.extract_strided_slice %38 {offsets = [0, 0, 0], sizes = [1, 8, 128], strides = [1, 1, 1]} : vector<1x8x384xf32> to vector<1x8x128xf32>
    %44 = vector.extract_strided_slice %38 {offsets = [0, 0, 128], sizes = [1, 8, 128], strides = [1, 1, 1]} : vector<1x8x384xf32> to vector<1x8x128xf32>
    %45 = vector.extract_strided_slice %38 {offsets = [0, 0, 256], sizes = [1, 8, 128], strides = [1, 1, 1]} : vector<1x8x384xf32> to vector<1x8x128xf32>
    %46 = arith.mulf %44, %45 : vector<1x8x128xf32>
    %cst_32 = arith.constant dense<0.000000e+00> : vector<1x128xf32>
    %47 = vector.multi_reduction <add>, %46, %cst_32 [1] : vector<1x8x128xf32> to vector<1x128xf32>
    %c0_33 = arith.constant 0 : index
    %c0_34 = arith.constant 0 : index
    %48 = vector.load %arg10[%c0_33, %c0_34] : memref<1x128xf32, #tpu.memory_space<vmem>>, vector<1x128xf32>
    %c0_35 = arith.constant 0 : index
    %c0_36 = arith.constant 0 : index
    %49 = vector.load %arg10[%c0_35, %c0_36] : memref<1x128xf32, #tpu.memory_space<vmem>>, vector<1x128xf32>
    %50 = arith.subf %47, %49 : vector<1x128xf32>
    %cst_37 = arith.constant 5.000000e-01 : f32
    %51 = vector.broadcast %cst_37 : f32 to vector<1x128xf32>
    %52 = arith.mulf %50, %51 : vector<1x128xf32>
    %53 = arith.addf %48, %52 : vector<1x128xf32>
    %cst_38 = arith.constant 1.000000e+00 : f32
    %54 = vector.broadcast %cst_38 : f32 to vector<1x128xf32>
    %55 = arith.cmpf oge, %53, %54 : vector<1x128xf32>
    %56 = arith.extui %55 : vector<1x128xi1> to vector<1x128xi32>
    %57 = arith.sitofp %56 : vector<1x128xi32> to vector<1x128xf32>
    %cst_39 = arith.constant 1.000000e+00 : f32
    %58 = vector.broadcast %cst_39 : f32 to vector<1x128xf32>
    %59 = arith.subf %58, %57 : vector<1x128xf32>
    %60 = arith.mulf %53, %59 : vector<1x128xf32>
    %c0_40 = arith.constant 0 : index
    %c0_41 = arith.constant 0 : index
    %61 = vector.load %arg10[%c0_40, %c0_41] : memref<1x128xf32, #tpu.memory_space<vmem>>, vector<1x128xf32>
    tpu.vector_store %arg10[%c0_40, %c0_41], %60 {strides = array<i32>} : memref<1x128xf32, #tpu.memory_space<vmem>>, vector<1x128xf32>,
    %62 = vector.shape_cast %57 : vector<1x128xf32> to vector<1x1x128xf32>
    %63 = vector.broadcast %62 : vector<1x1x128xf32> to vector<1x8x128xf32>
    %64 = arith.mulf %43, %63 : vector<1x8x128xf32>
    %65 = vector.shape_cast %64 : vector<1x8x128xf32> to vector<8x128xf32>
    %66 = arith.truncf %65 : vector<8x128xf32> to vector<8x128xbf16>
    %c0_42 = arith.constant 0 : index
    %c0_43 = arith.constant 0 : index
    %67 = vector.load %arg5[%c0_42, %c0_43] : memref<128x128xbf16, #tpu.memory_space<vmem>>, vector<128x128xbf16>
    %cst_44 = arith.constant dense<0.000000e+00> : vector<8x128xf32>
    %68 = tpu.matmul %66, %67, %cst_44 {dimension_numbers = #tpu.dot_dimension_numbers<[1], [0], [0], [1], [0, 0, 1, 1], [], []>} : vector<8x128xbf16>, vector<128x128xbf16>, vector<8x128xf32> -> vector<8x128xf32>
    %69 = vector.shape_cast %68 : vector<8x128xf32> to vector<1x8x128xf32>
    %c0_45 = arith.constant 0 : index
    %c0_46 = arith.constant 0 : index
    %70 = vector.load %arg6[%c0_45, %c0_46] : memref<1x128xf32, #tpu.memory_space<vmem>>, vector<1x128xf32>
    %71 = vector.shape_cast %70 : vector<1x128xf32> to vector<1x1x128xf32>
    %72 = vector.broadcast %71 : vector<1x1x128xf32> to vector<1x8x128xf32>
    %73 = arith.addf %69, %72 : vector<1x8x128xf32>
    %74 = arith.addf %73, %5 : vector<1x8x128xf32>
    %75 = arith.truncf %74 : vector<1x8x128xf32> to vector<1x8x128xbf16>
    %c0_47 = arith.constant 0 : index
    %c0_48 = arith.constant 0 : index
    %c0_49 = arith.constant 0 : index
    %c0_50 = arith.constant 0 : index
    %76 = vector.load %arg7[%c0_47, %c0_48, %c0_49, %c0_50] : memref<1x1x8x128xbf16, #tpu.memory_space<vmem>>, vector<1x1x8x128xbf16>
    %77 = vector.shape_cast %76 : vector<1x1x8x128xbf16> to vector<1x8x128xbf16>
    %78 = vector.shape_cast %75 : vector<1x8x128xbf16> to vector<1x1x8x128xbf16>
    tpu.vector_store %arg7[%c0_47, %c0_48, %c0_49, %c0_50], %78 {strides = array<i32>} : memref<1x1x8x128xbf16, #tpu.memory_space<vmem>>, vector<1x1x8x128xbf16>,
    return
  }
  func.func @transform_0(%arg0: i32, %arg1: i32) -> (i32, i32, i32, i32) {
    %c0_i32 = arith.constant 0 : i32
    %c0_i32_0 = arith.constant 0 : i32
    %c0_i32_1 = arith.constant 0 : i32
    return %arg1, %arg0, %c0_i32, %c0_i32_0 : i32, i32, i32, i32
  }
  func.func @transform_1(%arg0: i32, %arg1: i32) -> (i32, i32) {
    %c0_i32 = arith.constant 0 : i32
    %c0_i32_0 = arith.constant 0 : i32
    %c0_i32_1 = arith.constant 0 : i32
    return %c0_i32, %c0_i32_0 : i32, i32
  }
  func.func @transform_2(%arg0: i32, %arg1: i32) -> (i32, i32) {
    %c0_i32 = arith.constant 0 : i32
    %c0_i32_0 = arith.constant 0 : i32
    %c0_i32_1 = arith.constant 0 : i32
    return %c0_i32, %c0_i32_0 : i32, i32
  }
  func.func @transform_3(%arg0: i32, %arg1: i32) -> (i32, i32) {
    %c0_i32 = arith.constant 0 : i32
    %c0_i32_0 = arith.constant 0 : i32
    %c0_i32_1 = arith.constant 0 : i32
    return %c0_i32, %c0_i32_0 : i32, i32
  }
  func.func @transform_4(%arg0: i32, %arg1: i32) -> (i32, i32) {
    %c0_i32 = arith.constant 0 : i32
    %c0_i32_0 = arith.constant 0 : i32
    %c0_i32_1 = arith.constant 0 : i32
    return %c0_i32, %c0_i32_0 : i32, i32
  }
  func.func @transform_5(%arg0: i32, %arg1: i32) -> (i32, i32, i32, i32) {
    %c0_i32 = arith.constant 0 : i32
    %c0_i32_0 = arith.constant 0 : i32
    %c0_i32_1 = arith.constant 0 : i32
    return %arg1, %arg0, %c0_i32, %c0_i32_0 : i32, i32, i32, i32
  }
}

module attributes {stable_mosaic.version = 11 : i64} {
  func.func @_pool_lif_head_kernel(%arg0: i32, %arg1: memref<1x2x8x128xbf16, #tpu.memory_space<vmem>>, %arg2: memref<128x128xbf16, #tpu.memory_space<vmem>>, %arg3: memref<1x128xf32, #tpu.memory_space<vmem>>, %arg4: memref<1x2x128xf32, #tpu.memory_space<vmem>>, %arg5: memref<2x128xf32, #tpu.memory_space<vmem>>) attributes {dimension_semantics = [#tpu.dimension_semantics<arbitrary>], iteration_bounds = array<i64: 4>, scalar_prefetch = 0 : i64, scratch_operands = 1 : i64, tpu.core_type = #tpu.core_type<tc>, window_params = [{transform_indices = @transform_0, window_bounds = array<i64: 1, 2, 8, 128>}, {pipeline_mode = #tpu.pipeline_mode<synchronous>, transform_indices = @transform_1, window_bounds = array<i64: 128, 128>}, {pipeline_mode = #tpu.pipeline_mode<synchronous>, transform_indices = @transform_2, window_bounds = array<i64: 1, 128>}, {transform_indices = @transform_3, window_bounds = array<i64: 1, 2, 128>}]} {
    %c0_i32 = arith.constant 0 : i32
    %0 = arith.cmpi eq, %arg0, %c0_i32 : i32
    %1 = arith.extui %0 : i1 to i32
    %c0_i32_0 = arith.constant 0 : i32
    %2 = arith.cmpi ne, %1, %c0_i32_0 : i32
    scf.if %2 {
      %cst_22 = arith.constant 0.000000e+00 : f32
      %32 = vector.broadcast %cst_22 : f32 to vector<2x128xf32>
      %c0_23 = arith.constant 0 : index
      %c0_24 = arith.constant 0 : index
      %33 = vector.load %arg5[%c0_23, %c0_24] : memref<2x128xf32, #tpu.memory_space<vmem>>, vector<2x128xf32>
      tpu.vector_store %arg5[%c0_23, %c0_24], %32 {strides = array<i32>} : memref<2x128xf32, #tpu.memory_space<vmem>>, vector<2x128xf32>,
    } else {
    }
    %c0 = arith.constant 0 : index
    %c0_1 = arith.constant 0 : index
    %c0_2 = arith.constant 0 : index
    %c0_3 = arith.constant 0 : index
    %3 = vector.load %arg1[%c0, %c0_1, %c0_2, %c0_3] : memref<1x2x8x128xbf16, #tpu.memory_space<vmem>>, vector<1x2x8x128xbf16>
    %4 = vector.shape_cast %3 : vector<1x2x8x128xbf16> to vector<2x8x128xbf16>
    %5 = arith.extf %4 : vector<2x8x128xbf16> to vector<2x8x128xf32>
    %cst = arith.constant dense<0.000000e+00> : vector<2x128xf32>
    %6 = vector.multi_reduction <add>, %5, %cst [1] : vector<2x8x128xf32> to vector<2x128xf32>
    %cst_4 = arith.constant 1.250000e-01 : f32
    %7 = vector.broadcast %cst_4 : f32 to vector<2x128xf32>
    %8 = arith.mulf %6, %7 : vector<2x128xf32>
    %c0_5 = arith.constant 0 : index
    %c0_6 = arith.constant 0 : index
    %9 = vector.load %arg5[%c0_5, %c0_6] : memref<2x128xf32, #tpu.memory_space<vmem>>, vector<2x128xf32>
    %c0_7 = arith.constant 0 : index
    %c0_8 = arith.constant 0 : index
    %10 = vector.load %arg5[%c0_7, %c0_8] : memref<2x128xf32, #tpu.memory_space<vmem>>, vector<2x128xf32>
    %11 = arith.subf %8, %10 : vector<2x128xf32>
    %cst_9 = arith.constant 5.000000e-01 : f32
    %12 = vector.broadcast %cst_9 : f32 to vector<2x128xf32>
    %13 = arith.mulf %11, %12 : vector<2x128xf32>
    %14 = arith.addf %9, %13 : vector<2x128xf32>
    %cst_10 = arith.constant 1.000000e+00 : f32
    %15 = vector.broadcast %cst_10 : f32 to vector<2x128xf32>
    %16 = arith.cmpf oge, %14, %15 : vector<2x128xf32>
    %17 = arith.extui %16 : vector<2x128xi1> to vector<2x128xi32>
    %18 = arith.sitofp %17 : vector<2x128xi32> to vector<2x128xf32>
    %cst_11 = arith.constant 1.000000e+00 : f32
    %19 = vector.broadcast %cst_11 : f32 to vector<2x128xf32>
    %20 = arith.subf %19, %18 : vector<2x128xf32>
    %21 = arith.mulf %14, %20 : vector<2x128xf32>
    %c0_12 = arith.constant 0 : index
    %c0_13 = arith.constant 0 : index
    %22 = vector.load %arg5[%c0_12, %c0_13] : memref<2x128xf32, #tpu.memory_space<vmem>>, vector<2x128xf32>
    tpu.vector_store %arg5[%c0_12, %c0_13], %21 {strides = array<i32>} : memref<2x128xf32, #tpu.memory_space<vmem>>, vector<2x128xf32>,
    %23 = arith.truncf %18 : vector<2x128xf32> to vector<2x128xbf16>
    %c0_14 = arith.constant 0 : index
    %c0_15 = arith.constant 0 : index
    %24 = vector.load %arg2[%c0_14, %c0_15] : memref<128x128xbf16, #tpu.memory_space<vmem>>, vector<128x128xbf16>
    %cst_16 = arith.constant dense<0.000000e+00> : vector<2x128xf32>
    %25 = tpu.matmul %23, %24, %cst_16 {dimension_numbers = #tpu.dot_dimension_numbers<[1], [0], [0], [1], [0, 0, 1, 1], [], []>} : vector<2x128xbf16>, vector<128x128xbf16>, vector<2x128xf32> -> vector<2x128xf32>
    %c0_17 = arith.constant 0 : index
    %c0_18 = arith.constant 0 : index
    %26 = vector.load %arg3[%c0_17, %c0_18] : memref<1x128xf32, #tpu.memory_space<vmem>>, vector<1x128xf32>
    %27 = vector.broadcast %26 : vector<1x128xf32> to vector<2x128xf32>
    %28 = arith.addf %25, %27 : vector<2x128xf32>
    %c0_19 = arith.constant 0 : index
    %c0_20 = arith.constant 0 : index
    %c0_21 = arith.constant 0 : index
    %29 = vector.load %arg4[%c0_19, %c0_20, %c0_21] : memref<1x2x128xf32, #tpu.memory_space<vmem>>, vector<1x2x128xf32>
    %30 = vector.shape_cast %29 : vector<1x2x128xf32> to vector<2x128xf32>
    %31 = vector.shape_cast %28 : vector<2x128xf32> to vector<1x2x128xf32>
    tpu.vector_store %arg4[%c0_19, %c0_20, %c0_21], %31 {strides = array<i32>} : memref<1x2x128xf32, #tpu.memory_space<vmem>>, vector<1x2x128xf32>,
    return
  }
  func.func @transform_0(%arg0: i32) -> (i32, i32, i32, i32) {
    %c0_i32 = arith.constant 0 : i32
    %c0_i32_0 = arith.constant 0 : i32
    %c0_i32_1 = arith.constant 0 : i32
    %c0_i32_2 = arith.constant 0 : i32
    return %arg0, %c0_i32, %c0_i32_0, %c0_i32_1 : i32, i32, i32, i32
  }
  func.func @transform_1(%arg0: i32) -> (i32, i32) {
    %c0_i32 = arith.constant 0 : i32
    %c0_i32_0 = arith.constant 0 : i32
    %c0_i32_1 = arith.constant 0 : i32
    return %c0_i32, %c0_i32_0 : i32, i32
  }
  func.func @transform_2(%arg0: i32) -> (i32, i32) {
    %c0_i32 = arith.constant 0 : i32
    %c0_i32_0 = arith.constant 0 : i32
    %c0_i32_1 = arith.constant 0 : i32
    return %c0_i32, %c0_i32_0 : i32, i32
  }
  func.func @transform_3(%arg0: i32) -> (i32, i32, i32) {
    %c0_i32 = arith.constant 0 : i32
    %c0_i32_0 = arith.constant 0 : i32
    %c0_i32_1 = arith.constant 0 : i32
    return %arg0, %c0_i32, %c0_i32_0 : i32, i32, i32
  }
}

</mosaic_0001>

<llo_original>
// kernel: spike_driven_transformer_forward.6
$region0: #{spike_driven_transformer_forward.6}
  #allocation0 [shape = 'u32[]', space=smem, size = 0x4, offset = 0x4, fixed_abs, tag = 'smem constant byte address 0x4 - core index']
  #allocation1 [shape = 'u32[144,128]{1,0:T(1,128)}', space=vmem, size = 0x12000, scoped, tag = 'internal scratch']
  #allocation2 [shape = 'f32[64,128]{1,0:T(8,128)}', space=vmem, size = 0x8000, scoped, tag = 'scratch operand']
  %s0 = inlined_call_operand.vmem [shape: bf16[64,32], index: 0, kind: input, shape index: {}]
  %s1 = inlined_call_operand.vmem [shape: bf16[32,128], index: 1, kind: input, shape index: {}]
  %s2 = inlined_call_operand.vmem [shape: f32[1,128], index: 2, kind: input, shape index: {}]
  %s3 = inlined_call_operand.vmem [shape: bf16[64,128], index: 3, kind: output, shape index: {}]
  %s4 = sld [smem:[#allocation0]]
  $region30: #{spike_driven_transformer_forward.6} parent=0
    _
  %s6 = ssub.s32 1, %s4
  %s7 = scalar_select 0, %s6, %s4
  // Predicated region
  $region2: #{spike_driven_transformer_forward.6} parent=0 // pred_check
    _
  $region3: #{spike_driven_transformer_forward.6} parent=0 // pred_check_branch
    %9 = sbr.rel (0) target = $region5
  $region4: #{spike_driven_transformer_forward.6} parent=0 // pred_region
    _
  $region5: #{spike_driven_transformer_forward.6} parent=0 // pred_fallthru
    _
  // Predicated region
  $region6: #{spike_driven_transformer_forward.6} parent=0 // pred_check
    _
  $region7: #{spike_driven_transformer_forward.6} parent=0 // pred_check_branch
    %11 = sbr.rel (0) target = $region9
  $region8: #{spike_driven_transformer_forward.6} parent=0 // pred_region
    _
  $region9: #{spike_driven_transformer_forward.6} parent=0 // pred_fallthru
    _
  // Predicated region
  $region10: #{spike_driven_transformer_forward.6} parent=0 // pred_check
    _
  $region11: #{spike_driven_transformer_forward.6} parent=0 // pred_check_branch
    %13 = sbr.rel (0) target = $region13
  $region12: #{spike_driven_transformer_forward.6} parent=0 // pred_region
    _
  $region13: #{spike_driven_transformer_forward.6} parent=0 // pred_fallthru
    _
  %p15 = scmp.eq.s32.totalorder 0, 0
  // Predicated region
  $region14: #{spike_driven_transformer_forward.6} parent=0 // pred_check
    %p16 = pneg %p15
  $region15: #{spike_driven_transformer_forward.6} parent=0 // pred_check_branch
    %18 = sbr.rel (%p16) target = $region17
  $region16: #{spike_driven_transformer_forward.6} parent=0 // pred_region
    %19 = vst [vmem:[#allocation2] sm:$0xff] 0.0
    %20 = vst [vmem:[#allocation2 + $0x8] sm:$0xff] 0.0
    %21 = vst [vmem:[#allocation2 + $0x10] sm:$0xff] 0.0
    %22 = vst [vmem:[#allocation2 + $0x18] sm:$0xff] 0.0
    %23 = vst [vmem:[#allocation2 + $0x20] sm:$0xff] 0.0
    %24 = vst [vmem:[#allocation2 + $0x28] sm:$0xff] 0.0
    %25 = vst [vmem:[#allocation2 + $0x30] sm:$0xff] 0.0
    %26 = vst [vmem:[#allocation2 + $0x38] sm:$0xff] 0.0
  $region17: #{spike_driven_transformer_forward.6} parent=0 // pred_fallthru
    _
  %v27 = vld [vmem:[#allocation2] sm:$0xff]
  %v28 = vld [vmem:[#allocation2 + $0x8] sm:$0xff]
  %v29 = vld [vmem:[#allocation2 + $0x10] sm:$0xff]
  %v30 = vld [vmem:[#allocation2 + $0x18] sm:$0xff]
  %v31 = vld [vmem:[#allocation2 + $0x20] sm:$0xff]
  %v32 = vld [vmem:[#allocation2 + $0x28] sm:$0xff]
  %v33 = vld [vmem:[#allocation2 + $0x30] sm:$0xff]
  %v34 = vld [vmem:[#allocation2 + $0x38] sm:$0xff]
  %v35 = vld [vmem:[%s0] sm:$0xf]
  %v36 = vld [vmem:[%s0 + $0x4] sm:$0xf]
  %v37 = vld [vmem:[%s0 + $0x8] sm:$0xf]
  %v38 = vld [vmem:[%s0 + $0xc] sm:$0xf]
  %v39 = vld [vmem:[%s0 + $0x10] sm:$0xf]
  %v40 = vld [vmem:[%s0 + $0x14] sm:$0xf]
  %v41 = vld [vmem:[%s0 + $0x18] sm:$0xf]
  %v42 = vld [vmem:[%s0 + $0x1c] sm:$0xf]
  %v43 = vld [vmem:[%s1] sm:$0xf]
  %v44 = vld [vmem:[%s1 + $0x4] sm:$0xf]
  %v45 = vld [vmem:[%s1 + $0x8] sm:$0xf]
  %v46 = vld [vmem:[%s1 + $0xc] sm:$0xf]
  %v55 = vunpack.c.l.b16 %v35
  %v56 = vunpack.c.l.b16 %v36
  %v57 = vunpack.c.l.b16 %v37
  %v58 = vunpack.c.l.b16 %v38
  %v59 = vunpack.c.l.b16 %v39
  %v60 = vunpack.c.l.b16 %v40
  %v61 = vunpack.c.l.b16 %v41
  %v62 = vunpack.c.l.b16 %v42
  %v63 = vpack.c.b16 %v56, %v55
  %v64 = vpack.c.b16 %v58, %v57
  %v65 = vpack.c.b16 %v60, %v59
  %v66 = vpack.c.b16 %v62, %v61
  %v71 = vunpack.c.l.b16 %v43
  %v72 = vunpack.c.l.b16 %v44
  %v73 = vunpack.c.l.b16 %v45
  %v74 = vunpack.c.l.b16 %v46
  %v75 = vpack.c.b16 %v72, %v71
  %v76 = vpack.c.b16 %v74, %v73
  %vm79 = vcmask 261120
  %v81 = vsel %vm79, %v63, 0
  %v84 = vsel %vm79, %v64, 0
  %v87 = vsel %vm79, %v65, 0
  %v90 = vsel %vm79, %v66, 0
  %92 = vmatprep.subr.bf16.mxu0 0
  %93 = vmatpush1.bf16.msra.mxu0 %v75
  %94 = vmatprep.subr.bf16.mxu0 0
  %95 = vmatpush1.bf16.msra.mxu0 %v76
  %96 = vmatprep.subr.bf16.mxu0 0
  %97 = vmatpush1.bf16.msra.mxu0 0
  %98 = vmatprep.subr.bf16.mxu0 0
  %99 = vmatpush1.bf16.msra.mxu0 0
  %100 = vmatprep.subr.bf16.mxu0 0
  %101 = vmatpush1.bf16.msra.mxu0 0
  %102 = vmatprep.subr.bf16.mxu0 0
  %103 = vmatpush1.bf16.msra.mxu0 0
  %104 = vmatprep.subr.bf16.mxu0 0
  %105 = vmatpush1.bf16.msra.mxu0 0
  %106 = vmatprep.subr.bf16.mxu0 0
  %107 = vmatpush1.bf16.msra.mxu0 0
  %108 = vmatprep.subr.bf16.mxu0 0
  %109 = vmatpush1.bf16.msra.mxu0 0
  %110 = vmatprep.subr.bf16.mxu0 0
  %111 = vmatpush1.bf16.msra.mxu0 0
  %112 = vmatprep.subr.bf16.mxu0 0
  %113 = vmatpush1.bf16.msra.mxu0 0
  %114 = vmatprep.subr.bf16.mxu0 0
  %115 = vmatpush1.bf16.msra.mxu0 0
  %116 = vmatprep.subr.bf16.mxu0 0
  %117 = vmatpush1.bf16.msra.mxu0 0
  %118 = vmatprep.subr.bf16.mxu0 0
  %119 = vmatpush1.bf16.msra.mxu0 0
  %120 = vmatprep.subr.bf16.mxu0 0
  %121 = vmatpush1.bf16.msra.mxu0 0
  %122 = vmatprep.subr.bf16.mxu0 0
  %123 = vmatpush1.bf16.msra.mxu0 0
  %124 = vmatprep.mubr.bf16.mxu0 0
  %125 = vmatmul.mubr.bf16.gmra.mrb[0].mxu0 %v81
  %v126 = vpop.f32.mrb[0].mxu0
  %v127 = vadd.f32 0.0, %v126
  %v128 = vpop.f32.mrb[0].mxu0
  %v129 = vpop.f32.mrb[0].mxu0
  %v130 = vadd.f32 0.0, %v129
  %v131 = vpop.f32.mrb[0].mxu0
  %132 = vmatprep.mubr.bf16.mxu0 0
  %133 = vmatmul.mubr.bf16.gmra.mrb[0].mxu0 %v84
  %v134 = vpop.f32.mrb[0].mxu0
  %v135 = vadd.f32 0.0, %v134
  %v136 = vpop.f32.mrb[0].mxu0
  %v137 = vpop.f32.mrb[0].mxu0
  %v138 = vadd.f32 0.0, %v137
  %v139 = vpop.f32.mrb[0].mxu0
  %140 = vmatprep.mubr.bf16.mxu0 0
  %141 = vmatmul.mubr.bf16.gmra.mrb[0].mxu0 %v87
  %v142 = vpop.f32.mrb[0].mxu0
  %v143 = vadd.f32 0.0, %v142
  %v144 = vpop.f32.mrb[0].mxu0
  %v145 = vpop.f32.mrb[0].mxu0
  %v146 = vadd.f32 0.0, %v145
  %v147 = vpop.f32.mrb[0].mxu0
  %148 = vmatprep.mubr.bf16.mxu0 0
  %149 = vmatmul.mubr.bf16.gmra.mrb[0].mxu0 %v90
  %v150 = vpop.f32.mrb[0].mxu0
  %v151 = vadd.f32 0.0, %v150
  %v152 = vpop.f32.mrb[0].mxu0
  %v153 = vpop.f32.mrb[0].mxu0
  %v154 = vadd.f32 0.0, %v153
  %v155 = vpop.f32.mrb[0].mxu0
  %156 = vdwg.mxu0
  %v157 = vadd.f32 %v27, %v127
  %v158 = vadd.f32 %v28, %v130
  %v159 = vadd.f32 %v29, %v135
  %v160 = vadd.f32 %v30, %v138
  %v161 = vadd.f32 %v31, %v143
  %v162 = vadd.f32 %v32, %v146
  %v163 = vadd.f32 %v33, %v151
  %v164 = vadd.f32 %v34, %v154
  %165 = vst [vmem:[#allocation2] sm:$0xff] %v157
  %166 = vst [vmem:[#allocation2 + $0x8] sm:$0xff] %v158
  %167 = vst [vmem:[#allocation2 + $0x10] sm:$0xff] %v159
  %168 = vst [vmem:[#allocation2 + $0x18] sm:$0xff] %v160
  %169 = vst [vmem:[#allocation2 + $0x20] sm:$0xff] %v161
  %170 = vst [vmem:[#allocation2 + $0x28] sm:$0xff] %v162
  %171 = vst [vmem:[#allocation2 + $0x30] sm:$0xff] %v163
  %172 = vst [vmem:[#allocation2 + $0x38] sm:$0xff] %v164
  // Predicated region
  $region18: #{spike_driven_transformer_forward.6} parent=0 // pred_check
    %p173 = pneg %p15
  $region19: #{spike_driven_transformer_forward.6} parent=0 // pred_check_branch
    %175 = sbr.rel (%p173) target = $region21
  $region20: #{spike_driven_transformer_forward.6} parent=0 // pred_region
    %v176 = vld [vmem:[#allocation2] sm:$0xff]
    %v177 = vld [vmem:[#allocation2 + $0x8] sm:$0xff]
    %v178 = vld [vmem:[#allocation2 + $0x10] sm:$0xff]
    %v179 = vld [vmem:[#allocation2 + $0x18] sm:$0xff]
    %v180 = vld [vmem:[#allocation2 + $0x20] sm:$0xff]
    %v181 = vld [vmem:[#allocation2 + $0x28] sm:$0xff]
    %v182 = vld [vmem:[#allocation2 + $0x30] sm:$0xff]
    %v183 = vld [vmem:[#allocation2 + $0x38] sm:$0xff]
    %v184 = vld [vmem:[%s2] sm:$0x1]
    %v186 = vlaneseq
    %v187 = vshrl.u32 %v186, 7
    %v188 = vsub.s32 0, %v187
    %v189 = vrot.slane %v184, %v188
    %v191 = vadd.f32 %v176, %v189
    %v192 = vadd.f32 %v177, %v189
    %v193 = vadd.f32 %v178, %v189
    %v194 = vadd.f32 %v179, %v189
    %v195 = vadd.f32 %v180, %v189
    %v196 = vadd.f32 %v181, %v189
    %v197 = vadd.f32 %v182, %v189
    %v198 = vadd.f32 %v183, %v189
    %v199 = vpack.c.bf16 %v192, %v191
    %v200 = vpack.c.bf16 %v194, %v193
    %v201 = vpack.c.bf16 %v196, %v195
    %v202 = vpack.c.bf16 %v198, %v197
    %v207 = vunpack.c.l.b16 %v199
    %v208 = vunpack.c.h.b16 %v199
    %v209 = vunpack.c.l.b16 %v200
    %v210 = vunpack.c.h.b16 %v200
    %v211 = vunpack.c.l.b16 %v201
    %v212 = vunpack.c.h.b16 %v201
    %v213 = vunpack.c.l.b16 %v202
    %v214 = vunpack.c.h.b16 %v202
    %v215 = vpack.c.b16 %v207, %v207
    %v216 = vpack.c.b16 %v208, %v208
    %v217 = vpack.c.b16 %v209, %v209
    %v218 = vpack.c.b16 %v210, %v210
    %v219 = vpack.c.b16 %v211, %v211
    %v220 = vpack.c.b16 %v212, %v212
    %v221 = vpack.c.b16 %v213, %v213
    %v222 = vpack.c.b16 %v214, %v214
    %231 = vst [vmem:[%s3] sm:$0xf] %v215
    %232 = vst [vmem:[%s3 + $0x4] sm:$0xf] %v216
    %233 = vst [vmem:[%s3 + $0x8] sm:$0xf] %v217
    %234 = vst [vmem:[%s3 + $0xc] sm:$0xf] %v218
    %235 = vst [vmem:[%s3 + $0x10] sm:$0xf] %v219
    %236 = vst [vmem:[%s3 + $0x14] sm:$0xf] %v220
    %237 = vst [vmem:[%s3 + $0x18] sm:$0xf] %v221
    %238 = vst [vmem:[%s3 + $0x1c] sm:$0xf] %v222
  $region21: #{spike_driven_transformer_forward.6} parent=0 // pred_fallthru
    _
  // Predicated region
  $region22: #{spike_driven_transformer_forward.6} parent=0 // pred_check
    _
  $region23: #{spike_driven_transformer_forward.6} parent=0 // pred_check_branch
    %240 = sbr.rel (0) target = $region25
  $region24: #{spike_driven_transformer_forward.6} parent=0 // pred_region
    _
  $region25: #{spike_driven_transformer_forward.6} parent=0 // pred_fallthru
    _
  // Predicated region
  $region26: #{spike_driven_transformer_forward.6} parent=0 // pred_check
    _
  $region27: #{spike_driven_transformer_forward.6} parent=0 // pred_check_branch
    %242 = sbr.rel (0) target = $region29
  $region28: #{spike_driven_transformer_forward.6} parent=0 // pred_region
    _
  $region29: #{spike_driven_transformer_forward.6} parent=0 // pred_fallthru
    _

// kernel: spike_driven_transformer_forward.7
$region0: #{spike_driven_transformer_forward.7}
  #allocation0 [shape = 'u32[]', space=smem, size = 0x4, offset = 0x4, fixed_abs, tag = 'smem constant byte address 0x4 - core index']
  #allocation1 [shape = 'u32[144,128]{1,0:T(1,128)}', space=vmem, size = 0x12000, scoped, tag = 'internal scratch']
  #allocation2 [shape = 'f32[1,8,128]{2,1,0:T(8,128)}', space=vmem, size = 0x1000, scoped, tag = 'scratch operand']
  #allocation3 [shape = 'f32[1,8,384]{2,1,0:T(8,128)}', space=vmem, size = 0x3000, scoped, tag = 'scratch operand']
  #allocation4 [shape = 'f32[1,128]{1,0:T(1,128)}', space=vmem, size = 0x200, scoped, tag = 'scratch operand']
  %s0 = inlined_call_operand.vmem [shape: bf16[4,2,8,128], index: 0, kind: input, shape index: {}]
  %s1 = inlined_call_operand.vmem [shape: bf16[128,384], index: 1, kind: input, shape index: {}]
  %s2 = inlined_call_operand.vmem [shape: f32[1,384], index: 2, kind: input, shape index: {}]
  %s3 = inlined_call_operand.hbm [shape: bf16[128,128], index: 3, kind: input, shape index: {}]
  %s4 = inlined_call_operand.vmem [shape: f32[1,128], index: 4, kind: input, shape index: {}]
  %s5 = inlined_call_operand.vmem [shape: bf16[4,2,8,128], index: 5, kind: output, shape index: {}]
  %s6 = sld [smem:[#allocation0]]
  $region61: #{spike_driven_transformer_forward.7} parent=0
    _
  %s8 = ssub.s32 1, %s6
  %s9 = scalar_select 0, %s8, %s6
  $region1: #{spike_driven_transformer_forward.7} parent=0
    #allocation5 [shape = 'u8[32768]{0}', space=vmem, size = 0x8000, scoped, tag = 'input window, operand 3, single buffered']
    #allocation6 [shape = 's32[2]{0}', space=sflag, size = 0x8, scoped, tag = 'scoped memory for spike_driven_transformer_forward.7']
    %10 = vsyncpa [#allocation6], 0
    loop: start=0, step=1, limit=10
    $region2: #{spike_driven_transformer_forward.7} parent=1 // loop_pre_header
      _
    $region3: #{spike_driven_transformer_forward.7} parent=1 // loop_header
      %s12 = sphi 0, %s16
      %p13 = scmp.ge.s32.totalorder %s12, 10
      %s19 = sphi 0, %s31
      %s20 = sphi 0, %s27
      %s21 = sphi 0, %s19
      %s22 = sphi 0, %s20
      %s23 = sphi 0, %s21
      %s24 = sphi 0, %s22
      %s36 = sphi 0, %s38
      %s39 = sphi 0, %s36
      %s40 = sphi 0, %s39
      %s56 = sphi 0, %s40
      %s60 = sphi 0, %s60
      %s62 = sphi 0, %s60
      %s63 = sphi 0, %s62
      %s77 = sphi 0, %s63
      %s81 = sphi 0, %s81
      %s83 = sphi 0, %s81
      %s84 = sphi 0, %s83
      %s98 = sphi 0, %s84
      %s102 = sphi 0, %s102
      %s104 = sphi 0, %s102
      %s105 = sphi 0, %s104
      %s119 = sphi 0, %s105
      %s123 = sphi 0, %s123
      %s125 = sphi 0, %s123
      %s126 = sphi 0, %s125
      %s140 = sphi 0, %s126
      %s148 = sphi 0, %s150
      %s151 = sphi 0, %s148
      %s152 = sphi 0, %s151
      %s168 = sphi 0, %s152
    $region4: #{spike_driven_transformer_forward.7} parent=1 // loop_header_branch
      %15 = sbr.rel (%p13) target = $region8
    $region5: #{spike_driven_transformer_forward.7} parent=1 // loop_body
      %s17 = ssub.s32 %s12, 1
      %s18 = ssub.s32 %s12, 2
      %s25 = sadd.s32 1, %s20
      %p26 = scmp.ge.s32.totalorder %s25, 4
      %s27 = scalar_select %p26, 0, %s25
      %s28 = sadd.s32 1, %s19
      %s29 = scalar_select %p26, %s28, %s19
      %p30 = scmp.ge.s32.totalorder %s29, 2
      %s31 = scalar_select %p30, 0, %s29
      %s32 = ssub.s32 %s20, %s27
      %s33 = ssub.s32 %s19, %s31
      %s34 = sor.u32 %s32, %s33
      %p35 = scmp.eq.s32.totalorder %s34, 0
      %s37 = sadd.s32 %s36, 1
      %s38 = scalar_select %p35, %s36, %s37
      %p41 = pneg %p35
      %p42 = scmp.eq.s32.totalorder %s12, 7
      %p43 = por %p41, %p42
      %p44 = scmp.ne.s32.totalorder %s36, %s39
      %p45 = scmp.eq.s32.totalorder %s12, 0
      %p46 = por %p44, %p45
      %p47 = scmp.ne.s32.totalorder %s36, %s39
      %p48 = scmp.eq.s32.totalorder %s17, 7
      %p49 = por %p47, %p48
      %p50 = scmp.ne.s32.totalorder %s39, %s40
      %p51 = scmp.eq.s32.totalorder %s17, 0
      %p52 = por %p50, %p51
      %p53 = scmp.ne.s32.totalorder %s39, %s40
      %p54 = scmp.eq.s32.totalorder %s18, 7
      %p55 = por %p53, %p54
      %p57 = scmp.ne.s32.totalorder %s40, %s56
      %p58 = scmp.eq.s32.totalorder %s18, 0
      %p59 = por %p57, %p58
      %s61 = sadd.s32 %s60, 1
      %p64 = scmp.eq.s32.totalorder %s12, 7
      %p65 = scmp.ne.s32.totalorder %s60, %s62
      %p66 = scmp.eq.s32.totalorder %s12, 0
      %p67 = por %p65, %p66
      %p68 = scmp.ne.s32.totalorder %s60, %s62
      %p69 = scmp.eq.s32.totalorder %s17, 7
      %p70 = por %p68, %p69
      %p71 = scmp.ne.s32.totalorder %s62, %s63
      %p72 = scmp.eq.s32.totalorder %s17, 0
      %p73 = por %p71, %p72
      %p74 = scmp.ne.s32.totalorder %s62, %s63
      %p75 = scmp.eq.s32.totalorder %s18, 7
      %p76 = por %p74, %p75
      %p78 = scmp.ne.s32.totalorder %s63, %s77
      %p79 = scmp.eq.s32.totalorder %s18, 0
      %p80 = por %p78, %p79
      %s82 = sadd.s32 %s81, 1
      %p85 = scmp.eq.s32.totalorder %s12, 7
      %p86 = scmp.ne.s32.totalorder %s81, %s83
      %p87 = scmp.eq.s32.totalorder %s12, 0
      %p88 = por %p86, %p87
      %p89 = scmp.ne.s32.totalorder %s81, %s83
      %p90 = scmp.eq.s32.totalorder %s17, 7
      %p91 = por %p89, %p90
      %p92 = scmp.ne.s32.totalorder %s83, %s84
      %p93 = scmp.eq.s32.totalorder %s17, 0
      %p94 = por %p92, %p93
      %p95 = scmp.ne.s32.totalorder %s83, %s84
      %p96 = scmp.eq.s32.totalorder %s18, 7
      %p97 = por %p95, %p96
      %p99 = scmp.ne.s32.totalorder %s84, %s98
      %p100 = scmp.eq.s32.totalorder %s18, 0
      %p101 = por %p99, %p100
      %s103 = sadd.s32 %s102, 1
      %p106 = scmp.eq.s32.totalorder %s12, 7
      %p107 = scmp.ne.s32.totalorder %s102, %s104
      %p108 = scmp.eq.s32.totalorder %s12, 0
      %p109 = por %p107, %p108
      %p110 = scmp.ne.s32.totalorder %s102, %s104
      %p111 = scmp.eq.s32.totalorder %s17, 7
      %p112 = por %p110, %p111
      %p113 = scmp.ne.s32.totalorder %s104, %s105
      %p114 = scmp.eq.s32.totalorder %s17, 0
      %p115 = por %p113, %p114
      %p116 = scmp.ne.s32.totalorder %s104, %s105
      %p117 = scmp.eq.s32.totalorder %s18, 7
      %p118 = por %p116, %p117
      %p120 = scmp.ne.s32.totalorder %s105, %s119
      %p121 = scmp.eq.s32.totalorder %s18, 0
      %p122 = por %p120, %p121
      %s124 = sadd.s32 %s123, 1
      %p127 = scmp.eq.s32.totalorder %s12, 7
      %p128 = scmp.ne.s32.totalorder %s123, %s125
      %p129 = scmp.eq.s32.totalorder %s12, 0
      %p130 = por %p128, %p129
      %p131 = scmp.ne.s32.totalorder %s123, %s125
      %p132 = scmp.eq.s32.totalorder %s17, 7
      %p133 = por %p131, %p132
      %p134 = scmp.ne.s32.totalorder %s125, %s126
      %p135 = scmp.eq.s32.totalorder %s17, 0
      %p136 = por %p134, %p135
      %p137 = scmp.ne.s32.totalorder %s125, %s126
      %p138 = scmp.eq.s32.totalorder %s18, 7
      %p139 = por %p137, %p138
      %p141 = scmp.ne.s32.totalorder %s126, %s140
      %p142 = scmp.eq.s32.totalorder %s18, 0
      %p143 = por %p141, %p142
      %s144 = ssub.s32 %s20, %s27
      %s145 = ssub.s32 %s19, %s31
      %s146 = sor.u32 %s144, %s145
      %p147 = scmp.eq.s32.totalorder %s146, 0
      %s149 = sadd.s32 %s148, 1
      %s150 = scalar_select %p147, %s148, %s149
      %p153 = pneg %p147
      %p154 = scmp.eq.s32.totalorder %s12, 7
      %p155 = por %p153, %p154
      %p156 = scmp.ne.s32.totalorder %s148, %s151
      %p157 = scmp.eq.s32.totalorder %s12, 0
      %p158 = por %p156, %p157
      %p159 = scmp.ne.s32.totalorder %s148, %s151
      %p160 = scmp.eq.s32.totalorder %s17, 7
      %p161 = por %p159, %p160
      %p162 = scmp.ne.s32.totalorder %s151, %s152
      %p163 = scmp.eq.s32.totalorder %s17, 0
      %p164 = por %p162, %p163
      %p165 = scmp.ne.s32.totalorder %s151, %s152
      %p166 = scmp.eq.s32.totalorder %s18, 7
      %p167 = por %p165, %p166
      %p169 = scmp.ne.s32.totalorder %s152, %s168
      %p170 = scmp.eq.s32.totalorder %s18, 0
      %p171 = por %p169, %p170
      %p172 = scmp.le.s32.totalorder 1, %s12
      %p173 = scmp.lt.s32.totalorder %s12, 9
      %p174 = pnand %p172, %p173
      %p175 = pneg %p174
      // Predicated region
      $region9: #{spike_driven_transformer_forward.7} parent=5 // pred_check
        _
      $region10: #{spike_driven_transformer_forward.7} parent=5 // pred_check_branch
        %177 = sbr.rel (%p174) target = $region12
      $region11: #{spike_driven_transformer_forward.7} parent=5 // pred_region
        %s178 = ssub.s32 %s12, 1
        // Predicated region
        $region13: #{spike_driven_transformer_forward.7} parent=11 // pred_check
          %p179 = pneg %p73
        $region14: #{spike_driven_transformer_forward.7} parent=11 // pred_check_branch
          %181 = sbr.rel (%p179) target = $region16
        $region15: #{spike_driven_transformer_forward.7} parent=11 // pred_region
          _
        $region16: #{spike_driven_transformer_forward.7} parent=11 // pred_fallthru
          _
        // Predicated region
        $region17: #{spike_driven_transformer_forward.7} parent=11 // pred_check
          %p182 = pneg %p94
        $region18: #{spike_driven_transformer_forward.7} parent=11 // pred_check_branch
          %184 = sbr.rel (%p182) target = $region20
        $region19: #{spike_driven_transformer_forward.7} parent=11 // pred_region
          _
        $region20: #{spike_driven_transformer_forward.7} parent=11 // pred_fallthru
          _
        // Predicated region
        $region21: #{spike_driven_transformer_forward.7} parent=11 // pred_check
          %p185 = pneg %p115
        $region22: #{spike_driven_transformer_forward.7} parent=11 // pred_check_branch
          %187 = sbr.rel (%p185) target = $region24
        $region23: #{spike_driven_transformer_forward.7} parent=11 // pred_region
          %s189 = ssub.s32 1024, 1024
          %190 = vsyncadd [#allocation6], %s189
          %s191 = sshll.u32 [#allocation5], 4
          %s192 = int_to_ptr.vmem [resolvable:$true] %s191
          %197 = dma.hbm_to_vmem [thread:$0]  %s3, 1024, %s192, [#allocation6], 64, 64, 4
        $region24: #{spike_driven_transformer_forward.7} parent=11 // pred_fallthru
          _
        // Predicated region
        $region25: #{spike_driven_transformer_forward.7} parent=11 // pred_check
          %p198 = pneg %p136
        $region26: #{spike_driven_transformer_forward.7} parent=11 // pred_check_branch
          %200 = sbr.rel (%p198) target = $region28
        $region27: #{spike_driven_transformer_forward.7} parent=11 // pred_region
          _
        $region28: #{spike_driven_transformer_forward.7} parent=11 // pred_fallthru
          _
      $region12: #{spike_driven_transformer_forward.7} parent=5 // pred_fallthru
        _
      %p201 = scmp.lt.s32.totalorder %s12, 8
      // Predicated region
      $region29: #{spike_driven_transformer_forward.7} parent=5 // pred_check
        %p202 = pneg %p201
      $region30: #{spike_driven_transformer_forward.7} parent=5 // pred_check_branch
        %204 = sbr.rel (%p202) target = $region32
      $region31: #{spike_driven_transformer_forward.7} parent=5 // pred_region
        // Predicated region
        $region33: #{spike_driven_transformer_forward.7} parent=31 // pred_check
          %p205 = pneg %p46
        $region34: #{spike_driven_transformer_forward.7} parent=31 // pred_check_branch
          %207 = sbr.rel (%p205) target = $region36
        $region35: #{spike_driven_transformer_forward.7} parent=31 // pred_region
          %p208 = scmp.lt.s32.totalorder %s20, 3
          %s209 = scalar_select %p208, %s20, 3
          %p210 = scmp.lt.s32.totalorder %s19, 1
          %s211 = scalar_select %p210, %s19, 1
          %s212 = smul.addr %s209, 2
          %s213 = sadd.s32 %s211, %s212
          %s214 = smul.addr %s213, 4
          %s215 = scalar_lea.vmem %s0, %s214
        $region36: #{spike_driven_transformer_forward.7} parent=31 // pred_fallthru
          _
      $region32: #{spike_driven_transformer_forward.7} parent=5 // pred_fallthru
        _
      %p216 = scmp.le.s32.totalorder 1, %s12
      %p217 = scmp.lt.s32.totalorder %s12, 9
      %p218 = pnand %p216, %p217
      %p219 = pneg %p218
      // Predicated region
      $region37: #{spike_driven_transformer_forward.7} parent=5 // pred_check
        _
      $region38: #{spike_driven_transformer_forward.7} parent=5 // pred_check_branch
        %221 = sbr.rel (%p218) target = $region40
      $region39: #{spike_driven_transformer_forward.7} parent=5 // pred_region
        %s222 = ssub.s32 %s12, 1
        // Predicated region
        $region41: #{spike_driven_transformer_forward.7} parent=39 // pred_check
          %p223 = pneg %p115
        $region42: #{spike_driven_transformer_forward.7} parent=39 // pred_check_branch
          %225 = sbr.rel (%p223) target = $region44
        $region43: #{spike_driven_transformer_forward.7} parent=39 // pred_region
          %226 = dma.done [#allocation6], 1024
        $region44: #{spike_driven_transformer_forward.7} parent=39 // pred_fallthru
          _
        %p227 = scmp.lt.s32.totalorder %s22, 3
        %s228 = scalar_select %p227, %s22, 3
        %p229 = scmp.lt.s32.totalorder %s21, 1
        %s230 = scalar_select %p229, %s21, 1
        %s231 = smul.addr %s228, 2
        %s232 = sadd.s32 %s230, %s231
        %s233 = smul.addr %s232, 4
        %s234 = scalar_lea.vmem %s0, %s233
        %p235 = pneg %p52
        %p236 = pneg %p49
        %p237 = pneg %p73
        %p238 = pneg %p70
        %p239 = pneg %p94
        %p240 = pneg %p91
        %p241 = pneg %p115
        %p242 = pneg %p112
        %p243 = pneg %p136
        %p244 = pneg %p133
        %p245 = pneg %p164
        %p246 = pneg %p161
        %p247 = scmp.lt.s32.totalorder %s22, 3
        %s248 = scalar_select %p247, %s22, 3
        %p249 = scmp.lt.s32.totalorder %s21, 1
        %s250 = scalar_select %p249, %s21, 1
        %s251 = smul.addr %s248, 2
        %s252 = sadd.s32 %s250, %s251
        %s253 = smul.addr %s252, 4
        %s254 = scalar_lea.vmem %s5, %s253
        %p255 = scmp.lt.s32.totalorder %s22, 3
        %s256 = scalar_select %p255, %s22, 3
        %p257 = scmp.lt.s32.totalorder %s21, 1
        %s258 = scalar_select %p257, %s21, 1
        %s259 = smul.addr %s256, 2
        %s260 = sadd.s32 %s258, %s259
        %s261 = smul.addr %s260, 4
        %s262 = scalar_lea.vmem %s0, %s261
        %p263 = scmp.lt.s32.totalorder %s22, 3
        %s264 = scalar_select %p263, %s22, 3
        %p265 = scmp.lt.s32.totalorder %s21, 1
        %s266 = scalar_select %p265, %s21, 1
        %s267 = smul.addr %s264, 2
        %s268 = sadd.s32 %s266, %s267
        %s269 = smul.addr %s268, 4
        %s270 = scalar_lea.vmem %s5, %s269
        %p272 = scmp.eq.s32.totalorder %s22, 0
        // Predicated region
        $region45: #{spike_driven_transformer_forward.7} parent=39 // pred_check
          %p273 = pneg %p272
        $region46: #{spike_driven_transformer_forward.7} parent=39 // pred_check_branch
          %275 = sbr.rel (%p273) target = $region48
        $region47: #{spike_driven_transformer_forward.7} parent=39 // pred_region
          %276 = vst [vmem:[#allocation2] sm:$0xff] 0.0
          %277 = vst [vmem:[#allocation3] sm:$0xff] 0.0
          %278 = vst [vmem:[#allocation3 + $0x8] sm:$0xff] 0.0
          %279 = vst [vmem:[#allocation3 + $0x10] sm:$0xff] 0.0
          %280 = vst [vmem:[#allocation4] sm:$0x1] 0.0
        $region48: #{spike_driven_transformer_forward.7} parent=39 // pred_fallthru
          _
        %v281 = vld [vmem:[%s262] sm:$0xf]
        %v282 = vunpack.c.l.bf16 %v281
        %v283 = vld [vmem:[#allocation2] sm:$0xff]
        %v284 = vsub.f32 %v282, %v283
        %v285 = vmul.f32 %v284, 0.5
        %v286 = vadd.f32 %v283, %v285
        %vm287 = vcmp.ge.f32.partialorder %v286, 1.0
        %v288 = vsel %vm287, 1, 0
        %v289 = vcvt.s32.f32 %v288
        %v290 = vsub.f32 1.0, %v289
        %v291 = vmul.f32 %v286, %v290
        %292 = vst [vmem:[#allocation2] sm:$0xff] %v291
        %v293 = vpack.c.bf16 %v289, %v289
        %v294 = vld [vmem:[%s1] sm:$0xff]
        %v295 = vld [vmem:[%s1 + $0x8] sm:$0xf]
        %v296 = vld [vmem:[%s1 + $0xc] sm:$0xff]
        %v297 = vld [vmem:[%s1 + $0x14] sm:$0xf]
        %v298 = vld [vmem:[%s1 + $0x18] sm:$0xff]
        %v299 = vld [vmem:[%s1 + $0x20] sm:$0xf]
        %v300 = vld [vmem:[%s1 + $0x24] sm:$0xff]
        %v301 = vld [vmem:[%s1 + $0x2c] sm:$0xf]
        %v302 = vld [vmem:[%s1 + $0x30] sm:$0xff]
        %v303 = vld [vmem:[%s1 + $0x38] sm:$0xf]
        %v304 = vld [vmem:[%s1 + $0x3c] sm:$0xff]
        %v305 = vld [vmem:[%s1 + $0x44] sm:$0xf]
        %v306 = vld [vmem:[%s1 + $0x48] sm:$0xff]
        %v307 = vld [vmem:[%s1 + $0x50] sm:$0xf]
        %v308 = vld [vmem:[%s1 + $0x54] sm:$0xff]
        %v309 = vld [vmem:[%s1 + $0x5c] sm:$0xf]
        %v310 = vld [vmem:[%s1 + $0x60] sm:$0xff]
        %v311 = vld [vmem:[%s1 + $0x68] sm:$0xf]
        %v312 = vld [vmem:[%s1 + $0x6c] sm:$0xff]
        %v313 = vld [vmem:[%s1 + $0x74] sm:$0xf]
        %v314 = vld [vmem:[%s1 + $0x78] sm:$0xff]
        %v315 = vld [vmem:[%s1 + $0x80] sm:$0xf]
        %v316 = vld [vmem:[%s1 + $0x84] sm:$0xff]
        %v317 = vld [vmem:[%s1 + $0x8c] sm:$0xf]
        %v318 = vld [vmem:[%s1 + $0x90] sm:$0xff]
        %v319 = vld [vmem:[%s1 + $0x98] sm:$0xf]
        %v320 = vld [vmem:[%s1 + $0x9c] sm:$0xff]
        %v321 = vld [vmem:[%s1 + $0xa4] sm:$0xf]
        %v322 = vld [vmem:[%s1 + $0xa8] sm:$0xff]
        %v323 = vld [vmem:[%s1 + $0xb0] sm:$0xf]
        %v324 = vld [vmem:[%s1 + $0xb4] sm:$0xff]
        %v325 = vld [vmem:[%s1 + $0xbc] sm:$0xf]
        %v358 = vunpack.c.l.b16 %v294
        %v359 = vunpack.c.h.b16 %v294
        %v360 = vunpack.c.l.b16 %v295
        %v361 = vunpack.c.l.b16 %v296
        %v362 = vunpack.c.h.b16 %v296
        %v363 = vunpack.c.l.b16 %v297
        %v364 = vunpack.c.l.b16 %v298
        %v365 = vunpack.c.h.b16 %v298
        %v366 = vunpack.c.l.b16 %v299
        %v367 = vunpack.c.l.b16 %v300
        %v368 = vunpack.c.h.b16 %v300
        %v369 = vunpack.c.l.b16 %v301
        %v370 = vunpack.c.l.b16 %v302
        %v371 = vunpack.c.h.b16 %v302
        %v372 = vunpack.c.l.b16 %v303
        %v373 = vunpack.c.l.b16 %v304
        %v374 = vunpack.c.h.b16 %v304
        %v375 = vunpack.c.l.b16 %v305
        %v376 = vunpack.c.l.b16 %v306
        %v377 = vunpack.c.h.b16 %v306
        %v378 = vunpack.c.l.b16 %v307
        %v379 = vunpack.c.l.b16 %v308
        %v380 = vunpack.c.h.b16 %v308
        %v381 = vunpack.c.l.b16 %v309
        %v382 = vunpack.c.l.b16 %v310
        %v383 = vunpack.c.h.b16 %v310
        %v384 = vunpack.c.l.b16 %v311
        %v385 = vunpack.c.l.b16 %v312
        %v386 = vunpack.c.h.b16 %v312
        %v387 = vunpack.c.l.b16 %v313
        %v388 = vunpack.c.l.b16 %v314
        %v389 = vunpack.c.h.b16 %v314
        %v390 = vunpack.c.l.b16 %v315
        %v391 = vunpack.c.l.b16 %v316
        %v392 = vunpack.c.h.b16 %v316
        %v393 = vunpack.c.l.b16 %v317
        %v394 = vunpack.c.l.b16 %v318
        %v395 = vunpack.c.h.b16 %v318
        %v396 = vunpack.c.l.b16 %v319
        %v397 = vunpack.c.l.b16 %v320
        %v398 = vunpack.c.h.b16 %v320
        %v399 = vunpack.c.l.b16 %v321
        %v400 = vunpack.c.l.b16 %v322
        %v401 = vunpack.c.h.b16 %v322
        %v402 = vunpack.c.l.b16 %v323
        %v403 = vunpack.c.l.b16 %v324
        %v404 = vunpack.c.h.b16 %v324
        %v405 = vunpack.c.l.b16 %v325
        %v406 = vpack.c.b16 %v361, %v358
        %v407 = vpack.c.b16 %v362, %v359
        %v408 = vpack.c.b16 %v363, %v360
        %v409 = vpack.c.b16 %v367, %v364
        %v410 = vpack.c.b16 %v368, %v365
        %v411 = vpack.c.b16 %v369, %v366
        %v412 = vpack.c.b16 %v373, %v370
        %v413 = vpack.c.b16 %v374, %v371
        %v414 = vpack.c.b16 %v375, %v372
        %v415 = vpack.c.b16 %v379, %v376
        %v416 = vpack.c.b16 %v380, %v377
        %v417 = vpack.c.b16 %v381, %v378
        %v418 = vpack.c.b16 %v385, %v382
        %v419 = vpack.c.b16 %v386, %v383
        %v420 = vpack.c.b16 %v387, %v384
        %v421 = vpack.c.b16 %v391, %v388
        %v422 = vpack.c.b16 %v392, %v389
        %v423 = vpack.c.b16 %v393, %v390
        %v424 = vpack.c.b16 %v397, %v394
        %v425 = vpack.c.b16 %v398, %v395
        %v426 = vpack.c.b16 %v399, %v396
        %v427 = vpack.c.b16 %v403, %v400
        %v428 = vpack.c.b16 %v404, %v401
        %v429 = vpack.c.b16 %v405, %v402
        %454 = vmatprep.subr.bf16.mxu0 %v407
        %455 = vmatpush1.bf16.msra.mxu0 %v406
        %456 = vmatprep.subr.bf16.mxu0 %v410
        %457 = vmatpush1.bf16.msra.mxu0 %v409
        %458 = vmatprep.subr.bf16.mxu0 %v413
        %459 = vmatpush1.bf16.msra.mxu0 %v412
        %460 = vmatprep.subr.bf16.mxu0 %v416
        %461 = vmatpush1.bf16.msra.mxu0 %v415
        %462 = vmatprep.subr.bf16.mxu0 %v419
        %463 = vmatpush1.bf16.msra.mxu0 %v418
        %464 = vmatprep.subr.bf16.mxu0 %v422
        %465 = vmatpush1.bf16.msra.mxu0 %v421
        %466 = vmatprep.subr.bf16.mxu0 %v425
        %467 = vmatpush1.bf16.msra.mxu0 %v424
        %468 = vmatprep.subr.bf16.mxu0 %v428
        %469 = vmatpush1.bf16.msra.mxu0 %v427
        %470 = vmatprep.subr.bf16.mxu0 0
        %471 = vmatpush1.bf16.msra.mxu0 0
        %472 = vmatprep.subr.bf16.mxu0 0
        %473 = vmatpush1.bf16.msra.mxu0 0
        %474 = vmatprep.subr.bf16.mxu0 0
        %475 = vmatpush1.bf16.msra.mxu0 0
        %476 = vmatprep.subr.bf16.mxu0 0
        %477 = vmatpush1.bf16.msra.mxu0 0
        %478 = vmatprep.subr.bf16.mxu0 0
        %479 = vmatpush1.bf16.msra.mxu0 0
        %480 = vmatprep.subr.bf16.mxu0 0
        %481 = vmatpush1.bf16.msra.mxu0 0
        %482 = vmatprep.subr.bf16.mxu0 0
        %483 = vmatpush1.bf16.msra.mxu0 0
        %484 = vmatprep.subr.bf16.mxu0 0
        %485 = vmatpush1.bf16.msra.mxu0 0
        %486 = vmatprep.mubr.bf16.mxu0 0
        %487 = vmatmul.mubr.bf16.gmra.mrb[0].mxu0 %v293
        %v488 = vpop.f32.mrb[0].mxu0
        %v489 = vadd.f32 0.0, %v488
        %v490 = vpop.f32.mrb[0].mxu0
        %v491 = vadd.f32 0.0, %v490
        %v492 = vpop.f32.mrb[0].mxu0
        %v493 = vpop.f32.mrb[0].mxu0
        %494 = vdwg.mxu0
        %495 = vmatprep.subr.bf16.mxu0 0
        %496 = vmatpush1.bf16.msra.mxu0 %v408
        %497 = vmatprep.subr.bf16.mxu0 0
        %498 = vmatpush1.bf16.msra.mxu0 %v411
        %499 = vmatprep.subr.bf16.mxu0 0
        %500 = vmatpush1.bf16.msra.mxu0 %v414
        %501 = vmatprep.subr.bf16.mxu0 0
        %502 = vmatpush1.bf16.msra.mxu0 %v417
        %503 = vmatprep.subr.bf16.mxu0 0
        %504 = vmatpush1.bf16.msra.mxu0 %v420
        %505 = vmatprep.subr.bf16.mxu0 0
        %506 = vmatpush1.bf16.msra.mxu0 %v423
        %507 = vmatprep.subr.bf16.mxu0 0
        %508 = vmatpush1.bf16.msra.mxu0 %v426
        %509 = vmatprep.subr.bf16.mxu0 0
        %510 = vmatpush1.bf16.msra.mxu0 %v429
        %511 = vmatprep.subr.bf16.mxu0 0
        %512 = vmatpush1.bf16.msra.mxu0 0
        %513 = vmatprep.subr.bf16.mxu0 0
        %514 = vmatpush1.bf16.msra.mxu0 0
        %515 = vmatprep.subr.bf16.mxu0 0
        %516 = vmatpush1.bf16.msra.mxu0 0
        %517 = vmatprep.subr.bf16.mxu0 0
        %518 = vmatpush1.bf16.msra.mxu0 0
        %519 = vmatprep.subr.bf16.mxu0 0
        %520 = vmatpush1.bf16.msra.mxu0 0
        %521 = vmatprep.subr.bf16.mxu0 0
        %522 = vmatpush1.bf16.msra.mxu0 0
        %523 = vmatprep.subr.bf16.mxu0 0
        %524 = vmatpush1.bf16.msra.mxu0 0
        %525 = vmatprep.subr.bf16.mxu0 0
        %526 = vmatpush1.bf16.msra.mxu0 0
        %527 = vmatprep.mubr.bf16.mxu0 0
        %528 = vmatmul.mubr.bf16.gmra.mrb[0].mxu0 %v293
        %v529 = vpop.f32.mrb[0].mxu0
        %v530 = vadd.f32 0.0, %v529
        %v531 = vpop.f32.mrb[0].mxu0
        %v532 = vpop.f32.mrb[0].mxu0
        %v533 = vpop.f32.mrb[0].mxu0
        %534 = vdwg.mxu0
        %v535 = vld [vmem:[%s2] sm:$0x7]
        %v537 = vlaneseq
        %v538 = vshrl.u32 %v537, 7
        %v539 = vsub.s32 0, %v538
        %v540 = vrot.slane %v535, %v539
        %v541 = vlaneseq
        %v542 = vshrl.u32 %v541, 7
        %v543 = vsub.s32 1, %v542
        %v544 = vrot.slane %v535, %v543
        %v545 = vlaneseq
        %v546 = vshrl.u32 %v545, 7
        %v547 = vsub.s32 2, %v546
        %v548 = vrot.slane %v535, %v547
        %v552 = vadd.f32 %v489, %v540
        %v553 = vadd.f32 %v491, %v544
        %v554 = vadd.f32 %v530, %v548
        %v555 = vld [vmem:[#allocation3] sm:$0xff]
        %v556 = vld [vmem:[#allocation3 + $0x8] sm:$0xff]
        %v557 = vld [vmem:[#allocation3 + $0x10] sm:$0xff]
        %v558 = vsub.f32 %v552, %v555
        %v559 = vsub.f32 %v553, %v556
        %v560 = vsub.f32 %v554, %v557
        %v561 = vmul.f32 %v558, 0.5
        %v562 = vmul.f32 %v559, 0.5
        %v563 = vmul.f32 %v560, 0.5
        %v564 = vadd.f32 %v555, %v561
        %v565 = vadd.f32 %v556, %v562
        %v566 = vadd.f32 %v557, %v563
        %vm567 = vcmp.ge.f32.partialorder %v564, 1.0
        %vm568 = vcmp.ge.f32.partialorder %v565, 1.0
        %vm569 = vcmp.ge.f32.partialorder %v566, 1.0
        %v570 = vsel %vm567, 1, 0
        %v571 = vsel %vm568, 1, 0
        %v572 = vsel %vm569, 1, 0
        %v573 = vcvt.s32.f32 %v570
        %v574 = vcvt.s32.f32 %v571
        %v575 = vcvt.s32.f32 %v572
        %v576 = vsub.f32 1.0, %v573
        %v577 = vsub.f32 1.0, %v574
        %v578 = vsub.f32 1.0, %v575
        %v579 = vmul.f32 %v564, %v576
        %v580 = vmul.f32 %v565, %v577
        %v581 = vmul.f32 %v566, %v578
        %582 = vst [vmem:[#allocation3] sm:$0xff] %v579
        %583 = vst [vmem:[#allocation3 + $0x8] sm:$0xff] %v580
        %584 = vst [vmem:[#allocation3 + $0x10] sm:$0xff] %v581
        %v585 = vmul.f32 %v574, %v575
        %v586 = vrot.slane %v585, 4
        %v587 = vadd.f32 %v585, %v586
        %v588 = vrot.slane %v587, 2
        %v589 = vadd.f32 %v587, %v588
        %v590 = vrot.slane %v589, 1
        %v591 = vadd.f32 %v589, %v590
        %v592 = vld [vmem:[#allocation4] sm:$0x1]
        %v593 = vsub.f32 %v591, %v592
        %v594 = vmul.f32 %v593, 0.5
        %v595 = vadd.f32 %v592, %v594
        %vm596 = vcmp.ge.f32.partialorder %v595, 1.0
        %v597 = vsel %vm596, 1, 0
        %v598 = vcvt.s32.f32 %v597
        %v599 = vsub.f32 1.0, %v598
        %v600 = vmul.f32 %v595, %v599
        %601 = vst [vmem:[#allocation4] sm:$0x1] %v600
        %v603 = vlaneseq
        %v604 = vshrl.u32 %v603, 7
        %v605 = vsub.s32 0, %v604
        %v606 = vrot.slane %v598, %v605
        %v608 = vmul.f32 %v573, %v606
        %v609 = vpack.c.bf16 %v608, %v608
        %v610 = vld [vmem:[#allocation5] sm:$0xf]
        %v611 = vld [vmem:[#allocation5 + $0x4] sm:$0xf]
        %v612 = vld [vmem:[#allocation5 + $0x8] sm:$0xf]
        %v613 = vld [vmem:[#allocation5 + $0xc] sm:$0xf]
        %v614 = vld [vmem:[#allocation5 + $0x10] sm:$0xf]
        %v615 = vld [vmem:[#allocation5 + $0x14] sm:$0xf]
        %v616 = vld [vmem:[#allocation5 + $0x18] sm:$0xf]
        %v617 = vld [vmem:[#allocation5 + $0x1c] sm:$0xf]
        %v618 = vld [vmem:[#allocation5 + $0x20] sm:$0xf]
        %v619 = vld [vmem:[#allocation5 + $0x24] sm:$0xf]
        %v620 = vld [vmem:[#allocation5 + $0x28] sm:$0xf]
        %v621 = vld [vmem:[#allocation5 + $0x2c] sm:$0xf]
        %v622 = vld [vmem:[#allocation5 + $0x30] sm:$0xf]
        %v623 = vld [vmem:[#allocation5 + $0x34] sm:$0xf]
        %v624 = vld [vmem:[#allocation5 + $0x38] sm:$0xf]
        %v625 = vld [vmem:[#allocation5 + $0x3c] sm:$0xf]
        %v642 = vunpack.c.l.b16 %v610
        %v643 = vunpack.c.l.b16 %v611
        %v644 = vunpack.c.l.b16 %v612
        %v645 = vunpack.c.l.b16 %v613
        %v646 = vunpack.c.l.b16 %v614
        %v647 = vunpack.c.l.b16 %v615
        %v648 = vunpack.c.l.b16 %v616
        %v649 = vunpack.c.l.b16 %v617
        %v650 = vunpack.c.l.b16 %v618
        %v651 = vunpack.c.l.b16 %v619
        %v652 = vunpack.c.l.b16 %v620
        %v653 = vunpack.c.l.b16 %v621
        %v654 = vunpack.c.l.b16 %v622
        %v655 = vunpack.c.l.b16 %v623
        %v656 = vunpack.c.l.b16 %v624
        %v657 = vunpack.c.l.b16 %v625
        %v658 = vpack.c.b16 %v643, %v642
        %v659 = vpack.c.b16 %v645, %v644
        %v660 = vpack.c.b16 %v647, %v646
        %v661 = vpack.c.b16 %v649, %v648
        %v662 = vpack.c.b16 %v651, %v650
        %v663 = vpack.c.b16 %v653, %v652
        %v664 = vpack.c.b16 %v655, %v654
        %v665 = vpack.c.b16 %v657, %v656
        %674 = vmatprep.subr.bf16.mxu0 0
        %675 = vmatpush1.bf16.msra.mxu0 %v658
        %676 = vmatprep.subr.bf16.mxu0 0
        %677 = vmatpush1.bf16.msra.mxu0 %v659
        %678 = vmatprep.subr.bf16.mxu0 0
        %679 = vmatpush1.bf16.msra.mxu0 %v660
        %680 = vmatprep.subr.bf16.mxu0 0
        %681 = vmatpush1.bf16.msra.mxu0 %v661
        %682 = vmatprep.subr.bf16.mxu0 0
        %683 = vmatpush1.bf16.msra.mxu0 %v662
        %684 = vmatprep.subr.bf16.mxu0 0
        %685 = vmatpush1.bf16.msra.mxu0 %v663
        %686 = vmatprep.subr.bf16.mxu0 0
        %687 = vmatpush1.bf16.msra.mxu0 %v664
        %688 = vmatprep.subr.bf16.mxu0 0
        %689 = vmatpush1.bf16.msra.mxu0 %v665
        %690 = vmatprep.subr.bf16.mxu0 0
        %691 = vmatpush1.bf16.msra.mxu0 0
        %692 = vmatprep.subr.bf16.mxu0 0
        %693 = vmatpush1.bf16.msra.mxu0 0
        %694 = vmatprep.subr.bf16.mxu0 0
        %695 = vmatpush1.bf16.msra.mxu0 0
        %696 = vmatprep.subr.bf16.mxu0 0
        %697 = vmatpush1.bf16.msra.mxu0 0
        %698 = vmatprep.subr.bf16.mxu0 0
        %699 = vmatpush1.bf16.msra.mxu0 0
        %700 = vmatprep.subr.bf16.mxu0 0
        %701 = vmatpush1.bf16.msra.mxu0 0
        %702 = vmatprep.subr.bf16.mxu0 0
        %703 = vmatpush1.bf16.msra.mxu0 0
        %704 = vmatprep.subr.bf16.mxu0 0
        %705 = vmatpush1.bf16.msra.mxu0 0
        %706 = vmatprep.mubr.bf16.mxu0 0
        %707 = vmatmul.mubr.bf16.gmra.mrb[0].mxu0 %v609
        %v708 = vpop.f32.mrb[0].mxu0
        %v709 = vadd.f32 0.0, %v708
        %v710 = vpop.f32.mrb[0].mxu0
        %v711 = vpop.f32.mrb[0].mxu0
        %v712 = vpop.f32.mrb[0].mxu0
        %713 = vdwg.mxu0
        %v714 = vld [vmem:[%s4] sm:$0x1]
        %v716 = vlaneseq
        %v717 = vshrl.u32 %v716, 7
        %v718 = vsub.s32 0, %v717
        %v719 = vrot.slane %v714, %v718
        %v721 = vadd.f32 %v709, %v719
        %v722 = vadd.f32 %v721, %v282
        %v723 = vpack.c.bf16 %v722, %v722
        %724 = vst [vmem:[%s270] sm:$0xf] %v723
        %p725 = scmp.lt.s32.totalorder %s22, 3
        %s726 = scalar_select %p725, %s22, 3
        %p727 = scmp.lt.s32.totalorder %s21, 1
        %s728 = scalar_select %p727, %s21, 1
        %s729 = smul.addr %s726, 2
        %s730 = sadd.s32 %s728, %s729
        %s731 = smul.addr %s730, 4
        %s732 = scalar_lea.vmem %s5, %s731
        // Predicated region
        $region49: #{spike_driven_transformer_forward.7} parent=39 // pred_check
          %p733 = pneg %p161
        $region50: #{spike_driven_transformer_forward.7} parent=39 // pred_check_branch
          %735 = sbr.rel (%p733) target = $region52
        $region51: #{spike_driven_transformer_forward.7} parent=39 // pred_region
          _
        $region52: #{spike_driven_transformer_forward.7} parent=39 // pred_fallthru
          _
      $region40: #{spike_driven_transformer_forward.7} parent=5 // pred_fallthru
        _
      %p736 = scmp.le.s32.totalorder 2, %s12
      // Predicated region
      $region53: #{spike_driven_transformer_forward.7} parent=5 // pred_check
        %p737 = pneg %p736
      $region54: #{spike_driven_transformer_forward.7} parent=5 // pred_check_branch
        %739 = sbr.rel (%p737) target = $region56
      $region55: #{spike_driven_transformer_forward.7} parent=5 // pred_region
        %s740 = ssub.s32 %s12, 2
        // Predicated region
        $region57: #{spike_driven_transformer_forward.7} parent=55 // pred_check
          %p741 = pneg %p167
        $region58: #{spike_driven_transformer_forward.7} parent=55 // pred_check_branch
          %743 = sbr.rel (%p741) target = $region60
        $region59: #{spike_driven_transformer_forward.7} parent=55 // pred_region
          %p744 = scmp.lt.s32.totalorder %s24, 3
          %s745 = scalar_select %p744, %s24, 3
          %p746 = scmp.lt.s32.totalorder %s23, 1
          %s747 = scalar_select %p746, %s23, 1
          %s748 = smul.addr %s745, 2
          %s749 = sadd.s32 %s747, %s748
          %s750 = smul.addr %s749, 4
          %s751 = scalar_lea.vmem %s5, %s750
        $region60: #{spike_driven_transformer_forward.7} parent=55 // pred_fallthru
          _
      $region56: #{spike_driven_transformer_forward.7} parent=5 // pred_fallthru
        _
    $region6: #{spike_driven_transformer_forward.7} parent=1 // loop_footer
      %s16 = sadd.s32 1, %s12
    $region7: #{spike_driven_transformer_forward.7} parent=1 // loop_footer_branch
      %11 = sbr.rel target = $region3
    $region8: #{spike_driven_transformer_forward.7} parent=1 // loop_exit
      _
    %752 = vsyncpa [#allocation6], 1
    %s753 = scalar_lea.sflag [#allocation6], 1
    %754 = vsyncpa %s753, 1

// kernel: spike_driven_transformer_forward.9
$region0: #{spike_driven_transformer_forward.9}
  #allocation0 [shape = 'u32[]', space=smem, size = 0x4, offset = 0x4, fixed_abs, tag = 'smem constant byte address 0x4 - core index']
  #allocation1 [shape = 'u32[144,128]{1,0:T(1,128)}', space=vmem, size = 0x12000, scoped, tag = 'internal scratch']
  #allocation2 [shape = 'f32[1,8,128]{2,1,0:T(8,128)}', space=vmem, size = 0x1000, scoped, tag = 'scratch operand']
  #allocation3 [shape = 'f32[1,8,384]{2,1,0:T(8,128)}', space=vmem, size = 0x3000, scoped, tag = 'scratch operand']
  #allocation4 [shape = 'f32[1,128]{1,0:T(1,128)}', space=vmem, size = 0x200, scoped, tag = 'scratch operand']
  %s0 = inlined_call_operand.vmem [shape: bf16[4,2,8,128], index: 0, kind: input, shape index: {}]
  %s1 = inlined_call_operand.vmem [shape: bf16[128,384], index: 1, kind: input, shape index: {}]
  %s2 = inlined_call_operand.vmem [shape: f32[1,384], index: 2, kind: input, shape index: {}]
  %s3 = inlined_call_operand.vmem [shape: bf16[128,128], index: 3, kind: input, shape index: {}]
  %s4 = inlined_call_operand.vmem [shape: f32[1,128], index: 4, kind: input, shape index: {}]
  %s5 = inlined_call_operand.vmem [shape: bf16[4,2,8,128], index: 5, kind: output, shape index: {}]
  %s6 = sld [smem:[#allocation0]]
  $region57: #{spike_driven_transformer_forward.9} parent=0
    _
  %s8 = ssub.s32 1, %s6
  %s9 = scalar_select 0, %s8, %s6
  loop: start=0, step=1, limit=10
  $region2: #{spike_driven_transformer_forward.9} parent=0 // loop_pre_header
    _
  $region3: #{spike_driven_transformer_forward.9} parent=0 // loop_header
    %s11 = sphi 0, %s15
    %p12 = scmp.ge.s32.totalorder %s11, 10
    %s18 = sphi 0, %s30
    %s19 = sphi 0, %s26
    %s20 = sphi 0, %s18
    %s21 = sphi 0, %s19
    %s22 = sphi 0, %s20
    %s23 = sphi 0, %s21
    %s35 = sphi 0, %s37
    %s38 = sphi 0, %s35
    %s39 = sphi 0, %s38
    %s55 = sphi 0, %s39
    %s59 = sphi 0, %s59
    %s61 = sphi 0, %s59
    %s62 = sphi 0, %s61
    %s76 = sphi 0, %s62
    %s80 = sphi 0, %s80
    %s82 = sphi 0, %s80
    %s83 = sphi 0, %s82
    %s97 = sphi 0, %s83
    %s101 = sphi 0, %s101
    %s103 = sphi 0, %s101
    %s104 = sphi 0, %s103
    %s118 = sphi 0, %s104
    %s122 = sphi 0, %s122
    %s124 = sphi 0, %s122
    %s125 = sphi 0, %s124
    %s139 = sphi 0, %s125
    %s147 = sphi 0, %s149
    %s150 = sphi 0, %s147
    %s151 = sphi 0, %s150
    %s167 = sphi 0, %s151
  $region4: #{spike_driven_transformer_forward.9} parent=0 // loop_header_branch
    %14 = sbr.rel (%p12) target = $region8
  $region5: #{spike_driven_transformer_forward.9} parent=0 // loop_body
    %s16 = ssub.s32 %s11, 1
    %s17 = ssub.s32 %s11, 2
    %s24 = sadd.s32 1, %s19
    %p25 = scmp.ge.s32.totalorder %s24, 4
    %s26 = scalar_select %p25, 0, %s24
    %s27 = sadd.s32 1, %s18
    %s28 = scalar_select %p25, %s27, %s18
    %p29 = scmp.ge.s32.totalorder %s28, 2
    %s30 = scalar_select %p29, 0, %s28
    %s31 = ssub.s32 %s19, %s26
    %s32 = ssub.s32 %s18, %s30
    %s33 = sor.u32 %s31, %s32
    %p34 = scmp.eq.s32.totalorder %s33, 0
    %s36 = sadd.s32 %s35, 1
    %s37 = scalar_select %p34, %s35, %s36
    %p40 = pneg %p34
    %p41 = scmp.eq.s32.totalorder %s11, 7
    %p42 = por %p40, %p41
    %p43 = scmp.ne.s32.totalorder %s35, %s38
    %p44 = scmp.eq.s32.totalorder %s11, 0
    %p45 = por %p43, %p44
    %p46 = scmp.ne.s32.totalorder %s35, %s38
    %p47 = scmp.eq.s32.totalorder %s16, 7
    %p48 = por %p46, %p47
    %p49 = scmp.ne.s32.totalorder %s38, %s39
    %p50 = scmp.eq.s32.totalorder %s16, 0
    %p51 = por %p49, %p50
    %p52 = scmp.ne.s32.totalorder %s38, %s39
    %p53 = scmp.eq.s32.totalorder %s17, 7
    %p54 = por %p52, %p53
    %p56 = scmp.ne.s32.totalorder %s39, %s55
    %p57 = scmp.eq.s32.totalorder %s17, 0
    %p58 = por %p56, %p57
    %s60 = sadd.s32 %s59, 1
    %p63 = scmp.eq.s32.totalorder %s11, 7
    %p64 = scmp.ne.s32.totalorder %s59, %s61
    %p65 = scmp.eq.s32.totalorder %s11, 0
    %p66 = por %p64, %p65
    %p67 = scmp.ne.s32.totalorder %s59, %s61
    %p68 = scmp.eq.s32.totalorder %s16, 7
    %p69 = por %p67, %p68
    %p70 = scmp.ne.s32.totalorder %s61, %s62
    %p71 = scmp.eq.s32.totalorder %s16, 0
    %p72 = por %p70, %p71
    %p73 = scmp.ne.s32.totalorder %s61, %s62
    %p74 = scmp.eq.s32.totalorder %s17, 7
    %p75 = por %p73, %p74
    %p77 = scmp.ne.s32.totalorder %s62, %s76
    %p78 = scmp.eq.s32.totalorder %s17, 0
    %p79 = por %p77, %p78
    %s81 = sadd.s32 %s80, 1
    %p84 = scmp.eq.s32.totalorder %s11, 7
    %p85 = scmp.ne.s32.totalorder %s80, %s82
    %p86 = scmp.eq.s32.totalorder %s11, 0
    %p87 = por %p85, %p86
    %p88 = scmp.ne.s32.totalorder %s80, %s82
    %p89 = scmp.eq.s32.totalorder %s16, 7
    %p90 = por %p88, %p89
    %p91 = scmp.ne.s32.totalorder %s82, %s83
    %p92 = scmp.eq.s32.totalorder %s16, 0
    %p93 = por %p91, %p92
    %p94 = scmp.ne.s32.totalorder %s82, %s83
    %p95 = scmp.eq.s32.totalorder %s17, 7
    %p96 = por %p94, %p95
    %p98 = scmp.ne.s32.totalorder %s83, %s97
    %p99 = scmp.eq.s32.totalorder %s17, 0
    %p100 = por %p98, %p99
    %s102 = sadd.s32 %s101, 1
    %p105 = scmp.eq.s32.totalorder %s11, 7
    %p106 = scmp.ne.s32.totalorder %s101, %s103
    %p107 = scmp.eq.s32.totalorder %s11, 0
    %p108 = por %p106, %p107
    %p109 = scmp.ne.s32.totalorder %s101, %s103
    %p110 = scmp.eq.s32.totalorder %s16, 7
    %p111 = por %p109, %p110
    %p112 = scmp.ne.s32.totalorder %s103, %s104
    %p113 = scmp.eq.s32.totalorder %s16, 0
    %p114 = por %p112, %p113
    %p115 = scmp.ne.s32.totalorder %s103, %s104
    %p116 = scmp.eq.s32.totalorder %s17, 7
    %p117 = por %p115, %p116
    %p119 = scmp.ne.s32.totalorder %s104, %s118
    %p120 = scmp.eq.s32.totalorder %s17, 0
    %p121 = por %p119, %p120
    %s123 = sadd.s32 %s122, 1
    %p126 = scmp.eq.s32.totalorder %s11, 7
    %p127 = scmp.ne.s32.totalorder %s122, %s124
    %p128 = scmp.eq.s32.totalorder %s11, 0
    %p129 = por %p127, %p128
    %p130 = scmp.ne.s32.totalorder %s122, %s124
    %p131 = scmp.eq.s32.totalorder %s16, 7
    %p132 = por %p130, %p131
    %p133 = scmp.ne.s32.totalorder %s124, %s125
    %p134 = scmp.eq.s32.totalorder %s16, 0
    %p135 = por %p133, %p134
    %p136 = scmp.ne.s32.totalorder %s124, %s125
    %p137 = scmp.eq.s32.totalorder %s17, 7
    %p138 = por %p136, %p137
    %p140 = scmp.ne.s32.totalorder %s125, %s139
    %p141 = scmp.eq.s32.totalorder %s17, 0
    %p142 = por %p140, %p141
    %s143 = ssub.s32 %s19, %s26
    %s144 = ssub.s32 %s18, %s30
    %s145 = sor.u32 %s143, %s144
    %p146 = scmp.eq.s32.totalorder %s145, 0
    %s148 = sadd.s32 %s147, 1
    %s149 = scalar_select %p146, %s147, %s148
    %p152 = pneg %p146
    %p153 = scmp.eq.s32.totalorder %s11, 7
    %p154 = por %p152, %p153
    %p155 = scmp.ne.s32.totalorder %s147, %s150
    %p156 = scmp.eq.s32.totalorder %s11, 0
    %p157 = por %p155, %p156
    %p158 = scmp.ne.s32.totalorder %s147, %s150
    %p159 = scmp.eq.s32.totalorder %s16, 7
    %p160 = por %p158, %p159
    %p161 = scmp.ne.s32.totalorder %s150, %s151
    %p162 = scmp.eq.s32.totalorder %s16, 0
    %p163 = por %p161, %p162
    %p164 = scmp.ne.s32.totalorder %s150, %s151
    %p165 = scmp.eq.s32.totalorder %s17, 7
    %p166 = por %p164, %p165
    %p168 = scmp.ne.s32.totalorder %s151, %s167
    %p169 = scmp.eq.s32.totalorder %s17, 0
    %p170 = por %p168, %p169
    %p171 = scmp.le.s32.totalorder 1, %s11
    %p172 = scmp.lt.s32.totalorder %s11, 9
    %p173 = pnand %p171, %p172
    %p174 = pneg %p173
    // Predicated region
    $region9: #{spike_driven_transformer_forward.9} parent=5 // pred_check
      _
    $region10: #{spike_driven_transformer_forward.9} parent=5 // pred_check_branch
      %176 = sbr.rel (%p173) target = $region12
    $region11: #{spike_driven_transformer_forward.9} parent=5 // pred_region
      %s177 = ssub.s32 %s11, 1
      // Predicated region
      $region13: #{spike_driven_transformer_forward.9} parent=11 // pred_check
        %p178 = pneg %p72
      $region14: #{spike_driven_transformer_forward.9} parent=11 // pred_check_branch
        %180 = sbr.rel (%p178) target = $region16
      $region15: #{spike_driven_transformer_forward.9} parent=11 // pred_region
        _
      $region16: #{spike_driven_transformer_forward.9} parent=11 // pred_fallthru
        _
      // Predicated region
      $region17: #{spike_driven_transformer_forward.9} parent=11 // pred_check
        %p181 = pneg %p93
      $region18: #{spike_driven_transformer_forward.9} parent=11 // pred_check_branch
        %183 = sbr.rel (%p181) target = $region20
      $region19: #{spike_driven_transformer_forward.9} parent=11 // pred_region
        _
      $region20: #{spike_driven_transformer_forward.9} parent=11 // pred_fallthru
        _
      // Predicated region
      $region21: #{spike_driven_transformer_forward.9} parent=11 // pred_check
        %p184 = pneg %p114
      $region22: #{spike_driven_transformer_forward.9} parent=11 // pred_check_branch
        %186 = sbr.rel (%p184) target = $region24
      $region23: #{spike_driven_transformer_forward.9} parent=11 // pred_region
        _
      $region24: #{spike_driven_transformer_forward.9} parent=11 // pred_fallthru
        _
      // Predicated region
      $region25: #{spike_driven_transformer_forward.9} parent=11 // pred_check
        %p187 = pneg %p135
      $region26: #{spike_driven_transformer_forward.9} parent=11 // pred_check_branch
        %189 = sbr.rel (%p187) target = $region28
      $region27: #{spike_driven_transformer_forward.9} parent=11 // pred_region
        _
      $region28: #{spike_driven_transformer_forward.9} parent=11 // pred_fallthru
        _
    $region12: #{spike_driven_transformer_forward.9} parent=5 // pred_fallthru
      _
    %p190 = scmp.lt.s32.totalorder %s11, 8
    // Predicated region
    $region29: #{spike_driven_transformer_forward.9} parent=5 // pred_check
      %p191 = pneg %p190
    $region30: #{spike_driven_transformer_forward.9} parent=5 // pred_check_branch
      %193 = sbr.rel (%p191) target = $region32
    $region31: #{spike_driven_transformer_forward.9} parent=5 // pred_region
      // Predicated region
      $region33: #{spike_driven_transformer_forward.9} parent=31 // pred_check
        %p194 = pneg %p45
      $region34: #{spike_driven_transformer_forward.9} parent=31 // pred_check_branch
        %196 = sbr.rel (%p194) target = $region36
      $region35: #{spike_driven_transformer_forward.9} parent=31 // pred_region
        %p197 = scmp.lt.s32.totalorder %s19, 3
        %s198 = scalar_select %p197, %s19, 3
        %p199 = scmp.lt.s32.totalorder %s18, 1
        %s200 = scalar_select %p199, %s18, 1
        %s201 = smul.addr %s198, 2
        %s202 = sadd.s32 %s200, %s201
        %s203 = smul.addr %s202, 4
        %s204 = scalar_lea.vmem %s0, %s203
      $region36: #{spike_driven_transformer_forward.9} parent=31 // pred_fallthru
        _
    $region32: #{spike_driven_transformer_forward.9} parent=5 // pred_fallthru
      _
    %p205 = scmp.le.s32.totalorder 1, %s11
    %p206 = scmp.lt.s32.totalorder %s11, 9
    %p207 = pnand %p205, %p206
    %p208 = pneg %p207
    // Predicated region
    $region37: #{spike_driven_transformer_forward.9} parent=5 // pred_check
      _
    $region38: #{spike_driven_transformer_forward.9} parent=5 // pred_check_branch
      %210 = sbr.rel (%p207) target = $region40
    $region39: #{spike_driven_transformer_forward.9} parent=5 // pred_region
      %s211 = ssub.s32 %s11, 1
      %p212 = scmp.lt.s32.totalorder %s21, 3
      %s213 = scalar_select %p212, %s21, 3
      %p214 = scmp.lt.s32.totalorder %s20, 1
      %s215 = scalar_select %p214, %s20, 1
      %s216 = smul.addr %s213, 2
      %s217 = sadd.s32 %s215, %s216
      %s218 = smul.addr %s217, 4
      %s219 = scalar_lea.vmem %s0, %s218
      %p220 = pneg %p51
      %p221 = pneg %p48
      %p222 = pneg %p72
      %p223 = pneg %p69
      %p224 = pneg %p93
      %p225 = pneg %p90
      %p226 = pneg %p114
      %p227 = pneg %p111
      %p228 = pneg %p135
      %p229 = pneg %p132
      %p230 = pneg %p163
      %p231 = pneg %p160
      %p232 = scmp.lt.s32.totalorder %s21, 3
      %s233 = scalar_select %p232, %s21, 3
      %p234 = scmp.lt.s32.totalorder %s20, 1
      %s235 = scalar_select %p234, %s20, 1
      %s236 = smul.addr %s233, 2
      %s237 = sadd.s32 %s235, %s236
      %s238 = smul.addr %s237, 4
      %s239 = scalar_lea.vmem %s5, %s238
      %p240 = scmp.lt.s32.totalorder %s21, 3
      %s241 = scalar_select %p240, %s21, 3
      %p242 = scmp.lt.s32.totalorder %s20, 1
      %s243 = scalar_select %p242, %s20, 1
      %s244 = smul.addr %s241, 2
      %s245 = sadd.s32 %s243, %s244
      %s246 = smul.addr %s245, 4
      %s247 = scalar_lea.vmem %s0, %s246
      %p248 = scmp.lt.s32.totalorder %s21, 3
      %s249 = scalar_select %p248, %s21, 3
      %p250 = scmp.lt.s32.totalorder %s20, 1
      %s251 = scalar_select %p250, %s20, 1
      %s252 = smul.addr %s249, 2
      %s253 = sadd.s32 %s251, %s252
      %s254 = smul.addr %s253, 4
      %s255 = scalar_lea.vmem %s5, %s254
      %p257 = scmp.eq.s32.totalorder %s21, 0
      // Predicated region
      $region41: #{spike_driven_transformer_forward.9} parent=39 // pred_check
        %p258 = pneg %p257
      $region42: #{spike_driven_transformer_forward.9} parent=39 // pred_check_branch
        %260 = sbr.rel (%p258) target = $region44
      $region43: #{spike_driven_transformer_forward.9} parent=39 // pred_region
        %261 = vst [vmem:[#allocation2] sm:$0xff] 0.0
        %262 = vst [vmem:[#allocation3] sm:$0xff] 0.0
        %263 = vst [vmem:[#allocation3 + $0x8] sm:$0xff] 0.0
        %264 = vst [vmem:[#allocation3 + $0x10] sm:$0xff] 0.0
        %265 = vst [vmem:[#allocation4] sm:$0x1] 0.0
      $region44: #{spike_driven_transformer_forward.9} parent=39 // pred_fallthru
        _
      %v266 = vld [vmem:[%s247] sm:$0xf]
      %v267 = vunpack.c.l.bf16 %v266
      %v268 = vld [vmem:[#allocation2] sm:$0xff]
      %v269 = vsub.f32 %v267, %v268
      %v270 = vmul.f32 %v269, 0.5
      %v271 = vadd.f32 %v268, %v270
      %vm272 = vcmp.ge.f32.partialorder %v271, 1.0
      %v273 = vsel %vm272, 1, 0
      %v274 = vcvt.s32.f32 %v273
      %v275 = vsub.f32 1.0, %v274
      %v276 = vmul.f32 %v271, %v275
      %277 = vst [vmem:[#allocation2] sm:$0xff] %v276
      %v278 = vpack.c.bf16 %v274, %v274
      %v279 = vld [vmem:[%s1] sm:$0xff]
      %v280 = vld [vmem:[%s1 + $0x8] sm:$0xf]
      %v281 = vld [vmem:[%s1 + $0xc] sm:$0xff]
      %v282 = vld [vmem:[%s1 + $0x14] sm:$0xf]
      %v283 = vld [vmem:[%s1 + $0x18] sm:$0xff]
      %v284 = vld [vmem:[%s1 + $0x20] sm:$0xf]
      %v285 = vld [vmem:[%s1 + $0x24] sm:$0xff]
      %v286 = vld [vmem:[%s1 + $0x2c] sm:$0xf]
      %v287 = vld [vmem:[%s1 + $0x30] sm:$0xff]
      %v288 = vld [vmem:[%s1 + $0x38] sm:$0xf]
      %v289 = vld [vmem:[%s1 + $0x3c] sm:$0xff]
      %v290 = vld [vmem:[%s1 + $0x44] sm:$0xf]
      %v291 = vld [vmem:[%s1 + $0x48] sm:$0xff]
      %v292 = vld [vmem:[%s1 + $0x50] sm:$0xf]
      %v293 = vld [vmem:[%s1 + $0x54] sm:$0xff]
      %v294 = vld [vmem:[%s1 + $0x5c] sm:$0xf]
      %v295 = vld [vmem:[%s1 + $0x60] sm:$0xff]
      %v296 = vld [vmem:[%s1 + $0x68] sm:$0xf]
      %v297 = vld [vmem:[%s1 + $0x6c] sm:$0xff]
      %v298 = vld [vmem:[%s1 + $0x74] sm:$0xf]
      %v299 = vld [vmem:[%s1 + $0x78] sm:$0xff]
      %v300 = vld [vmem:[%s1 + $0x80] sm:$0xf]
      %v301 = vld [vmem:[%s1 + $0x84] sm:$0xff]
      %v302 = vld [vmem:[%s1 + $0x8c] sm:$0xf]
      %v303 = vld [vmem:[%s1 + $0x90] sm:$0xff]
      %v304 = vld [vmem:[%s1 + $0x98] sm:$0xf]
      %v305 = vld [vmem:[%s1 + $0x9c] sm:$0xff]
      %v306 = vld [vmem:[%s1 + $0xa4] sm:$0xf]
      %v307 = vld [vmem:[%s1 + $0xa8] sm:$0xff]
      %v308 = vld [vmem:[%s1 + $0xb0] sm:$0xf]
      %v309 = vld [vmem:[%s1 + $0xb4] sm:$0xff]
      %v310 = vld [vmem:[%s1 + $0xbc] sm:$0xf]
      %v343 = vunpack.c.l.b16 %v279
      %v344 = vunpack.c.h.b16 %v279
      %v345 = vunpack.c.l.b16 %v280
      %v346 = vunpack.c.l.b16 %v281
      %v347 = vunpack.c.h.b16 %v281
      %v348 = vunpack.c.l.b16 %v282
      %v349 = vunpack.c.l.b16 %v283
      %v350 = vunpack.c.h.b16 %v283
      %v351 = vunpack.c.l.b16 %v284
      %v352 = vunpack.c.l.b16 %v285
      %v353 = vunpack.c.h.b16 %v285
      %v354 = vunpack.c.l.b16 %v286
      %v355 = vunpack.c.l.b16 %v287
      %v356 = vunpack.c.h.b16 %v287
      %v357 = vunpack.c.l.b16 %v288
      %v358 = vunpack.c.l.b16 %v289
      %v359 = vunpack.c.h.b16 %v289
      %v360 = vunpack.c.l.b16 %v290
      %v361 = vunpack.c.l.b16 %v291
      %v362 = vunpack.c.h.b16 %v291
      %v363 = vunpack.c.l.b16 %v292
      %v364 = vunpack.c.l.b16 %v293
      %v365 = vunpack.c.h.b16 %v293
      %v366 = vunpack.c.l.b16 %v294
      %v367 = vunpack.c.l.b16 %v295
      %v368 = vunpack.c.h.b16 %v295
      %v369 = vunpack.c.l.b16 %v296
      %v370 = vunpack.c.l.b16 %v297
      %v371 = vunpack.c.h.b16 %v297
      %v372 = vunpack.c.l.b16 %v298
      %v373 = vunpack.c.l.b16 %v299
      %v374 = vunpack.c.h.b16 %v299
      %v375 = vunpack.c.l.b16 %v300
      %v376 = vunpack.c.l.b16 %v301
      %v377 = vunpack.c.h.b16 %v301
      %v378 = vunpack.c.l.b16 %v302
      %v379 = vunpack.c.l.b16 %v303
      %v380 = vunpack.c.h.b16 %v303
      %v381 = vunpack.c.l.b16 %v304
      %v382 = vunpack.c.l.b16 %v305
      %v383 = vunpack.c.h.b16 %v305
      %v384 = vunpack.c.l.b16 %v306
      %v385 = vunpack.c.l.b16 %v307
      %v386 = vunpack.c.h.b16 %v307
      %v387 = vunpack.c.l.b16 %v308
      %v388 = vunpack.c.l.b16 %v309
      %v389 = vunpack.c.h.b16 %v309
      %v390 = vunpack.c.l.b16 %v310
      %v391 = vpack.c.b16 %v346, %v343
      %v392 = vpack.c.b16 %v347, %v344
      %v393 = vpack.c.b16 %v348, %v345
      %v394 = vpack.c.b16 %v352, %v349
      %v395 = vpack.c.b16 %v353, %v350
      %v396 = vpack.c.b16 %v354, %v351
      %v397 = vpack.c.b16 %v358, %v355
      %v398 = vpack.c.b16 %v359, %v356
      %v399 = vpack.c.b16 %v360, %v357
      %v400 = vpack.c.b16 %v364, %v361
      %v401 = vpack.c.b16 %v365, %v362
      %v402 = vpack.c.b16 %v366, %v363
      %v403 = vpack.c.b16 %v370, %v367
      %v404 = vpack.c.b16 %v371, %v368
      %v405 = vpack.c.b16 %v372, %v369
      %v406 = vpack.c.b16 %v376, %v373
      %v407 = vpack.c.b16 %v377, %v374
      %v408 = vpack.c.b16 %v378, %v375
      %v409 = vpack.c.b16 %v382, %v379
      %v410 = vpack.c.b16 %v383, %v380
      %v411 = vpack.c.b16 %v384, %v381
      %v412 = vpack.c.b16 %v388, %v385
      %v413 = vpack.c.b16 %v389, %v386
      %v414 = vpack.c.b16 %v390, %v387
      %439 = vmatprep.subr.bf16.mxu0 %v392
      %440 = vmatpush1.bf16.msra.mxu0 %v391
      %441 = vmatprep.subr.bf16.mxu0 %v395
      %442 = vmatpush1.bf16.msra.mxu0 %v394
      %443 = vmatprep.subr.bf16.mxu0 %v398
      %444 = vmatpush1.bf16.msra.mxu0 %v397
      %445 = vmatprep.subr.bf16.mxu0 %v401
      %446 = vmatpush1.bf16.msra.mxu0 %v400
      %447 = vmatprep.subr.bf16.mxu0 %v404
      %448 = vmatpush1.bf16.msra.mxu0 %v403
      %449 = vmatprep.subr.bf16.mxu0 %v407
      %450 = vmatpush1.bf16.msra.mxu0 %v406
      %451 = vmatprep.subr.bf16.mxu0 %v410
      %452 = vmatpush1.bf16.msra.mxu0 %v409
      %453 = vmatprep.subr.bf16.mxu0 %v413
      %454 = vmatpush1.bf16.msra.mxu0 %v412
      %455 = vmatprep.subr.bf16.mxu0 0
      %456 = vmatpush1.bf16.msra.mxu0 0
      %457 = vmatprep.subr.bf16.mxu0 0
      %458 = vmatpush1.bf16.msra.mxu0 0
      %459 = vmatprep.subr.bf16.mxu0 0
      %460 = vmatpush1.bf16.msra.mxu0 0
      %461 = vmatprep.subr.bf16.mxu0 0
      %462 = vmatpush1.bf16.msra.mxu0 0
      %463 = vmatprep.subr.bf16.mxu0 0
      %464 = vmatpush1.bf16.msra.mxu0 0
      %465 = vmatprep.subr.bf16.mxu0 0
      %466 = vmatpush1.bf16.msra.mxu0 0
      %467 = vmatprep.subr.bf16.mxu0 0
      %468 = vmatpush1.bf16.msra.mxu0 0
      %469 = vmatprep.subr.bf16.mxu0 0
      %470 = vmatpush1.bf16.msra.mxu0 0
      %471 = vmatprep.mubr.bf16.mxu0 0
      %472 = vmatmul.mubr.bf16.gmra.mrb[0].mxu0 %v278
      %v473 = vpop.f32.mrb[0].mxu0
      %v474 = vadd.f32 0.0, %v473
      %v475 = vpop.f32.mrb[0].mxu0
      %v476 = vadd.f32 0.0, %v475
      %v477 = vpop.f32.mrb[0].mxu0
      %v478 = vpop.f32.mrb[0].mxu0
      %479 = vdwg.mxu0
      %480 = vmatprep.subr.bf16.mxu0 0
      %481 = vmatpush1.bf16.msra.mxu0 %v393
      %482 = vmatprep.subr.bf16.mxu0 0
      %483 = vmatpush1.bf16.msra.mxu0 %v396
      %484 = vmatprep.subr.bf16.mxu0 0
      %485 = vmatpush1.bf16.msra.mxu0 %v399
      %486 = vmatprep.subr.bf16.mxu0 0
      %487 = vmatpush1.bf16.msra.mxu0 %v402
      %488 = vmatprep.subr.bf16.mxu0 0
      %489 = vmatpush1.bf16.msra.mxu0 %v405
      %490 = vmatprep.subr.bf16.mxu0 0
      %491 = vmatpush1.bf16.msra.mxu0 %v408
      %492 = vmatprep.subr.bf16.mxu0 0
      %493 = vmatpush1.bf16.msra.mxu0 %v411
      %494 = vmatprep.subr.bf16.mxu0 0
      %495 = vmatpush1.bf16.msra.mxu0 %v414
      %496 = vmatprep.subr.bf16.mxu0 0
      %497 = vmatpush1.bf16.msra.mxu0 0
      %498 = vmatprep.subr.bf16.mxu0 0
      %499 = vmatpush1.bf16.msra.mxu0 0
      %500 = vmatprep.subr.bf16.mxu0 0
      %501 = vmatpush1.bf16.msra.mxu0 0
      %502 = vmatprep.subr.bf16.mxu0 0
      %503 = vmatpush1.bf16.msra.mxu0 0
      %504 = vmatprep.subr.bf16.mxu0 0
      %505 = vmatpush1.bf16.msra.mxu0 0
      %506 = vmatprep.subr.bf16.mxu0 0
      %507 = vmatpush1.bf16.msra.mxu0 0
      %508 = vmatprep.subr.bf16.mxu0 0
      %509 = vmatpush1.bf16.msra.mxu0 0
      %510 = vmatprep.subr.bf16.mxu0 0
      %511 = vmatpush1.bf16.msra.mxu0 0
      %512 = vmatprep.mubr.bf16.mxu0 0
      %513 = vmatmul.mubr.bf16.gmra.mrb[0].mxu0 %v278
      %v514 = vpop.f32.mrb[0].mxu0
      %v515 = vadd.f32 0.0, %v514
      %v516 = vpop.f32.mrb[0].mxu0
      %v517 = vpop.f32.mrb[0].mxu0
      %v518 = vpop.f32.mrb[0].mxu0
      %519 = vdwg.mxu0
      %v520 = vld [vmem:[%s2] sm:$0x7]
      %v522 = vlaneseq
      %v523 = vshrl.u32 %v522, 7
      %v524 = vsub.s32 0, %v523
      %v525 = vrot.slane %v520, %v524
      %v526 = vlaneseq
      %v527 = vshrl.u32 %v526, 7
      %v528 = vsub.s32 1, %v527
      %v529 = vrot.slane %v520, %v528
      %v530 = vlaneseq
      %v531 = vshrl.u32 %v530, 7
      %v532 = vsub.s32 2, %v531
      %v533 = vrot.slane %v520, %v532
      %v537 = vadd.f32 %v474, %v525
      %v538 = vadd.f32 %v476, %v529
      %v539 = vadd.f32 %v515, %v533
      %v540 = vld [vmem:[#allocation3] sm:$0xff]
      %v541 = vld [vmem:[#allocation3 + $0x8] sm:$0xff]
      %v542 = vld [vmem:[#allocation3 + $0x10] sm:$0xff]
      %v543 = vsub.f32 %v537, %v540
      %v544 = vsub.f32 %v538, %v541
      %v545 = vsub.f32 %v539, %v542
      %v546 = vmul.f32 %v543, 0.5
      %v547 = vmul.f32 %v544, 0.5
      %v548 = vmul.f32 %v545, 0.5
      %v549 = vadd.f32 %v540, %v546
      %v550 = vadd.f32 %v541, %v547
      %v551 = vadd.f32 %v542, %v548
      %vm552 = vcmp.ge.f32.partialorder %v549, 1.0
      %vm553 = vcmp.ge.f32.partialorder %v550, 1.0
      %vm554 = vcmp.ge.f32.partialorder %v551, 1.0
      %v555 = vsel %vm552, 1, 0
      %v556 = vsel %vm553, 1, 0
      %v557 = vsel %vm554, 1, 0
      %v558 = vcvt.s32.f32 %v555
      %v559 = vcvt.s32.f32 %v556
      %v560 = vcvt.s32.f32 %v557
      %v561 = vsub.f32 1.0, %v558
      %v562 = vsub.f32 1.0, %v559
      %v563 = vsub.f32 1.0, %v560
      %v564 = vmul.f32 %v549, %v561
      %v565 = vmul.f32 %v550, %v562
      %v566 = vmul.f32 %v551, %v563
      %567 = vst [vmem:[#allocation3] sm:$0xff] %v564
      %568 = vst [vmem:[#allocation3 + $0x8] sm:$0xff] %v565
      %569 = vst [vmem:[#allocation3 + $0x10] sm:$0xff] %v566
      %v570 = vmul.f32 %v559, %v560
      %v571 = vrot.slane %v570, 4
      %v572 = vadd.f32 %v570, %v571
      %v573 = vrot.slane %v572, 2
      %v574 = vadd.f32 %v572, %v573
      %v575 = vrot.slane %v574, 1
      %v576 = vadd.f32 %v574, %v575
      %v577 = vld [vmem:[#allocation4] sm:$0x1]
      %v578 = vsub.f32 %v576, %v577
      %v579 = vmul.f32 %v578, 0.5
      %v580 = vadd.f32 %v577, %v579
      %vm581 = vcmp.ge.f32.partialorder %v580, 1.0
      %v582 = vsel %vm581, 1, 0
      %v583 = vcvt.s32.f32 %v582
      %v584 = vsub.f32 1.0, %v583
      %v585 = vmul.f32 %v580, %v584
      %586 = vst [vmem:[#allocation4] sm:$0x1] %v585
      %v588 = vlaneseq
      %v589 = vshrl.u32 %v588, 7
      %v590 = vsub.s32 0, %v589
      %v591 = vrot.slane %v583, %v590
      %v593 = vmul.f32 %v558, %v591
      %v594 = vpack.c.bf16 %v593, %v593
      %v595 = vld [vmem:[%s3] sm:$0xf]
      %v596 = vld [vmem:[%s3 + $0x4] sm:$0xf]
      %v597 = vld [vmem:[%s3 + $0x8] sm:$0xf]
      %v598 = vld [vmem:[%s3 + $0xc] sm:$0xf]
      %v599 = vld [vmem:[%s3 + $0x10] sm:$0xf]
      %v600 = vld [vmem:[%s3 + $0x14] sm:$0xf]
      %v601 = vld [vmem:[%s3 + $0x18] sm:$0xf]
      %v602 = vld [vmem:[%s3 + $0x1c] sm:$0xf]
      %v603 = vld [vmem:[%s3 + $0x20] sm:$0xf]
      %v604 = vld [vmem:[%s3 + $0x24] sm:$0xf]
      %v605 = vld [vmem:[%s3 + $0x28] sm:$0xf]
      %v606 = vld [vmem:[%s3 + $0x2c] sm:$0xf]
      %v607 = vld [vmem:[%s3 + $0x30] sm:$0xf]
      %v608 = vld [vmem:[%s3 + $0x34] sm:$0xf]
      %v609 = vld [vmem:[%s3 + $0x38] sm:$0xf]
      %v610 = vld [vmem:[%s3 + $0x3c] sm:$0xf]
      %v627 = vunpack.c.l.b16 %v595
      %v628 = vunpack.c.l.b16 %v596
      %v629 = vunpack.c.l.b16 %v597
      %v630 = vunpack.c.l.b16 %v598
      %v631 = vunpack.c.l.b16 %v599
      %v632 = vunpack.c.l.b16 %v600
      %v633 = vunpack.c.l.b16 %v601
      %v634 = vunpack.c.l.b16 %v602
      %v635 = vunpack.c.l.b16 %v603
      %v636 = vunpack.c.l.b16 %v604
      %v637 = vunpack.c.l.b16 %v605
      %v638 = vunpack.c.l.b16 %v606
      %v639 = vunpack.c.l.b16 %v607
      %v640 = vunpack.c.l.b16 %v608
      %v641 = vunpack.c.l.b16 %v609
      %v642 = vunpack.c.l.b16 %v610
      %v643 = vpack.c.b16 %v628, %v627
      %v644 = vpack.c.b16 %v630, %v629
      %v645 = vpack.c.b16 %v632, %v631
      %v646 = vpack.c.b16 %v634, %v633
      %v647 = vpack.c.b16 %v636, %v635
      %v648 = vpack.c.b16 %v638, %v637
      %v649 = vpack.c.b16 %v640, %v639
      %v650 = vpack.c.b16 %v642, %v641
      %659 = vmatprep.subr.bf16.mxu0 0
      %660 = vmatpush1.bf16.msra.mxu0 %v643
      %661 = vmatprep.subr.bf16.mxu0 0
      %662 = vmatpush1.bf16.msra.mxu0 %v644
      %663 = vmatprep.subr.bf16.mxu0 0
      %664 = vmatpush1.bf16.msra.mxu0 %v645
      %665 = vmatprep.subr.bf16.mxu0 0
      %666 = vmatpush1.bf16.msra.mxu0 %v646
      %667 = vmatprep.subr.bf16.mxu0 0
      %668 = vmatpush1.bf16.msra.mxu0 %v647
      %669 = vmatprep.subr.bf16.mxu0 0
      %670 = vmatpush1.bf16.msra.mxu0 %v648
      %671 = vmatprep.subr.bf16.mxu0 0
      %672 = vmatpush1.bf16.msra.mxu0 %v649
      %673 = vmatprep.subr.bf16.mxu0 0
      %674 = vmatpush1.bf16.msra.mxu0 %v650
      %675 = vmatprep.subr.bf16.mxu0 0
      %676 = vmatpush1.bf16.msra.mxu0 0
      %677 = vmatprep.subr.bf16.mxu0 0
      %678 = vmatpush1.bf16.msra.mxu0 0
      %679 = vmatprep.subr.bf16.mxu0 0
      %680 = vmatpush1.bf16.msra.mxu0 0
      %681 = vmatprep.subr.bf16.mxu0 0
      %682 = vmatpush1.bf16.msra.mxu0 0
      %683 = vmatprep.subr.bf16.mxu0 0
      %684 = vmatpush1.bf16.msra.mxu0 0
      %685 = vmatprep.subr.bf16.mxu0 0
      %686 = vmatpush1.bf16.msra.mxu0 0
      %687 = vmatprep.subr.bf16.mxu0 0
      %688 = vmatpush1.bf16.msra.mxu0 0
      %689 = vmatprep.subr.bf16.mxu0 0
      %690 = vmatpush1.bf16.msra.mxu0 0
      %691 = vmatprep.mubr.bf16.mxu0 0
      %692 = vmatmul.mubr.bf16.gmra.mrb[0].mxu0 %v594
      %v693 = vpop.f32.mrb[0].mxu0
      %v694 = vadd.f32 0.0, %v693
      %v695 = vpop.f32.mrb[0].mxu0
      %v696 = vpop.f32.mrb[0].mxu0
      %v697 = vpop.f32.mrb[0].mxu0
      %698 = vdwg.mxu0
      %v699 = vld [vmem:[%s4] sm:$0x1]
      %v701 = vlaneseq
      %v702 = vshrl.u32 %v701, 7
      %v703 = vsub.s32 0, %v702
      %v704 = vrot.slane %v699, %v703
      %v706 = vadd.f32 %v694, %v704
      %v707 = vadd.f32 %v706, %v267
      %v708 = vpack.c.bf16 %v707, %v707
      %709 = vst [vmem:[%s255] sm:$0xf] %v708
      %p710 = scmp.lt.s32.totalorder %s21, 3
      %s711 = scalar_select %p710, %s21, 3
      %p712 = scmp.lt.s32.totalorder %s20, 1
      %s713 = scalar_select %p712, %s20, 1
      %s714 = smul.addr %s711, 2
      %s715 = sadd.s32 %s713, %s714
      %s716 = smul.addr %s715, 4
      %s717 = scalar_lea.vmem %s5, %s716
      // Predicated region
      $region45: #{spike_driven_transformer_forward.9} parent=39 // pred_check
        %p718 = pneg %p160
      $region46: #{spike_driven_transformer_forward.9} parent=39 // pred_check_branch
        %720 = sbr.rel (%p718) target = $region48
      $region47: #{spike_driven_transformer_forward.9} parent=39 // pred_region
        _
      $region48: #{spike_driven_transformer_forward.9} parent=39 // pred_fallthru
        _
    $region40: #{spike_driven_transformer_forward.9} parent=5 // pred_fallthru
      _
    %p721 = scmp.le.s32.totalorder 2, %s11
    // Predicated region
    $region49: #{spike_driven_transformer_forward.9} parent=5 // pred_check
      %p722 = pneg %p721
    $region50: #{spike_driven_transformer_forward.9} parent=5 // pred_check_branch
      %724 = sbr.rel (%p722) target = $region52
    $region51: #{spike_driven_transformer_forward.9} parent=5 // pred_region
      %s725 = ssub.s32 %s11, 2
      // Predicated region
      $region53: #{spike_driven_transformer_forward.9} parent=51 // pred_check
        %p726 = pneg %p166
      $region54: #{spike_driven_transformer_forward.9} parent=51 // pred_check_branch
        %728 = sbr.rel (%p726) target = $region56
      $region55: #{spike_driven_transformer_forward.9} parent=51 // pred_region
        %p729 = scmp.lt.s32.totalorder %s23, 3
        %s730 = scalar_select %p729, %s23, 3
        %p731 = scmp.lt.s32.totalorder %s22, 1
        %s732 = scalar_select %p731, %s22, 1
        %s733 = smul.addr %s730, 2
        %s734 = sadd.s32 %s732, %s733
        %s735 = smul.addr %s734, 4
        %s736 = scalar_lea.vmem %s5, %s735
      $region56: #{spike_driven_transformer_forward.9} parent=51 // pred_fallthru
        _
    $region52: #{spike_driven_transformer_forward.9} parent=5 // pred_fallthru
      _
  $region6: #{spike_driven_transformer_forward.9} parent=0 // loop_footer
    %s15 = sadd.s32 1, %s11
  $region7: #{spike_driven_transformer_forward.9} parent=0 // loop_footer_branch
    %10 = sbr.rel target = $region3
  $region8: #{spike_driven_transformer_forward.9} parent=0 // loop_exit
    _

// kernel: spike_driven_transformer_forward.8
$region0: #{spike_driven_transformer_forward.8}
  #allocation0 [shape = 'u32[]', space=smem, size = 0x4, offset = 0x4, fixed_abs, tag = 'smem constant byte address 0x4 - core index']
  #allocation1 [shape = 'u32[144,128]{1,0:T(1,128)}', space=vmem, size = 0x12000, scoped, tag = 'internal scratch']
  #allocation2 [shape = 'f32[8,128]{1,0:T(8,128)}', space=vmem, size = 0x1000, scoped, tag = 'scratch operand']
  #allocation3 [shape = 'f32[8,512]{1,0:T(8,128)}', space=vmem, size = 0x4000, scoped, tag = 'scratch operand']
  %s0 = inlined_call_operand.vmem [shape: bf16[4,16,128], index: 0, kind: input, shape index: {}]
  %s1 = inlined_call_operand.vmem [shape: bf16[128,512], index: 1, kind: input, shape index: {}]
  %s2 = inlined_call_operand.vmem [shape: f32[1,512], index: 2, kind: input, shape index: {}]
  %s3 = inlined_call_operand.vmem [shape: bf16[512,128], index: 3, kind: input, shape index: {}]
  %s4 = inlined_call_operand.vmem [shape: f32[1,128], index: 4, kind: input, shape index: {}]
  %s5 = inlined_call_operand.vmem [shape: bf16[4,16,128], index: 5, kind: output, shape index: {}]
  %s6 = sld [smem:[#allocation0]]
  $region57: #{spike_driven_transformer_forward.8} parent=0
    _
  %s8 = ssub.s32 1, %s6
  %s9 = scalar_select 0, %s8, %s6
  loop: start=0, step=1, limit=10
  $region2: #{spike_driven_transformer_forward.8} parent=0 // loop_pre_header
    _
  $region3: #{spike_driven_transformer_forward.8} parent=0 // loop_header
    %s11 = sphi 0, %s15
    %p12 = scmp.ge.s32.totalorder %s11, 10
    %s18 = sphi 0, %s30
    %s19 = sphi 0, %s26
    %s20 = sphi 0, %s18
    %s21 = sphi 0, %s19
    %s22 = sphi 0, %s20
    %s23 = sphi 0, %s21
    %s35 = sphi 0, %s37
    %s38 = sphi 0, %s35
    %s39 = sphi 0, %s38
    %s55 = sphi 0, %s39
    %s59 = sphi 0, %s59
    %s61 = sphi 0, %s59
    %s62 = sphi 0, %s61
    %s76 = sphi 0, %s62
    %s80 = sphi 0, %s80
    %s82 = sphi 0, %s80
    %s83 = sphi 0, %s82
    %s97 = sphi 0, %s83
    %s101 = sphi 0, %s101
    %s103 = sphi 0, %s101
    %s104 = sphi 0, %s103
    %s118 = sphi 0, %s104
    %s122 = sphi 0, %s122
    %s124 = sphi 0, %s122
    %s125 = sphi 0, %s124
    %s139 = sphi 0, %s125
    %s147 = sphi 0, %s149
    %s150 = sphi 0, %s147
    %s151 = sphi 0, %s150
    %s167 = sphi 0, %s151
  $region4: #{spike_driven_transformer_forward.8} parent=0 // loop_header_branch
    %14 = sbr.rel (%p12) target = $region8
  $region5: #{spike_driven_transformer_forward.8} parent=0 // loop_body
    %s16 = ssub.s32 %s11, 1
    %s17 = ssub.s32 %s11, 2
    %s24 = sadd.s32 1, %s19
    %p25 = scmp.ge.s32.totalorder %s24, 4
    %s26 = scalar_select %p25, 0, %s24
    %s27 = sadd.s32 1, %s18
    %s28 = scalar_select %p25, %s27, %s18
    %p29 = scmp.ge.s32.totalorder %s28, 2
    %s30 = scalar_select %p29, 0, %s28
    %s31 = ssub.s32 %s19, %s26
    %s32 = ssub.s32 %s18, %s30
    %s33 = sor.u32 %s31, %s32
    %p34 = scmp.eq.s32.totalorder %s33, 0
    %s36 = sadd.s32 %s35, 1
    %s37 = scalar_select %p34, %s35, %s36
    %p40 = pneg %p34
    %p41 = scmp.eq.s32.totalorder %s11, 7
    %p42 = por %p40, %p41
    %p43 = scmp.ne.s32.totalorder %s35, %s38
    %p44 = scmp.eq.s32.totalorder %s11, 0
    %p45 = por %p43, %p44
    %p46 = scmp.ne.s32.totalorder %s35, %s38
    %p47 = scmp.eq.s32.totalorder %s16, 7
    %p48 = por %p46, %p47
    %p49 = scmp.ne.s32.totalorder %s38, %s39
    %p50 = scmp.eq.s32.totalorder %s16, 0
    %p51 = por %p49, %p50
    %p52 = scmp.ne.s32.totalorder %s38, %s39
    %p53 = scmp.eq.s32.totalorder %s17, 7
    %p54 = por %p52, %p53
    %p56 = scmp.ne.s32.totalorder %s39, %s55
    %p57 = scmp.eq.s32.totalorder %s17, 0
    %p58 = por %p56, %p57
    %s60 = sadd.s32 %s59, 1
    %p63 = scmp.eq.s32.totalorder %s11, 7
    %p64 = scmp.ne.s32.totalorder %s59, %s61
    %p65 = scmp.eq.s32.totalorder %s11, 0
    %p66 = por %p64, %p65
    %p67 = scmp.ne.s32.totalorder %s59, %s61
    %p68 = scmp.eq.s32.totalorder %s16, 7
    %p69 = por %p67, %p68
    %p70 = scmp.ne.s32.totalorder %s61, %s62
    %p71 = scmp.eq.s32.totalorder %s16, 0
    %p72 = por %p70, %p71
    %p73 = scmp.ne.s32.totalorder %s61, %s62
    %p74 = scmp.eq.s32.totalorder %s17, 7
    %p75 = por %p73, %p74
    %p77 = scmp.ne.s32.totalorder %s62, %s76
    %p78 = scmp.eq.s32.totalorder %s17, 0
    %p79 = por %p77, %p78
    %s81 = sadd.s32 %s80, 1
    %p84 = scmp.eq.s32.totalorder %s11, 7
    %p85 = scmp.ne.s32.totalorder %s80, %s82
    %p86 = scmp.eq.s32.totalorder %s11, 0
    %p87 = por %p85, %p86
    %p88 = scmp.ne.s32.totalorder %s80, %s82
    %p89 = scmp.eq.s32.totalorder %s16, 7
    %p90 = por %p88, %p89
    %p91 = scmp.ne.s32.totalorder %s82, %s83
    %p92 = scmp.eq.s32.totalorder %s16, 0
    %p93 = por %p91, %p92
    %p94 = scmp.ne.s32.totalorder %s82, %s83
    %p95 = scmp.eq.s32.totalorder %s17, 7
    %p96 = por %p94, %p95
    %p98 = scmp.ne.s32.totalorder %s83, %s97
    %p99 = scmp.eq.s32.totalorder %s17, 0
    %p100 = por %p98, %p99
    %s102 = sadd.s32 %s101, 1
    %p105 = scmp.eq.s32.totalorder %s11, 7
    %p106 = scmp.ne.s32.totalorder %s101, %s103
    %p107 = scmp.eq.s32.totalorder %s11, 0
    %p108 = por %p106, %p107
    %p109 = scmp.ne.s32.totalorder %s101, %s103
    %p110 = scmp.eq.s32.totalorder %s16, 7
    %p111 = por %p109, %p110
    %p112 = scmp.ne.s32.totalorder %s103, %s104
    %p113 = scmp.eq.s32.totalorder %s16, 0
    %p114 = por %p112, %p113
    %p115 = scmp.ne.s32.totalorder %s103, %s104
    %p116 = scmp.eq.s32.totalorder %s17, 7
    %p117 = por %p115, %p116
    %p119 = scmp.ne.s32.totalorder %s104, %s118
    %p120 = scmp.eq.s32.totalorder %s17, 0
    %p121 = por %p119, %p120
    %s123 = sadd.s32 %s122, 1
    %p126 = scmp.eq.s32.totalorder %s11, 7
    %p127 = scmp.ne.s32.totalorder %s122, %s124
    %p128 = scmp.eq.s32.totalorder %s11, 0
    %p129 = por %p127, %p128
    %p130 = scmp.ne.s32.totalorder %s122, %s124
    %p131 = scmp.eq.s32.totalorder %s16, 7
    %p132 = por %p130, %p131
    %p133 = scmp.ne.s32.totalorder %s124, %s125
    %p134 = scmp.eq.s32.totalorder %s16, 0
    %p135 = por %p133, %p134
    %p136 = scmp.ne.s32.totalorder %s124, %s125
    %p137 = scmp.eq.s32.totalorder %s17, 7
    %p138 = por %p136, %p137
    %p140 = scmp.ne.s32.totalorder %s125, %s139
    %p141 = scmp.eq.s32.totalorder %s17, 0
    %p142 = por %p140, %p141
    %s143 = ssub.s32 %s19, %s26
    %s144 = ssub.s32 %s18, %s30
    %s145 = sor.u32 %s143, %s144
    %p146 = scmp.eq.s32.totalorder %s145, 0
    %s148 = sadd.s32 %s147, 1
    %s149 = scalar_select %p146, %s147, %s148
    %p152 = pneg %p146
    %p153 = scmp.eq.s32.totalorder %s11, 7
    %p154 = por %p152, %p153
    %p155 = scmp.ne.s32.totalorder %s147, %s150
    %p156 = scmp.eq.s32.totalorder %s11, 0
    %p157 = por %p155, %p156
    %p158 = scmp.ne.s32.totalorder %s147, %s150
    %p159 = scmp.eq.s32.totalorder %s16, 7
    %p160 = por %p158, %p159
    %p161 = scmp.ne.s32.totalorder %s150, %s151
    %p162 = scmp.eq.s32.totalorder %s16, 0
    %p163 = por %p161, %p162
    %p164 = scmp.ne.s32.totalorder %s150, %s151
    %p165 = scmp.eq.s32.totalorder %s17, 7
    %p166 = por %p164, %p165
    %p168 = scmp.ne.s32.totalorder %s151, %s167
    %p169 = scmp.eq.s32.totalorder %s17, 0
    %p170 = por %p168, %p169
    %p171 = scmp.le.s32.totalorder 1, %s11
    %p172 = scmp.lt.s32.totalorder %s11, 9
    %p173 = pnand %p171, %p172
    %p174 = pneg %p173
    // Predicated region
    $region9: #{spike_driven_transformer_forward.8} parent=5 // pred_check
      _
    $region10: #{spike_driven_transformer_forward.8} parent=5 // pred_check_branch
      %176 = sbr.rel (%p173) target = $region12
    $region11: #{spike_driven_transformer_forward.8} parent=5 // pred_region
      %s177 = ssub.s32 %s11, 1
      // Predicated region
      $region13: #{spike_driven_transformer_forward.8} parent=11 // pred_check
        %p178 = pneg %p72
      $region14: #{spike_driven_transformer_forward.8} parent=11 // pred_check_branch
        %180 = sbr.rel (%p178) target = $region16
      $region15: #{spike_driven_transformer_forward.8} parent=11 // pred_region
        _
      $region16: #{spike_driven_transformer_forward.8} parent=11 // pred_fallthru
        _
      // Predicated region
      $region17: #{spike_driven_transformer_forward.8} parent=11 // pred_check
        %p181 = pneg %p93
      $region18: #{spike_driven_transformer_forward.8} parent=11 // pred_check_branch
        %183 = sbr.rel (%p181) target = $region20
      $region19: #{spike_driven_transformer_forward.8} parent=11 // pred_region
        _
      $region20: #{spike_driven_transformer_forward.8} parent=11 // pred_fallthru
        _
      // Predicated region
      $region21: #{spike_driven_transformer_forward.8} parent=11 // pred_check
        %p184 = pneg %p114
      $region22: #{spike_driven_transformer_forward.8} parent=11 // pred_check_branch
        %186 = sbr.rel (%p184) target = $region24
      $region23: #{spike_driven_transformer_forward.8} parent=11 // pred_region
        _
      $region24: #{spike_driven_transformer_forward.8} parent=11 // pred_fallthru
        _
      // Predicated region
      $region25: #{spike_driven_transformer_forward.8} parent=11 // pred_check
        %p187 = pneg %p135
      $region26: #{spike_driven_transformer_forward.8} parent=11 // pred_check_branch
        %189 = sbr.rel (%p187) target = $region28
      $region27: #{spike_driven_transformer_forward.8} parent=11 // pred_region
        _
      $region28: #{spike_driven_transformer_forward.8} parent=11 // pred_fallthru
        _
    $region12: #{spike_driven_transformer_forward.8} parent=5 // pred_fallthru
      _
    %p190 = scmp.lt.s32.totalorder %s11, 8
    // Predicated region
    $region29: #{spike_driven_transformer_forward.8} parent=5 // pred_check
      %p191 = pneg %p190
    $region30: #{spike_driven_transformer_forward.8} parent=5 // pred_check_branch
      %193 = sbr.rel (%p191) target = $region32
    $region31: #{spike_driven_transformer_forward.8} parent=5 // pred_region
      // Predicated region
      $region33: #{spike_driven_transformer_forward.8} parent=31 // pred_check
        %p194 = pneg %p45
      $region34: #{spike_driven_transformer_forward.8} parent=31 // pred_check_branch
        %196 = sbr.rel (%p194) target = $region36
      $region35: #{spike_driven_transformer_forward.8} parent=31 // pred_region
        %p197 = scmp.lt.s32.totalorder %s19, 3
        %s198 = scalar_select %p197, %s19, 3
        %p199 = scmp.lt.s32.totalorder %s18, 1
        %s200 = scalar_select %p199, %s18, 1
        %s201 = smul.addr %s198, 2
        %s202 = sadd.s32 %s200, %s201
        %s203 = smul.addr %s202, 4
        %s204 = scalar_lea.vmem %s0, %s203
      $region36: #{spike_driven_transformer_forward.8} parent=31 // pred_fallthru
        _
    $region32: #{spike_driven_transformer_forward.8} parent=5 // pred_fallthru
      _
    %p205 = scmp.le.s32.totalorder 1, %s11
    %p206 = scmp.lt.s32.totalorder %s11, 9
    %p207 = pnand %p205, %p206
    %p208 = pneg %p207
    // Predicated region
    $region37: #{spike_driven_transformer_forward.8} parent=5 // pred_check
      _
    $region38: #{spike_driven_transformer_forward.8} parent=5 // pred_check_branch
      %210 = sbr.rel (%p207) target = $region40
    $region39: #{spike_driven_transformer_forward.8} parent=5 // pred_region
      %s211 = ssub.s32 %s11, 1
      %p212 = scmp.lt.s32.totalorder %s21, 3
      %s213 = scalar_select %p212, %s21, 3
      %p214 = scmp.lt.s32.totalorder %s20, 1
      %s215 = scalar_select %p214, %s20, 1
      %s216 = smul.addr %s213, 2
      %s217 = sadd.s32 %s215, %s216
      %s218 = smul.addr %s217, 4
      %s219 = scalar_lea.vmem %s0, %s218
      %p220 = pneg %p51
      %p221 = pneg %p48
      %p222 = pneg %p72
      %p223 = pneg %p69
      %p224 = pneg %p93
      %p225 = pneg %p90
      %p226 = pneg %p114
      %p227 = pneg %p111
      %p228 = pneg %p135
      %p229 = pneg %p132
      %p230 = pneg %p163
      %p231 = pneg %p160
      %p232 = scmp.lt.s32.totalorder %s21, 3
      %s233 = scalar_select %p232, %s21, 3
      %p234 = scmp.lt.s32.totalorder %s20, 1
      %s235 = scalar_select %p234, %s20, 1
      %s236 = smul.addr %s233, 2
      %s237 = sadd.s32 %s235, %s236
      %s238 = smul.addr %s237, 4
      %s239 = scalar_lea.vmem %s5, %s238
      %p240 = scmp.lt.s32.totalorder %s21, 3
      %s241 = scalar_select %p240, %s21, 3
      %p242 = scmp.lt.s32.totalorder %s20, 1
      %s243 = scalar_select %p242, %s20, 1
      %s244 = smul.addr %s241, 2
      %s245 = sadd.s32 %s243, %s244
      %s246 = smul.addr %s245, 4
      %s247 = scalar_lea.vmem %s0, %s246
      %p248 = scmp.lt.s32.totalorder %s21, 3
      %s249 = scalar_select %p248, %s21, 3
      %p250 = scmp.lt.s32.totalorder %s20, 1
      %s251 = scalar_select %p250, %s20, 1
      %s252 = smul.addr %s249, 2
      %s253 = sadd.s32 %s251, %s252
      %s254 = smul.addr %s253, 4
      %s255 = scalar_lea.vmem %s5, %s254
      %p257 = scmp.eq.s32.totalorder %s21, 0
      // Predicated region
      $region41: #{spike_driven_transformer_forward.8} parent=39 // pred_check
        %p258 = pneg %p257
      $region42: #{spike_driven_transformer_forward.8} parent=39 // pred_check_branch
        %260 = sbr.rel (%p258) target = $region44
      $region43: #{spike_driven_transformer_forward.8} parent=39 // pred_region
        %261 = vst [vmem:[#allocation2] sm:$0xff] 0.0
        %262 = vst [vmem:[#allocation3] sm:$0xff] 0.0
        %263 = vst [vmem:[#allocation3 + $0x8] sm:$0xff] 0.0
        %264 = vst [vmem:[#allocation3 + $0x10] sm:$0xff] 0.0
        %265 = vst [vmem:[#allocation3 + $0x18] sm:$0xff] 0.0
      $region44: #{spike_driven_transformer_forward.8} parent=39 // pred_fallthru
        _
      %v266 = vld [vmem:[%s247] sm:$0xf]
      %v267 = vunpack.c.l.bf16 %v266
      %v268 = vld [vmem:[#allocation2] sm:$0xff]
      %v269 = vsub.f32 %v267, %v268
      %v270 = vmul.f32 %v269, 0.5
      %v271 = vadd.f32 %v268, %v270
      %vm272 = vcmp.ge.f32.partialorder %v271, 1.0
      %v273 = vsel %vm272, 1, 0
      %v274 = vcvt.s32.f32 %v273
      %v275 = vsub.f32 1.0, %v274
      %v276 = vmul.f32 %v271, %v275
      %277 = vst [vmem:[#allocation2] sm:$0xff] %v276
      %v278 = vpack.c.bf16 %v274, %v274
      %v279 = vld [vmem:[%s1] sm:$0xff]
      %v280 = vld [vmem:[%s1 + $0x8] sm:$0xff]
      %v281 = vld [vmem:[%s1 + $0x10] sm:$0xff]
      %v282 = vld [vmem:[%s1 + $0x18] sm:$0xff]
      %v283 = vld [vmem:[%s1 + $0x20] sm:$0xff]
      %v284 = vld [vmem:[%s1 + $0x28] sm:$0xff]
      %v285 = vld [vmem:[%s1 + $0x30] sm:$0xff]
      %v286 = vld [vmem:[%s1 + $0x38] sm:$0xff]
      %v287 = vld [vmem:[%s1 + $0x40] sm:$0xff]
      %v288 = vld [vmem:[%s1 + $0x48] sm:$0xff]
      %v289 = vld [vmem:[%s1 + $0x50] sm:$0xff]
      %v290 = vld [vmem:[%s1 + $0x58] sm:$0xff]
      %v291 = vld [vmem:[%s1 + $0x60] sm:$0xff]
      %v292 = vld [vmem:[%s1 + $0x68] sm:$0xff]
      %v293 = vld [vmem:[%s1 + $0x70] sm:$0xff]
      %v294 = vld [vmem:[%s1 + $0x78] sm:$0xff]
      %v295 = vld [vmem:[%s1 + $0x80] sm:$0xff]
      %v296 = vld [vmem:[%s1 + $0x88] sm:$0xff]
      %v297 = vld [vmem:[%s1 + $0x90] sm:$0xff]
      %v298 = vld [vmem:[%s1 + $0x98] sm:$0xff]
      %v299 = vld [vmem:[%s1 + $0xa0] sm:$0xff]
      %v300 = vld [vmem:[%s1 + $0xa8] sm:$0xff]
      %v301 = vld [vmem:[%s1 + $0xb0] sm:$0xff]
      %v302 = vld [vmem:[%s1 + $0xb8] sm:$0xff]
      %v303 = vld [vmem:[%s1 + $0xc0] sm:$0xff]
      %v304 = vld [vmem:[%s1 + $0xc8] sm:$0xff]
      %v305 = vld [vmem:[%s1 + $0xd0] sm:$0xff]
      %v306 = vld [vmem:[%s1 + $0xd8] sm:$0xff]
      %v307 = vld [vmem:[%s1 + $0xe0] sm:$0xff]
      %v308 = vld [vmem:[%s1 + $0xe8] sm:$0xff]
      %v309 = vld [vmem:[%s1 + $0xf0] sm:$0xff]
      %v310 = vld [vmem:[%s1 + $0xf8] sm:$0xff]
      %v311 = vld [vmem:[%s2] sm:$0xf]
      %v313 = vlaneseq
      %v314 = vshrl.u32 %v313, 7
      %v315 = vsub.s32 0, %v314
      %v316 = vrot.slane %v311, %v315
      %v317 = vlaneseq
      %v318 = vshrl.u32 %v317, 7
      %v319 = vsub.s32 1, %v318
      %v320 = vrot.slane %v311, %v319
      %v321 = vlaneseq
      %v322 = vshrl.u32 %v321, 7
      %v323 = vsub.s32 2, %v322
      %v324 = vrot.slane %v311, %v323
      %v325 = vlaneseq
      %v326 = vshrl.u32 %v325, 7
      %v327 = vsub.s32 3, %v326
      %v328 = vrot.slane %v311, %v327
      %v365 = vunpack.c.l.b16 %v279
      %v366 = vunpack.c.h.b16 %v279
      %v367 = vunpack.c.l.b16 %v280
      %v368 = vunpack.c.h.b16 %v280
      %v369 = vunpack.c.l.b16 %v281
      %v370 = vunpack.c.h.b16 %v281
      %v371 = vunpack.c.l.b16 %v282
      %v372 = vunpack.c.h.b16 %v282
      %v373 = vunpack.c.l.b16 %v283
      %v374 = vunpack.c.h.b16 %v283
      %v375 = vunpack.c.l.b16 %v284
      %v376 = vunpack.c.h.b16 %v284
      %v377 = vunpack.c.l.b16 %v285
      %v378 = vunpack.c.h.b16 %v285
      %v379 = vunpack.c.l.b16 %v286
      %v380 = vunpack.c.h.b16 %v286
      %v381 = vunpack.c.l.b16 %v287
      %v382 = vunpack.c.h.b16 %v287
      %v383 = vunpack.c.l.b16 %v288
      %v384 = vunpack.c.h.b16 %v288
      %v385 = vunpack.c.l.b16 %v289
      %v386 = vunpack.c.h.b16 %v289
      %v387 = vunpack.c.l.b16 %v290
      %v388 = vunpack.c.h.b16 %v290
      %v389 = vunpack.c.l.b16 %v291
      %v390 = vunpack.c.h.b16 %v291
      %v391 = vunpack.c.l.b16 %v292
      %v392 = vunpack.c.h.b16 %v292
      %v393 = vunpack.c.l.b16 %v293
      %v394 = vunpack.c.h.b16 %v293
      %v395 = vunpack.c.l.b16 %v294
      %v396 = vunpack.c.h.b16 %v294
      %v397 = vunpack.c.l.b16 %v295
      %v398 = vunpack.c.h.b16 %v295
      %v399 = vunpack.c.l.b16 %v296
      %v400 = vunpack.c.h.b16 %v296
      %v401 = vunpack.c.l.b16 %v297
      %v402 = vunpack.c.h.b16 %v297
      %v403 = vunpack.c.l.b16 %v298
      %v404 = vunpack.c.h.b16 %v298
      %v405 = vunpack.c.l.b16 %v299
      %v406 = vunpack.c.h.b16 %v299
      %v407 = vunpack.c.l.b16 %v300
      %v408 = vunpack.c.h.b16 %v300
      %v409 = vunpack.c.l.b16 %v301
      %v410 = vunpack.c.h.b16 %v301
      %v411 = vunpack.c.l.b16 %v302
      %v412 = vunpack.c.h.b16 %v302
      %v413 = vunpack.c.l.b16 %v303
      %v414 = vunpack.c.h.b16 %v303
      %v415 = vunpack.c.l.b16 %v304
      %v416 = vunpack.c.h.b16 %v304
      %v417 = vunpack.c.l.b16 %v305
      %v418 = vunpack.c.h.b16 %v305
      %v419 = vunpack.c.l.b16 %v306
      %v420 = vunpack.c.h.b16 %v306
      %v421 = vunpack.c.l.b16 %v307
      %v422 = vunpack.c.h.b16 %v307
      %v423 = vunpack.c.l.b16 %v308
      %v424 = vunpack.c.h.b16 %v308
      %v425 = vunpack.c.l.b16 %v309
      %v426 = vunpack.c.h.b16 %v309
      %v427 = vunpack.c.l.b16 %v310
      %v428 = vunpack.c.h.b16 %v310
      %v429 = vpack.c.b16 %v369, %v365
      %v430 = vpack.c.b16 %v370, %v366
      %v431 = vpack.c.b16 %v371, %v367
      %v432 = vpack.c.b16 %v372, %v368
      %v433 = vpack.c.b16 %v377, %v373
      %v434 = vpack.c.b16 %v378, %v374
      %v435 = vpack.c.b16 %v379, %v375
      %v436 = vpack.c.b16 %v380, %v376
      %v437 = vpack.c.b16 %v385, %v381
      %v438 = vpack.c.b16 %v386, %v382
      %v439 = vpack.c.b16 %v387, %v383
      %v440 = vpack.c.b16 %v388, %v384
      %v441 = vpack.c.b16 %v393, %v389
      %v442 = vpack.c.b16 %v394, %v390
      %v443 = vpack.c.b16 %v395, %v391
      %v444 = vpack.c.b16 %v396, %v392
      %v445 = vpack.c.b16 %v401, %v397
      %v446 = vpack.c.b16 %v402, %v398
      %v447 = vpack.c.b16 %v403, %v399
      %v448 = vpack.c.b16 %v404, %v400
      %v449 = vpack.c.b16 %v409, %v405
      %v450 = vpack.c.b16 %v410, %v406
      %v451 = vpack.c.b16 %v411, %v407
      %v452 = vpack.c.b16 %v412, %v408
      %v453 = vpack.c.b16 %v417, %v413
      %v454 = vpack.c.b16 %v418, %v414
      %v455 = vpack.c.b16 %v419, %v415
      %v456 = vpack.c.b16 %v420, %v416
      %v457 = vpack.c.b16 %v425, %v421
      %v458 = vpack.c.b16 %v426, %v422
      %v459 = vpack.c.b16 %v427, %v423
      %v460 = vpack.c.b16 %v428, %v424
      %493 = vmatprep.subr.bf16.mxu0 %v430
      %494 = vmatpush1.bf16.msra.mxu0 %v429
      %495 = vmatprep.subr.bf16.mxu0 %v434
      %496 = vmatpush1.bf16.msra.mxu0 %v433
      %497 = vmatprep.subr.bf16.mxu0 %v438
      %498 = vmatpush1.bf16.msra.mxu0 %v437
      %499 = vmatprep.subr.bf16.mxu0 %v442
      %500 = vmatpush1.bf16.msra.mxu0 %v441
      %501 = vmatprep.subr.bf16.mxu0 %v446
      %502 = vmatpush1.bf16.msra.mxu0 %v445
      %503 = vmatprep.subr.bf16.mxu0 %v450
      %504 = vmatpush1.bf16.msra.mxu0 %v449
      %505 = vmatprep.subr.bf16.mxu0 %v454
      %506 = vmatpush1.bf16.msra.mxu0 %v453
      %507 = vmatprep.subr.bf16.mxu0 %v458
      %508 = vmatpush1.bf16.msra.mxu0 %v457
      %509 = vmatprep.subr.bf16.mxu0 0
      %510 = vmatpush1.bf16.msra.mxu0 0
      %511 = vmatprep.subr.bf16.mxu0 0
      %512 = vmatpush1.bf16.msra.mxu0 0
      %513 = vmatprep.subr.bf16.mxu0 0
      %514 = vmatpush1.bf16.msra.mxu0 0
      %515 = vmatprep.subr.bf16.mxu0 0
      %516 = vmatpush1.bf16.msra.mxu0 0
      %517 = vmatprep.subr.bf16.mxu0 0
      %518 = vmatpush1.bf16.msra.mxu0 0
      %519 = vmatprep.subr.bf16.mxu0 0
      %520 = vmatpush1.bf16.msra.mxu0 0
      %521 = vmatprep.subr.bf16.mxu0 0
      %522 = vmatpush1.bf16.msra.mxu0 0
      %523 = vmatprep.subr.bf16.mxu0 0
      %524 = vmatpush1.bf16.msra.mxu0 0
      %525 = vmatprep.mubr.bf16.mxu0 0
      %526 = vmatmul.mubr.bf16.gmra.mrb[0].mxu0 %v278
      %v527 = vpop.f32.mrb[0].mxu0
      %v528 = vadd.f32 %v316, %v527
      %v529 = vpop.f32.mrb[0].mxu0
      %v530 = vadd.f32 %v320, %v529
      %v531 = vpop.f32.mrb[0].mxu0
      %v532 = vpop.f32.mrb[0].mxu0
      %533 = vdwg.mxu0
      %534 = vmatprep.subr.bf16.mxu0 %v432
      %535 = vmatpush1.bf16.msra.mxu0 %v431
      %536 = vmatprep.subr.bf16.mxu0 %v436
      %537 = vmatpush1.bf16.msra.mxu0 %v435
      %538 = vmatprep.subr.bf16.mxu0 %v440
      %539 = vmatpush1.bf16.msra.mxu0 %v439
      %540 = vmatprep.subr.bf16.mxu0 %v444
      %541 = vmatpush1.bf16.msra.mxu0 %v443
      %542 = vmatprep.subr.bf16.mxu0 %v448
      %543 = vmatpush1.bf16.msra.mxu0 %v447
      %544 = vmatprep.subr.bf16.mxu0 %v452
      %545 = vmatpush1.bf16.msra.mxu0 %v451
      %546 = vmatprep.subr.bf16.mxu0 %v456
      %547 = vmatpush1.bf16.msra.mxu0 %v455
      %548 = vmatprep.subr.bf16.mxu0 %v460
      %549 = vmatpush1.bf16.msra.mxu0 %v459
      %550 = vmatprep.subr.bf16.mxu0 0
      %551 = vmatpush1.bf16.msra.mxu0 0
      %552 = vmatprep.subr.bf16.mxu0 0
      %553 = vmatpush1.bf16.msra.mxu0 0
      %554 = vmatprep.subr.bf16.mxu0 0
      %555 = vmatpush1.bf16.msra.mxu0 0
      %556 = vmatprep.subr.bf16.mxu0 0
      %557 = vmatpush1.bf16.msra.mxu0 0
      %558 = vmatprep.subr.bf16.mxu0 0
      %559 = vmatpush1.bf16.msra.mxu0 0
      %560 = vmatprep.subr.bf16.mxu0 0
      %561 = vmatpush1.bf16.msra.mxu0 0
      %562 = vmatprep.subr.bf16.mxu0 0
      %563 = vmatpush1.bf16.msra.mxu0 0
      %564 = vmatprep.subr.bf16.mxu0 0
      %565 = vmatpush1.bf16.msra.mxu0 0
      %566 = vmatprep.mubr.bf16.mxu0 0
      %567 = vmatmul.mubr.bf16.gmra.mrb[0].mxu0 %v278
      %v568 = vpop.f32.mrb[0].mxu0
      %v569 = vadd.f32 %v324, %v568
      %v570 = vpop.f32.mrb[0].mxu0
      %v571 = vadd.f32 %v328, %v570
      %v572 = vpop.f32.mrb[0].mxu0
      %v573 = vpop.f32.mrb[0].mxu0
      %574 = vdwg.mxu0
      %v575 = vld [vmem:[#allocation3] sm:$0xff]
      %v576 = vld [vmem:[#allocation3 + $0x8] sm:$0xff]
      %v577 = vld [vmem:[#allocation3 + $0x10] sm:$0xff]
      %v578 = vld [vmem:[#allocation3 + $0x18] sm:$0xff]
      %v579 = vsub.f32 %v528, %v575
      %v580 = vsub.f32 %v530, %v576
      %v581 = vsub.f32 %v569, %v577
      %v582 = vsub.f32 %v571, %v578
      %v583 = vmul.f32 %v579, 0.5
      %v584 = vmul.f32 %v580, 0.5
      %v585 = vmul.f32 %v581, 0.5
      %v586 = vmul.f32 %v582, 0.5
      %v587 = vadd.f32 %v575, %v583
      %v588 = vadd.f32 %v576, %v584
      %v589 = vadd.f32 %v577, %v585
      %v590 = vadd.f32 %v578, %v586
      %vm591 = vcmp.ge.f32.partialorder %v587, 1.0
      %vm592 = vcmp.ge.f32.partialorder %v588, 1.0
      %vm593 = vcmp.ge.f32.partialorder %v589, 1.0
      %vm594 = vcmp.ge.f32.partialorder %v590, 1.0
      %v595 = vsel %vm591, 1, 0
      %v596 = vsel %vm592, 1, 0
      %v597 = vsel %vm593, 1, 0
      %v598 = vsel %vm594, 1, 0
      %v599 = vcvt.s32.f32 %v595
      %v600 = vcvt.s32.f32 %v596
      %v601 = vcvt.s32.f32 %v597
      %v602 = vcvt.s32.f32 %v598
      %v603 = vsub.f32 1.0, %v599
      %v604 = vsub.f32 1.0, %v600
      %v605 = vsub.f32 1.0, %v601
      %v606 = vsub.f32 1.0, %v602
      %v607 = vmul.f32 %v587, %v603
      %v608 = vmul.f32 %v588, %v604
      %v609 = vmul.f32 %v589, %v605
      %v610 = vmul.f32 %v590, %v606
      %611 = vst [vmem:[#allocation3] sm:$0xff] %v607
      %612 = vst [vmem:[#allocation3 + $0x8] sm:$0xff] %v608
      %613 = vst [vmem:[#allocation3 + $0x10] sm:$0xff] %v609
      %614 = vst [vmem:[#allocation3 + $0x18] sm:$0xff] %v610
      %v615 = vpack.c.bf16 %v599, %v599
      %v616 = vpack.c.bf16 %v600, %v600
      %v617 = vpack.c.bf16 %v601, %v601
      %v618 = vpack.c.bf16 %v602, %v602
      %v619 = vld [vmem:[%s3] sm:$0xf]
      %v620 = vld [vmem:[%s3 + $0x4] sm:$0xf]
      %v621 = vld [vmem:[%s3 + $0x8] sm:$0xf]
      %v622 = vld [vmem:[%s3 + $0xc] sm:$0xf]
      %v623 = vld [vmem:[%s3 + $0x10] sm:$0xf]
      %v624 = vld [vmem:[%s3 + $0x14] sm:$0xf]
      %v625 = vld [vmem:[%s3 + $0x18] sm:$0xf]
      %v626 = vld [vmem:[%s3 + $0x1c] sm:$0xf]
      %v627 = vld [vmem:[%s3 + $0x20] sm:$0xf]
      %v628 = vld [vmem:[%s3 + $0x24] sm:$0xf]
      %v629 = vld [vmem:[%s3 + $0x28] sm:$0xf]
      %v630 = vld [vmem:[%s3 + $0x2c] sm:$0xf]
      %v631 = vld [vmem:[%s3 + $0x30] sm:$0xf]
      %v632 = vld [vmem:[%s3 + $0x34] sm:$0xf]
      %v633 = vld [vmem:[%s3 + $0x38] sm:$0xf]
      %v634 = vld [vmem:[%s3 + $0x3c] sm:$0xf]
      %v635 = vld [vmem:[%s3 + $0x40] sm:$0xf]
      %v636 = vld [vmem:[%s3 + $0x44] sm:$0xf]
      %v637 = vld [vmem:[%s3 + $0x48] sm:$0xf]
      %v638 = vld [vmem:[%s3 + $0x4c] sm:$0xf]
      %v639 = vld [vmem:[%s3 + $0x50] sm:$0xf]
      %v640 = vld [vmem:[%s3 + $0x54] sm:$0xf]
      %v641 = vld [vmem:[%s3 + $0x58] sm:$0xf]
      %v642 = vld [vmem:[%s3 + $0x5c] sm:$0xf]
      %v643 = vld [vmem:[%s3 + $0x60] sm:$0xf]
      %v644 = vld [vmem:[%s3 + $0x64] sm:$0xf]
      %v645 = vld [vmem:[%s3 + $0x68] sm:$0xf]
      %v646 = vld [vmem:[%s3 + $0x6c] sm:$0xf]
      %v647 = vld [vmem:[%s3 + $0x70] sm:$0xf]
      %v648 = vld [vmem:[%s3 + $0x74] sm:$0xf]
      %v649 = vld [vmem:[%s3 + $0x78] sm:$0xf]
      %v650 = vld [vmem:[%s3 + $0x7c] sm:$0xf]
      %v651 = vld [vmem:[%s3 + $0x80] sm:$0xf]
      %v652 = vld [vmem:[%s3 + $0x84] sm:$0xf]
      %v653 = vld [vmem:[%s3 + $0x88] sm:$0xf]
      %v654 = vld [vmem:[%s3 + $0x8c] sm:$0xf]
      %v655 = vld [vmem:[%s3 + $0x90] sm:$0xf]
      %v656 = vld [vmem:[%s3 + $0x94] sm:$0xf]
      %v657 = vld [vmem:[%s3 + $0x98] sm:$0xf]
      %v658 = vld [vmem:[%s3 + $0x9c] sm:$0xf]
      %v659 = vld [vmem:[%s3 + $0xa0] sm:$0xf]
      %v660 = vld [vmem:[%s3 + $0xa4] sm:$0xf]
      %v661 = vld [vmem:[%s3 + $0xa8] sm:$0xf]
      %v662 = vld [vmem:[%s3 + $0xac] sm:$0xf]
      %v663 = vld [vmem:[%s3 + $0xb0] sm:$0xf]
      %v664 = vld [vmem:[%s3 + $0xb4] sm:$0xf]
      %v665 = vld [vmem:[%s3 + $0xb8] sm:$0xf]
      %v666 = vld [vmem:[%s3 + $0xbc] sm:$0xf]
      %v667 = vld [vmem:[%s3 + $0xc0] sm:$0xf]
      %v668 = vld [vmem:[%s3 + $0xc4] sm:$0xf]
      %v669 = vld [vmem:[%s3 + $0xc8] sm:$0xf]
      %v670 = vld [vmem:[%s3 + $0xcc] sm:$0xf]
      %v671 = vld [vmem:[%s3 + $0xd0] sm:$0xf]
      %v672 = vld [vmem:[%s3 + $0xd4] sm:$0xf]
      %v673 = vld [vmem:[%s3 + $0xd8] sm:$0xf]
      %v674 = vld [vmem:[%s3 + $0xdc] sm:$0xf]
      %v675 = vld [vmem:[%s3 + $0xe0] sm:$0xf]
      %v676 = vld [vmem:[%s3 + $0xe4] sm:$0xf]
      %v677 = vld [vmem:[%s3 + $0xe8] sm:$0xf]
      %v678 = vld [vmem:[%s3 + $0xec] sm:$0xf]
      %v679 = vld [vmem:[%s3 + $0xf0] sm:$0xf]
      %v680 = vld [vmem:[%s3 + $0xf4] sm:$0xf]
      %v681 = vld [vmem:[%s3 + $0xf8] sm:$0xf]
      %v682 = vld [vmem:[%s3 + $0xfc] sm:$0xf]
      %v683 = vld [vmem:[%s4] sm:$0x1]
      %v685 = vlaneseq
      %v686 = vshrl.u32 %v685, 7
      %v687 = vsub.s32 0, %v686
      %v688 = vrot.slane %v683, %v687
      %v754 = vunpack.c.l.b16 %v619
      %v755 = vunpack.c.l.b16 %v620
      %v756 = vunpack.c.l.b16 %v621
      %v757 = vunpack.c.l.b16 %v622
      %v758 = vunpack.c.l.b16 %v623
      %v759 = vunpack.c.l.b16 %v624
      %v760 = vunpack.c.l.b16 %v625
      %v761 = vunpack.c.l.b16 %v626
      %v762 = vunpack.c.l.b16 %v627
      %v763 = vunpack.c.l.b16 %v628
      %v764 = vunpack.c.l.b16 %v629
      %v765 = vunpack.c.l.b16 %v630
      %v766 = vunpack.c.l.b16 %v631
      %v767 = vunpack.c.l.b16 %v632
      %v768 = vunpack.c.l.b16 %v633
      %v769 = vunpack.c.l.b16 %v634
      %v770 = vunpack.c.l.b16 %v635
      %v771 = vunpack.c.l.b16 %v636
      %v772 = vunpack.c.l.b16 %v637
      %v773 = vunpack.c.l.b16 %v638
      %v774 = vunpack.c.l.b16 %v639
      %v775 = vunpack.c.l.b16 %v640
      %v776 = vunpack.c.l.b16 %v641
      %v777 = vunpack.c.l.b16 %v642
      %v778 = vunpack.c.l.b16 %v643
      %v779 = vunpack.c.l.b16 %v644
      %v780 = vunpack.c.l.b16 %v645
      %v781 = vunpack.c.l.b16 %v646
      %v782 = vunpack.c.l.b16 %v647
      %v783 = vunpack.c.l.b16 %v648
      %v784 = vunpack.c.l.b16 %v649
      %v785 = vunpack.c.l.b16 %v650
      %v786 = vunpack.c.l.b16 %v651
      %v787 = vunpack.c.l.b16 %v652
      %v788 = vunpack.c.l.b16 %v653
      %v789 = vunpack.c.l.b16 %v654
      %v790 = vunpack.c.l.b16 %v655
      %v791 = vunpack.c.l.b16 %v656
      %v792 = vunpack.c.l.b16 %v657
      %v793 = vunpack.c.l.b16 %v658
      %v794 = vunpack.c.l.b16 %v659
      %v795 = vunpack.c.l.b16 %v660
      %v796 = vunpack.c.l.b16 %v661
      %v797 = vunpack.c.l.b16 %v662
      %v798 = vunpack.c.l.b16 %v663
      %v799 = vunpack.c.l.b16 %v664
      %v800 = vunpack.c.l.b16 %v665
      %v801 = vunpack.c.l.b16 %v666
      %v802 = vunpack.c.l.b16 %v667
      %v803 = vunpack.c.l.b16 %v668
      %v804 = vunpack.c.l.b16 %v669
      %v805 = vunpack.c.l.b16 %v670
      %v806 = vunpack.c.l.b16 %v671
      %v807 = vunpack.c.l.b16 %v672
      %v808 = vunpack.c.l.b16 %v673
      %v809 = vunpack.c.l.b16 %v674
      %v810 = vunpack.c.l.b16 %v675
      %v811 = vunpack.c.l.b16 %v676
      %v812 = vunpack.c.l.b16 %v677
      %v813 = vunpack.c.l.b16 %v678
      %v814 = vunpack.c.l.b16 %v679
      %v815 = vunpack.c.l.b16 %v680
      %v816 = vunpack.c.l.b16 %v681
      %v817 = vunpack.c.l.b16 %v682
      %v818 = vpack.c.b16 %v755, %v754
      %v819 = vpack.c.b16 %v757, %v756
      %v820 = vpack.c.b16 %v759, %v758
      %v821 = vpack.c.b16 %v761, %v760
      %v822 = vpack.c.b16 %v763, %v762
      %v823 = vpack.c.b16 %v765, %v764
      %v824 = vpack.c.b16 %v767, %v766
      %v825 = vpack.c.b16 %v769, %v768
      %v826 = vpack.c.b16 %v771, %v770
      %v827 = vpack.c.b16 %v773, %v772
      %v828 = vpack.c.b16 %v775, %v774
      %v829 = vpack.c.b16 %v777, %v776
      %v830 = vpack.c.b16 %v779, %v778
      %v831 = vpack.c.b16 %v781, %v780
      %v832 = vpack.c.b16 %v783, %v782
      %v833 = vpack.c.b16 %v785, %v784
      %v834 = vpack.c.b16 %v787, %v786
      %v835 = vpack.c.b16 %v789, %v788
      %v836 = vpack.c.b16 %v791, %v790
      %v837 = vpack.c.b16 %v793, %v792
      %v838 = vpack.c.b16 %v795, %v794
      %v839 = vpack.c.b16 %v797, %v796
      %v840 = vpack.c.b16 %v799, %v798
      %v841 = vpack.c.b16 %v801, %v800
      %v842 = vpack.c.b16 %v803, %v802
      %v843 = vpack.c.b16 %v805, %v804
      %v844 = vpack.c.b16 %v807, %v806
      %v845 = vpack.c.b16 %v809, %v808
      %v846 = vpack.c.b16 %v811, %v810
      %v847 = vpack.c.b16 %v813, %v812
      %v848 = vpack.c.b16 %v815, %v814
      %v849 = vpack.c.b16 %v817, %v816
      %882 = vmatprep.subr.bf16.mxu0 0
      %883 = vmatpush1.bf16.msra.mxu0 %v818
      %884 = vmatprep.subr.bf16.mxu0 0
      %885 = vmatpush1.bf16.msra.mxu0 %v819
      %886 = vmatprep.subr.bf16.mxu0 0
      %887 = vmatpush1.bf16.msra.mxu0 %v820
      %888 = vmatprep.subr.bf16.mxu0 0
      %889 = vmatpush1.bf16.msra.mxu0 %v821
      %890 = vmatprep.subr.bf16.mxu0 0
      %891 = vmatpush1.bf16.msra.mxu0 %v822
      %892 = vmatprep.subr.bf16.mxu0 0
      %893 = vmatpush1.bf16.msra.mxu0 %v823
      %894 = vmatprep.subr.bf16.mxu0 0
      %895 = vmatpush1.bf16.msra.mxu0 %v824
      %896 = vmatprep.subr.bf16.mxu0 0
      %897 = vmatpush1.bf16.msra.mxu0 %v825
      %898 = vmatprep.subr.bf16.mxu0 0
      %899 = vmatpush1.bf16.msra.mxu0 %v826
      %900 = vmatprep.subr.bf16.mxu0 0
      %901 = vmatpush1.bf16.msra.mxu0 %v827
      %902 = vmatprep.subr.bf16.mxu0 0
      %903 = vmatpush1.bf16.msra.mxu0 %v828
      %904 = vmatprep.subr.bf16.mxu0 0
      %905 = vmatpush1.bf16.msra.mxu0 %v829
      %906 = vmatprep.subr.bf16.mxu0 0
      %907 = vmatpush1.bf16.msra.mxu0 %v830
      %908 = vmatprep.subr.bf16.mxu0 0
      %909 = vmatpush1.bf16.msra.mxu0 %v831
      %910 = vmatprep.subr.bf16.mxu0 0
      %911 = vmatpush1.bf16.msra.mxu0 %v832
      %912 = vmatprep.subr.bf16.mxu0 0
      %913 = vmatpush1.bf16.msra.mxu0 %v833
      %914 = vmatprep.mubr.bf16.mxu0 %v616
      %915 = vmatmul.mubr.bf16.gmra.mrb[0].mxu0 %v615
      %v916 = vpop.f32.mrb[0].mxu0
      %v917 = vadd.f32 %v688, %v916
      %v918 = vpop.f32.mrb[0].mxu0
      %v919 = vpop.f32.mrb[0].mxu0
      %v920 = vpop.f32.mrb[0].mxu0
      %921 = vdwg.mxu0
      %922 = vmatprep.subr.bf16.mxu0 0
      %923 = vmatpush1.bf16.msra.mxu0 %v834
      %924 = vmatprep.subr.bf16.mxu0 0
      %925 = vmatpush1.bf16.msra.mxu0 %v835
      %926 = vmatprep.subr.bf16.mxu0 0
      %927 = vmatpush1.bf16.msra.mxu0 %v836
      %928 = vmatprep.subr.bf16.mxu0 0
      %929 = vmatpush1.bf16.msra.mxu0 %v837
      %930 = vmatprep.subr.bf16.mxu0 0
      %931 = vmatpush1.bf16.msra.mxu0 %v838
      %932 = vmatprep.subr.bf16.mxu0 0
      %933 = vmatpush1.bf16.msra.mxu0 %v839
      %934 = vmatprep.subr.bf16.mxu0 0
      %935 = vmatpush1.bf16.msra.mxu0 %v840
      %936 = vmatprep.subr.bf16.mxu0 0
      %937 = vmatpush1.bf16.msra.mxu0 %v841
      %938 = vmatprep.subr.bf16.mxu0 0
      %939 = vmatpush1.bf16.msra.mxu0 %v842
      %940 = vmatprep.subr.bf16.mxu0 0
      %941 = vmatpush1.bf16.msra.mxu0 %v843
      %942 = vmatprep.subr.bf16.mxu0 0
      %943 = vmatpush1.bf16.msra.mxu0 %v844
      %944 = vmatprep.subr.bf16.mxu0 0
      %945 = vmatpush1.bf16.msra.mxu0 %v845
      %946 = vmatprep.subr.bf16.mxu0 0
      %947 = vmatpush1.bf16.msra.mxu0 %v846
      %948 = vmatprep.subr.bf16.mxu0 0
      %949 = vmatpush1.bf16.msra.mxu0 %v847
      %950 = vmatprep.subr.bf16.mxu0 0
      %951 = vmatpush1.bf16.msra.mxu0 %v848
      %952 = vmatprep.subr.bf16.mxu0 0
      %953 = vmatpush1.bf16.msra.mxu0 %v849
      %954 = vmatprep.mubr.bf16.mxu0 %v618
      %955 = vmatmul.mubr.bf16.gmra.mrb[0].mxu0 %v617
      %v956 = vpop.f32.mrb[0].mxu0
      %v957 = vadd.f32 %v917, %v956
      %v958 = vpop.f32.mrb[0].mxu0
      %v959 = vpop.f32.mrb[0].mxu0
      %v960 = vpop.f32.mrb[0].mxu0
      %961 = vdwg.mxu0
      %v962 = vadd.f32 %v957, %v267
      %v963 = vpack.c.bf16 %v962, %v962
      %964 = vst [vmem:[%s255] sm:$0xf] %v963
      %p965 = scmp.lt.s32.totalorder %s21, 3
      %s966 = scalar_select %p965, %s21, 3
      %p967 = scmp.lt.s32.totalorder %s20, 1
      %s968 = scalar_select %p967, %s20, 1
      %s969 = smul.addr %s966, 2
      %s970 = sadd.s32 %s968, %s969
      %s971 = smul.addr %s970, 4
      %s972 = scalar_lea.vmem %s5, %s971
      // Predicated region
      $region45: #{spike_driven_transformer_forward.8} parent=39 // pred_check
        %p973 = pneg %p160
      $region46: #{spike_driven_transformer_forward.8} parent=39 // pred_check_branch
        %975 = sbr.rel (%p973) target = $region48
      $region47: #{spike_driven_transformer_forward.8} parent=39 // pred_region
        _
      $region48: #{spike_driven_transformer_forward.8} parent=39 // pred_fallthru
        _
    $region40: #{spike_driven_transformer_forward.8} parent=5 // pred_fallthru
      _
    %p976 = scmp.le.s32.totalorder 2, %s11
    // Predicated region
    $region49: #{spike_driven_transformer_forward.8} parent=5 // pred_check
      %p977 = pneg %p976
    $region50: #{spike_driven_transformer_forward.8} parent=5 // pred_check_branch
      %979 = sbr.rel (%p977) target = $region52
    $region51: #{spike_driven_transformer_forward.8} parent=5 // pred_region
      %s980 = ssub.s32 %s11, 2
      // Predicated region
      $region53: #{spike_driven_transformer_forward.8} parent=51 // pred_check
        %p981 = pneg %p166
      $region54: #{spike_driven_transformer_forward.8} parent=51 // pred_check_branch
        %983 = sbr.rel (%p981) target = $region56
      $region55: #{spike_driven_transformer_forward.8} parent=51 // pred_region
        %p984 = scmp.lt.s32.totalorder %s23, 3
        %s985 = scalar_select %p984, %s23, 3
        %p986 = scmp.lt.s32.totalorder %s22, 1
        %s987 = scalar_select %p986, %s22, 1
        %s988 = smul.addr %s985, 2
        %s989 = sadd.s32 %s987, %s988
        %s990 = smul.addr %s989, 4
        %s991 = scalar_lea.vmem %s5, %s990
      $region56: #{spike_driven_transformer_forward.8} parent=51 // pred_fallthru
        _
    $region52: #{spike_driven_transformer_forward.8} parent=5 // pred_fallthru
      _
  $region6: #{spike_driven_transformer_forward.8} parent=0 // loop_footer
    %s15 = sadd.s32 1, %s11
  $region7: #{spike_driven_transformer_forward.8} parent=0 // loop_footer_branch
    %10 = sbr.rel target = $region3
  $region8: #{spike_driven_transformer_forward.8} parent=0 // loop_exit
    _

// kernel: spike_driven_transformer_forward.11
$region0: #{spike_driven_transformer_forward.11}
  #allocation0 [shape = 'u32[]', space=smem, size = 0x4, offset = 0x4, fixed_abs, tag = 'smem constant byte address 0x4 - core index']
  #allocation1 [shape = 'u32[144,128]{1,0:T(1,128)}', space=vmem, size = 0x12000, scoped, tag = 'internal scratch']
  #allocation2 [shape = 'f32[2,128]{1,0:T(2,128)}', space=vmem, size = 0x400, scoped, tag = 'scratch operand']
  %s0 = inlined_call_operand.vmem [shape: bf16[4,2,8,128], index: 0, kind: input, shape index: {}]
  %s1 = inlined_call_operand.vmem [shape: bf16[128,128], index: 1, kind: input, shape index: {}]
  %s2 = inlined_call_operand.vmem [shape: f32[1,128], index: 2, kind: input, shape index: {}]
  %s3 = inlined_call_operand.hbm [shape: f32[4,2,128], index: 3, kind: output, shape index: {}]
  %s4 = sld [smem:[#allocation0]]
  $region49: #{spike_driven_transformer_forward.11} parent=0
    _
  %s6 = ssub.s32 1, %s4
  %s7 = scalar_select 0, %s6, %s4
  $region1: #{spike_driven_transformer_forward.11} parent=0
    #allocation3 [shape = 'u8[2048]{0}', space=vmem, size = 0x800, scoped, tag = 'output window, operand 0']
    #allocation4 [shape = 's32[2]{0}', space=sflag, size = 0x8, scoped, tag = 'scoped memory for spike_driven_transformer_forward.11']
    %8 = vsyncpa [#allocation4], 0
    %s9 = scalar_lea.sflag [#allocation4], 1
    %10 = vsyncpa %s9, 0
    loop: start=0, step=1, limit=6
    $region2: #{spike_driven_transformer_forward.11} parent=1 // loop_pre_header
      _
    $region3: #{spike_driven_transformer_forward.11} parent=1 // loop_header
      %s12 = sphi 0, %s16
      %p13 = scmp.ge.s32.totalorder %s12, 6
      %s22 = sphi 0, %s24
      %s25 = sphi 0, %s22
      %s26 = sphi 0, %s25
      %s42 = sphi 0, %s26
      %s46 = sphi 0, %s46
      %s48 = sphi 0, %s46
      %s49 = sphi 0, %s48
      %s63 = sphi 0, %s49
      %s67 = sphi 0, %s67
      %s69 = sphi 0, %s67
      %s70 = sphi 0, %s69
      %s84 = sphi 0, %s70
      %s90 = sphi 0, %s92
      %s93 = sphi 0, %s90
      %s94 = sphi 0, %s93
      %s110 = sphi 0, %s94
    $region4: #{spike_driven_transformer_forward.11} parent=1 // loop_header_branch
      %15 = sbr.rel (%p13) target = $region8
    $region5: #{spike_driven_transformer_forward.11} parent=1 // loop_body
      %s17 = ssub.s32 %s12, 1
      %s18 = ssub.s32 %s12, 2
      %s19 = sadd.s32 %s12, 1
      %s20 = ssub.s32 %s12, %s19
      %p21 = scmp.eq.s32.totalorder %s20, 0
      %s23 = sadd.s32 %s22, 1
      %s24 = scalar_select %p21, %s22, %s23
      %p27 = pneg %p21
      %p28 = scmp.eq.s32.totalorder %s12, 3
      %p29 = por %p27, %p28
      %p30 = scmp.ne.s32.totalorder %s22, %s25
      %p31 = scmp.eq.s32.totalorder %s12, 0
      %p32 = por %p30, %p31
      %p33 = scmp.ne.s32.totalorder %s22, %s25
      %p34 = scmp.eq.s32.totalorder %s17, 3
      %p35 = por %p33, %p34
      %p36 = scmp.ne.s32.totalorder %s25, %s26
      %p37 = scmp.eq.s32.totalorder %s17, 0
      %p38 = por %p36, %p37
      %p39 = scmp.ne.s32.totalorder %s25, %s26
      %p40 = scmp.eq.s32.totalorder %s18, 3
      %p41 = por %p39, %p40
      %p43 = scmp.ne.s32.totalorder %s26, %s42
      %p44 = scmp.eq.s32.totalorder %s18, 0
      %p45 = por %p43, %p44
      %s47 = sadd.s32 %s46, 1
      %p50 = scmp.eq.s32.totalorder %s12, 3
      %p51 = scmp.ne.s32.totalorder %s46, %s48
      %p52 = scmp.eq.s32.totalorder %s12, 0
      %p53 = por %p51, %p52
      %p54 = scmp.ne.s32.totalorder %s46, %s48
      %p55 = scmp.eq.s32.totalorder %s17, 3
      %p56 = por %p54, %p55
      %p57 = scmp.ne.s32.totalorder %s48, %s49
      %p58 = scmp.eq.s32.totalorder %s17, 0
      %p59 = por %p57, %p58
      %p60 = scmp.ne.s32.totalorder %s48, %s49
      %p61 = scmp.eq.s32.totalorder %s18, 3
      %p62 = por %p60, %p61
      %p64 = scmp.ne.s32.totalorder %s49, %s63
      %p65 = scmp.eq.s32.totalorder %s18, 0
      %p66 = por %p64, %p65
      %s68 = sadd.s32 %s67, 1
      %p71 = scmp.eq.s32.totalorder %s12, 3
      %p72 = scmp.ne.s32.totalorder %s67, %s69
      %p73 = scmp.eq.s32.totalorder %s12, 0
      %p74 = por %p72, %p73
      %p75 = scmp.ne.s32.totalorder %s67, %s69
      %p76 = scmp.eq.s32.totalorder %s17, 3
      %p77 = por %p75, %p76
      %p78 = scmp.ne.s32.totalorder %s69, %s70
      %p79 = scmp.eq.s32.totalorder %s17, 0
      %p80 = por %p78, %p79
      %p81 = scmp.ne.s32.totalorder %s69, %s70
      %p82 = scmp.eq.s32.totalorder %s18, 3
      %p83 = por %p81, %p82
      %p85 = scmp.ne.s32.totalorder %s70, %s84
      %p86 = scmp.eq.s32.totalorder %s18, 0
      %p87 = por %p85, %p86
      %s88 = ssub.s32 %s12, %s19
      %p89 = scmp.eq.s32.totalorder %s88, 0
      %s91 = sadd.s32 %s90, 1
      %s92 = scalar_select %p89, %s90, %s91
      %p95 = pneg %p89
      %p96 = scmp.eq.s32.totalorder %s12, 3
      %p97 = por %p95, %p96
      %p98 = scmp.ne.s32.totalorder %s90, %s93
      %p99 = scmp.eq.s32.totalorder %s12, 0
      %p100 = por %p98, %p99
      %p101 = scmp.ne.s32.totalorder %s90, %s93
      %p102 = scmp.eq.s32.totalorder %s17, 3
      %p103 = por %p101, %p102
      %p104 = scmp.ne.s32.totalorder %s93, %s94
      %p105 = scmp.eq.s32.totalorder %s17, 0
      %p106 = por %p104, %p105
      %p107 = scmp.ne.s32.totalorder %s93, %s94
      %p108 = scmp.eq.s32.totalorder %s18, 3
      %p109 = por %p107, %p108
      %p111 = scmp.ne.s32.totalorder %s94, %s110
      %p112 = scmp.eq.s32.totalorder %s18, 0
      %p113 = por %p111, %p112
      %p114 = scmp.le.s32.totalorder 1, %s12
      %p115 = scmp.lt.s32.totalorder %s12, 5
      %p116 = pnand %p114, %p115
      %p117 = pneg %p116
      // Predicated region
      $region9: #{spike_driven_transformer_forward.11} parent=5 // pred_check
        _
      $region10: #{spike_driven_transformer_forward.11} parent=5 // pred_check_branch
        %119 = sbr.rel (%p116) target = $region12
      $region11: #{spike_driven_transformer_forward.11} parent=5 // pred_region
        %s120 = ssub.s32 %s12, 1
        // Predicated region
        $region13: #{spike_driven_transformer_forward.11} parent=11 // pred_check
          %p121 = pneg %p59
        $region14: #{spike_driven_transformer_forward.11} parent=11 // pred_check_branch
          %123 = sbr.rel (%p121) target = $region16
        $region15: #{spike_driven_transformer_forward.11} parent=11 // pred_region
          _
        $region16: #{spike_driven_transformer_forward.11} parent=11 // pred_fallthru
          _
        // Predicated region
        $region17: #{spike_driven_transformer_forward.11} parent=11 // pred_check
          %p124 = pneg %p80
        $region18: #{spike_driven_transformer_forward.11} parent=11 // pred_check_branch
          %126 = sbr.rel (%p124) target = $region20
        $region19: #{spike_driven_transformer_forward.11} parent=11 // pred_region
          _
        $region20: #{spike_driven_transformer_forward.11} parent=11 // pred_fallthru
          _
      $region12: #{spike_driven_transformer_forward.11} parent=5 // pred_fallthru
        _
      %p127 = scmp.lt.s32.totalorder %s12, 4
      // Predicated region
      $region21: #{spike_driven_transformer_forward.11} parent=5 // pred_check
        %p128 = pneg %p127
      $region22: #{spike_driven_transformer_forward.11} parent=5 // pred_check_branch
        %130 = sbr.rel (%p128) target = $region24
      $region23: #{spike_driven_transformer_forward.11} parent=5 // pred_region
        // Predicated region
        $region25: #{spike_driven_transformer_forward.11} parent=23 // pred_check
          %p131 = pneg %p32
        $region26: #{spike_driven_transformer_forward.11} parent=23 // pred_check_branch
          %133 = sbr.rel (%p131) target = $region28
        $region27: #{spike_driven_transformer_forward.11} parent=23 // pred_region
          %p134 = scmp.lt.s32.totalorder %s12, 3
          %s135 = scalar_select %p134, %s12, 3
          %s136 = smul.addr %s135, 2
          %s137 = smul.addr %s136, 4
          %s138 = scalar_lea.vmem %s0, %s137
        $region28: #{spike_driven_transformer_forward.11} parent=23 // pred_fallthru
          _
      $region24: #{spike_driven_transformer_forward.11} parent=5 // pred_fallthru
        _
      %p139 = scmp.le.s32.totalorder 1, %s12
      %p140 = scmp.lt.s32.totalorder %s12, 5
      %p141 = pnand %p139, %p140
      %p142 = pneg %p141
      // Predicated region
      $region29: #{spike_driven_transformer_forward.11} parent=5 // pred_check
        _
      $region30: #{spike_driven_transformer_forward.11} parent=5 // pred_check_branch
        %144 = sbr.rel (%p141) target = $region32
      $region31: #{spike_driven_transformer_forward.11} parent=5 // pred_region
        %s145 = ssub.s32 %s12, 1
        %p146 = scmp.lt.s32.totalorder %s17, 3
        %s147 = scalar_select %p146, %s17, 3
        %s148 = smul.addr %s147, 2
        %s149 = smul.addr %s148, 4
        %s150 = scalar_lea.vmem %s0, %s149
        %p151 = pneg %p38
        %p152 = pneg %p35
        %p153 = pneg %p59
        %p154 = pneg %p56
        %p155 = pneg %p80
        %p156 = pneg %p77
        %p157 = pneg %p106
        %p158 = pneg %p103
        %s159 = sand.u32 %s93, 1
        %s160 = scalar_lea.sflag [#allocation4], %s159
        %s161 = sand.u32 %s93, 1
        %s162 = smul.addr %s161, 2
        %s163 = scalar_lea.vmem [#allocation3], %s162
        %p164 = scmp.lt.s32.totalorder %s17, 3
        %s165 = scalar_select %p164, %s17, 3
        %s166 = smul.addr %s165, 2
        %s167 = smul.addr %s166, 4
        %s168 = scalar_lea.vmem %s0, %s167
        %p170 = scmp.eq.s32.totalorder %s17, 0
        // Predicated region
        $region33: #{spike_driven_transformer_forward.11} parent=31 // pred_check
          %p171 = pneg %p170
        $region34: #{spike_driven_transformer_forward.11} parent=31 // pred_check_branch
          %173 = sbr.rel (%p171) target = $region36
        $region35: #{spike_driven_transformer_forward.11} parent=31 // pred_region
          %174 = vst [vmem:[#allocation2] sm:$0x3] 0.0
        $region36: #{spike_driven_transformer_forward.11} parent=31 // pred_fallthru
          _
        %v175 = vld [vmem:[%s168] sm:$0xf]
        %v176 = vld [vmem:[%s168 + $0x4] sm:$0xf]
        %v177 = vunpack.c.l.bf16 %v175
        %v178 = vunpack.c.l.bf16 %v176
        %v179 = vrot.slane %v177, 4
        %v180 = vadd.f32 %v177, %v179
        %v181 = vrot.slane %v180, 2
        %v182 = vadd.f32 %v180, %v181
        %v183 = vrot.slane %v182, 1
        %v184 = vadd.f32 %v182, %v183
        %v185 = vrot.slane %v178, 4
        %v186 = vadd.f32 %v178, %v185
        %v187 = vrot.slane %v186, 2
        %v188 = vadd.f32 %v186, %v187
        %v189 = vrot.slane %v188, 1
        %v190 = vadd.f32 %v188, %v189
        %v191 = vmul.f32 %v184, 0.125
        %v192 = vmul.f32 %v190, 0.125
        %v193 = vld [vmem:[#allocation2] sm:$0x3]
        %v195 = vrot.slane %v193, 1
        %v198 = vsub.f32 %v191, %v193
        %v199 = vsub.f32 %v192, %v195
        %v200 = vmul.f32 %v198, 0.5
        %v201 = vmul.f32 %v199, 0.5
        %v204 = vrot.slane %v201, 7
        %vm205 = vcmask 1041409
        %v206 = vsel %vm205, %v204, %v200
        %v208 = vadd.f32 %v193, %v206
        %vm209 = vcmp.ge.f32.partialorder %v208, 1.0
        %v210 = vsel %vm209, 1, 0
        %v211 = vcvt.s32.f32 %v210
        %v212 = vsub.f32 1.0, %v211
        %v213 = vmul.f32 %v208, %v212
        %214 = vst [vmem:[#allocation2] sm:$0x3] %v213
        %v215 = vpack.c.bf16 %v211, %v211
        %v216 = vld [vmem:[%s1] sm:$0xf]
        %v217 = vld [vmem:[%s1 + $0x4] sm:$0xf]
        %v218 = vld [vmem:[%s1 + $0x8] sm:$0xf]
        %v219 = vld [vmem:[%s1 + $0xc] sm:$0xf]
        %v220 = vld [vmem:[%s1 + $0x10] sm:$0xf]
        %v221 = vld [vmem:[%s1 + $0x14] sm:$0xf]
        %v222 = vld [vmem:[%s1 + $0x18] sm:$0xf]
        %v223 = vld [vmem:[%s1 + $0x1c] sm:$0xf]
        %v224 = vld [vmem:[%s1 + $0x20] sm:$0xf]
        %v225 = vld [vmem:[%s1 + $0x24] sm:$0xf]
        %v226 = vld [vmem:[%s1 + $0x28] sm:$0xf]
        %v227 = vld [vmem:[%s1 + $0x2c] sm:$0xf]
        %v228 = vld [vmem:[%s1 + $0x30] sm:$0xf]
        %v229 = vld [vmem:[%s1 + $0x34] sm:$0xf]
        %v230 = vld [vmem:[%s1 + $0x38] sm:$0xf]
        %v231 = vld [vmem:[%s1 + $0x3c] sm:$0xf]
        %v232 = vld [vmem:[%s2] sm:$0x1]
        %v234 = vlaneseq
        %v235 = vshrl.u32 %v234, 7
        %v236 = vsub.s32 0, %v235
        %v237 = vrot.slane %v232, %v236
        %v255 = vunpack.c.l.b16 %v216
        %v256 = vunpack.c.l.b16 %v217
        %v257 = vunpack.c.l.b16 %v218
        %v258 = vunpack.c.l.b16 %v219
        %v259 = vunpack.c.l.b16 %v220
        %v260 = vunpack.c.l.b16 %v221
        %v261 = vunpack.c.l.b16 %v222
        %v262 = vunpack.c.l.b16 %v223
        %v263 = vunpack.c.l.b16 %v224
        %v264 = vunpack.c.l.b16 %v225
        %v265 = vunpack.c.l.b16 %v226
        %v266 = vunpack.c.l.b16 %v227
        %v267 = vunpack.c.l.b16 %v228
        %v268 = vunpack.c.l.b16 %v229
        %v269 = vunpack.c.l.b16 %v230
        %v270 = vunpack.c.l.b16 %v231
        %v271 = vpack.c.b16 %v256, %v255
        %v272 = vpack.c.b16 %v258, %v257
        %v273 = vpack.c.b16 %v260, %v259
        %v274 = vpack.c.b16 %v262, %v261
        %v275 = vpack.c.b16 %v264, %v263
        %v276 = vpack.c.b16 %v266, %v265
        %v277 = vpack.c.b16 %v268, %v267
        %v278 = vpack.c.b16 %v270, %v269
        %287 = vmatprep.subr.bf16.mxu0 0
        %288 = vmatpush1.bf16.msra.mxu0 %v271
        %289 = vmatprep.subr.bf16.mxu0 0
        %290 = vmatpush1.bf16.msra.mxu0 %v272
        %291 = vmatprep.subr.bf16.mxu0 0
        %292 = vmatpush1.bf16.msra.mxu0 %v273
        %293 = vmatprep.subr.bf16.mxu0 0
        %294 = vmatpush1.bf16.msra.mxu0 %v274
        %295 = vmatprep.subr.bf16.mxu0 0
        %296 = vmatpush1.bf16.msra.mxu0 %v275
        %297 = vmatprep.subr.bf16.mxu0 0
        %298 = vmatpush1.bf16.msra.mxu0 %v276
        %299 = vmatprep.subr.bf16.mxu0 0
        %300 = vmatpush1.bf16.msra.mxu0 %v277
        %301 = vmatprep.subr.bf16.mxu0 0
        %302 = vmatpush1.bf16.msra.mxu0 %v278
        %303 = vmatprep.subr.bf16.mxu0 0
        %304 = vmatpush1.bf16.msra.mxu0 0
        %305 = vmatprep.subr.bf16.mxu0 0
        %306 = vmatpush1.bf16.msra.mxu0 0
        %307 = vmatprep.subr.bf16.mxu0 0
        %308 = vmatpush1.bf16.msra.mxu0 0
        %309 = vmatprep.subr.bf16.mxu0 0
        %310 = vmatpush1.bf16.msra.mxu0 0
        %311 = vmatprep.subr.bf16.mxu0 0
        %312 = vmatpush1.bf16.msra.mxu0 0
        %313 = vmatprep.subr.bf16.mxu0 0
        %314 = vmatpush1.bf16.msra.mxu0 0
        %315 = vmatprep.subr.bf16.mxu0 0
        %316 = vmatpush1.bf16.msra.mxu0 0
        %317 = vmatprep.subr.bf16.mxu0 0
        %318 = vmatpush1.bf16.msra.mxu0 0
        %319 = vmatprep.mubr.bf16.mxu0 0
        %320 = vmatmul.mubr.bf16.gmra.mrb[0].mxu0 %v215
        %v321 = vpop.f32.mrb[0].mxu0
        %v322 = vadd.f32 %v237, %v321
        %v323 = vpop.f32.mrb[0].mxu0
        %v324 = vpop.f32.mrb[0].mxu0
        %v325 = vpop.f32.mrb[0].mxu0
        %326 = vdwg.mxu0
        %327 = vst [vmem:[%s163] sm:$0x3] %v322
        %s328 = sand.u32 %s93, 1
        %s329 = scalar_lea.sflag [#allocation4], %s328
        %s330 = sand.u32 %s93, 1
        %s331 = smul.addr %s330, 2
        %s332 = scalar_lea.vmem [#allocation3], %s331
        // Predicated region
        $region37: #{spike_driven_transformer_forward.11} parent=31 // pred_check
          %p333 = pneg %p103
        $region38: #{spike_driven_transformer_forward.11} parent=31 // pred_check_branch
          %335 = sbr.rel (%p333) target = $region40
        $region39: #{spike_driven_transformer_forward.11} parent=31 // pred_region
          %s337 = ssub.s32 32, 32
          %338 = vsyncadd %s329, %s337
          %s339 = smul.addr %s17, 32
          %s340 = scalar_lea.hbm %s3, %s339
          %s342 = sshll.u32 %s332, 4
          %s343 = int_to_ptr.vmem [resolvable:$true] %s342
          %345 = dma.vmem_to_hbm [thread:$0]  %s343, 32, %s340, %s329
        $region40: #{spike_driven_transformer_forward.11} parent=31 // pred_fallthru
          _
      $region32: #{spike_driven_transformer_forward.11} parent=5 // pred_fallthru
        _
      %p346 = scmp.le.s32.totalorder 2, %s12
      // Predicated region
      $region41: #{spike_driven_transformer_forward.11} parent=5 // pred_check
        %p347 = pneg %p346
      $region42: #{spike_driven_transformer_forward.11} parent=5 // pred_check_branch
        %349 = sbr.rel (%p347) target = $region44
      $region43: #{spike_driven_transformer_forward.11} parent=5 // pred_region
        %s350 = ssub.s32 %s12, 2
        // Predicated region
        $region45: #{spike_driven_transformer_forward.11} parent=43 // pred_check
          %p351 = pneg %p109
        $region46: #{spike_driven_transformer_forward.11} parent=43 // pred_check_branch
          %353 = sbr.rel (%p351) target = $region48
        $region47: #{spike_driven_transformer_forward.11} parent=43 // pred_region
          %s354 = sand.u32 %s94, 1
          %s355 = scalar_lea.sflag [#allocation4], %s354
          %s356 = sand.u32 %s94, 1
          %s357 = smul.addr %s356, 2
          %s358 = scalar_lea.vmem [#allocation3], %s357
          %359 = dma.done %s355, 32
        $region48: #{spike_driven_transformer_forward.11} parent=43 // pred_fallthru
          _
      $region44: #{spike_driven_transformer_forward.11} parent=5 // pred_fallthru
        _
    $region6: #{spike_driven_transformer_forward.11} parent=1 // loop_footer
      %s16 = sadd.s32 1, %s12
    $region7: #{spike_driven_transformer_forward.11} parent=1 // loop_footer_branch
      %11 = sbr.rel target = $region3
    $region8: #{spike_driven_transformer_forward.11} parent=1 // loop_exit
      _
    %360 = vsyncpa [#allocation4], 1
    %s361 = scalar_lea.sflag [#allocation4], 1
    %362 = vsyncpa %s361, 1

</llo_original>
